<compile_context>
chip_gen: v7x
topology: tpu7x:2x2x1
jax: 0.10.0
libtpu: 0.0.40
codegen_flags: <defaults>
</compile_context>

<pallas_src>
import functools

import jax
import jax.numpy as jnp
from jax import lax
from jax.experimental import pallas as pl
from jax.experimental.pallas import tpu as pltpu


def aligned_kernel(low_ref, high_ref, wlh_ref, wf_ref, out_ref,
                   *, H, W, Hh, Wh, C1, C2):
    """One batch image per grid step.

    low_ref : (1, C1, H*W)     low_feature, spatial flattened (lane dense)
    high_ref: (1, C1*Hh, Wh)   high_feature_origin, rows = (c, hi), lanes = wi
    wlh_ref : (2*C2, C1)       rows [0:C2] = down_h weight, [C2:2C2] = down_l
    wf_ref  : (18, 2*C2)       flow_make weight, rows [2t:2t+2] = tap t = ky*3+kx
    out_ref : (1, C1, H*W)
    """
    f32 = jnp.float32
    HW = H * W

    low = low_ref[0]                          # (C1, HW)
    high_r = high_ref[0]                      # (C1*Hh, Wh)
    w_h = wlh_ref[0:C2, :]                    # (C2, C1)
    w_l = wlh_ref[C2:2 * C2, :]               # (C2, C1)
    wf = wf_ref[...]                          # (18, 2*C2)

    # Output-pixel coordinates, (1, HW), h-major layout.
    h_idx = lax.broadcasted_iota(jnp.int32, (1, H, W), 1).reshape(1, HW)
    w_idx = lax.broadcasted_iota(jnp.int32, (1, H, W), 2).reshape(1, HW)
    h_f = h_idx.astype(f32)
    w_f = w_idx.astype(f32)

    def one_hot_rows(n, i0, i1, w0, w1):
        """(n, HW) operator: row j gets w0 where j==i0 plus w1 where j==i1.

        Out-of-range indices never match the iota -> implicit zero padding."""
        iota = lax.broadcasted_iota(jnp.int32, (n, HW), 0)
        return jnp.where(iota == i0, w0, 0.0) + jnp.where(iota == i1, w1, 0.0)

    def sample(ry, rx):
        """Bilinear sample of high_r with separable per-pixel weights.

        ry: (Hh, HW), rx: (Wh, HW) -> (C1, HW)."""
        b = jnp.dot(high_r, rx, preferred_element_type=f32)   # (C1*Hh, HW)
        b = b.reshape(C1, Hh, HW)
        return jnp.sum(b * ry[None, :, :], axis=1)            # (C1, HW)

    # ---- bilinear upsample of high_feature to (H, W), align_corners=True ----
    # (down_h is 1x1 / bias-free => it commutes exactly with interpolation, so
    #  interpolate the raw C1 feature and apply w_h afterwards.)
    sy = h_f * (float(Hh - 1) / float(max(H - 1, 1)))
    sx = w_f * (float(Wh - 1) / float(max(W - 1, 1)))
    y0f = jnp.floor(sy)
    x0f = jnp.floor(sx)
    y0 = y0f.astype(jnp.int32)
    x0 = x0f.astype(jnp.int32)
    y1 = jnp.minimum(y0 + 1, Hh - 1)
    x1 = jnp.minimum(x0 + 1, Wh - 1)
    fy = sy - y0f
    fx = sx - x0f
    uy = one_hot_rows(Hh, y0, y1, 1.0 - fy, fy)               # (Hh, HW)
    ux = one_hot_rows(Wh, x0, x1, 1.0 - fx, fx)               # (Wh, HW)
    up_c1 = sample(uy, ux)                                    # (C1, HW)

    up = jnp.dot(w_h, up_c1, preferred_element_type=f32)      # (C2, HW)
    low_c2 = jnp.dot(w_l, low, preferred_element_type=f32)    # (C2, HW)

    # ---- 3x3 / pad=1 flow conv: 9 lane rolls + masked accumulated matmuls ----
    flow = jnp.zeros((2, HW), f32)
    for ky in range(3):
        for kx in range(3):
            dy, dx = ky - 1, kx - 1
            off = dy * W + dx
            if off == 0:
                r_up, r_lo = up, low_c2
            else:
                shift = (-off) % HW      # rolled[:, p] = x[:, (p + off) % HW]
                r_up = pltpu.roll(up, shift, axis=1)
                r_lo = pltpu.roll(low_c2, shift, axis=1)
            t = ky * 3 + kx
            w_t = wf[2 * t:2 * t + 2, :]                       # (2, 2*C2)
            contrib = (jnp.dot(w_t[:, 0:C2], r_up, preferred_element_type=f32)
                       + jnp.dot(w_t[:, C2:2 * C2], r_lo,
                                 preferred_element_type=f32))  # (2, HW)
            valid = None
            if dy == -1:
                valid = h_idx >= 1
            elif dy == 1:
                valid = h_idx <= H - 2
            if dx == -1:
                vw = w_idx >= 1
                valid = vw if valid is None else (valid & vw)
            elif dx == 1:
                vw = w_idx <= W - 2
                valid = vw if valid is None else (valid & vw)
            if valid is not None:
                contrib = jnp.where(valid, contrib, 0.0)
            flow = flow + contrib

    flow_x = flow[0:1, :]
    flow_y = flow[1:2, :]

    # ---- flow_warp: grid_sample(high_feature_origin, grid + flow / [H, W]),
    #      bilinear, align_corners=False, padding_mode='zeros' ----
    base_x = 2.0 * w_f * (1.0 / float(max(W - 1, 1))) - 1.0
    base_y = 2.0 * h_f * (1.0 / float(max(H - 1, 1))) - 1.0
    # Faithful to the module: x-flow normalized by size[0]=H, y-flow by size[1]=W.
    gx = base_x + flow_x * (1.0 / H)
    gy = base_y + flow_y * (1.0 / W)

    ix = ((gx + 1.0) * Wh - 1.0) * 0.5
    iy = ((gy + 1.0) * Hh - 1.0) * 0.5
    ix0f = jnp.floor(ix)
    iy0f = jnp.floor(iy)
    ix0 = ix0f.astype(jnp.int32)
    iy0 = iy0f.astype(jnp.int32)
    wx1 = ix - ix0f
    wy1 = iy - iy0f
    # No clipping: out-of-range corners contribute 0 (zero padding semantics).
    rx = one_hot_rows(Wh, ix0, ix0 + 1, 1.0 - wx1, wx1)        # (Wh, HW)
    ry = one_hot_rows(Hh, iy0, iy0 + 1, 1.0 - wy1, wy1)        # (Hh, HW)

    out_ref[0] = sample(ry, rx).astype(out_ref.dtype)          # (C1, HW)


@jax.jit
def aligned_module(low_feature, high_feature, w_down_h, w_down_l, w_flow):
    """Pallas TPU AlignedModule.forward. NCHW in / NCHW out, float32."""
    N, C1, H, W = low_feature.shape
    _, _, Hh, Wh = high_feature.shape
    C2 = w_down_h.shape[0]
    HW = H * W

    # Free layout plumbing in the wrapper (no data-dependent work here).
    low_flat = low_feature.reshape(N, C1, HW).astype(jnp.float32)
    high_r = high_feature.reshape(N, C1 * Hh, Wh).astype(jnp.float32)

    # Pack both 1x1-conv weights: rows [0:C2] = down_h, rows [C2:2C2] = down_l.
    wlh = jnp.concatenate(
        [w_down_h[:, :, 0, 0], w_down_l[:, :, 0, 0]], axis=0).astype(jnp.float32)

    # flow_make weight (2, 2*C2, 3, 3) -> (18, 2*C2), tap-major (ky, kx).
    wf = jnp.transpose(w_flow, (2, 3, 0, 1)).reshape(9 * 2, 2 * C2)
    wf = wf.astype(jnp.float32)

    kernel = functools.partial(aligned_kernel, H=H, W=W, Hh=Hh, Wh=Wh,
                               C1=C1, C2=C2)

    flops = 2 * N * (C1 * Hh * Wh * HW       # upsample gather matmul
                     + C1 * Hh * HW          # upsample gather reduce
                     + 2 * C2 * C1 * HW      # two 1x1 convs
                     + 9 * 2 * 2 * C2 * HW   # 3x3 flow conv
                     + C1 * Hh * Wh * HW     # warp gather matmul
                     + C1 * Hh * HW)         # warp gather reduce
    bytes_accessed = (4 * N * (2 * C1 * HW + C1 * Hh * Wh)
                      + 4 * (2 * C2 * C1 + 18 * 2 * C2))

    # Working-set estimate -> explicit VMEM budget (capped for v7x's 64 MiB).
    vmem_est = 4 * (2 * (C1 * HW + C1 * Hh * Wh)     # double-buffered inputs
                    + 2 * C1 * HW                    # double-buffered output
                    + C1 * Hh * HW                   # gather intermediate
                    + 2 * (Hh + Wh) * HW             # row/col operators
                    + 3 * (2 * C2 + C1 + 4) * HW)    # up / low_c2 / rolls / flow
    vmem_limit = int(min(64 * 1024 * 1024, max(32 * 1024 * 1024, 2 * vmem_est)))

    out_flat = pl.pallas_call(
        kernel,
        out_shape=jax.ShapeDtypeStruct((N, C1, HW), jnp.float32),
        grid_spec=pltpu.PrefetchScalarGridSpec(
            num_scalar_prefetch=0,
            grid=(N,),
            in_specs=[
                pl.BlockSpec((1, C1, HW), lambda n: (n, 0, 0)),
                pl.BlockSpec((1, C1 * Hh, Wh), lambda n: (n, 0, 0)),
                pl.BlockSpec((2 * C2, C1), lambda n: (0, 0)),
                pl.BlockSpec((18, 2 * C2), lambda n: (0, 0)),
            ],
            out_specs=pl.BlockSpec((1, C1, HW), lambda n: (n, 0, 0)),
        ),
        compiler_params=pltpu.CompilerParams(
            dimension_semantics=("parallel",),
            vmem_limit_bytes=vmem_limit),
        cost_estimate=pl.CostEstimate(
            flops=flops, transcendentals=0, bytes_accessed=bytes_accessed),
    )(low_flat, high_r, wlh, wf)

    return out_flat.reshape(N, C1, H, W)


# ----------------------------- pure-JAX reference -----------------------------

def _upsample_bilinear_align_corners(x, H, W):
    n, c, h, w = x.shape
    ys = jnp.arange(H, dtype=jnp.float32) * ((h - 1) / max(H - 1, 1))
    xs = jnp.arange(W, dtype=jnp.float32) * ((w - 1) / max(W - 1, 1))
    y0 = jnp.floor(ys).astype(jnp.int32)
    y1 = jnp.minimum(y0 + 1, h - 1)
    x0 = jnp.floor(xs).astype(jnp.int32)
    x1 = jnp.minimum(x0 + 1, w - 1)
    wy = (ys - y0)[None, None, :, None]
    wx = (xs - x0)[None, None, None, :]
    rows = x[:, :, y0, :] * (1.0 - wy) + x[:, :, y1, :] * wy
    return rows[:, :, :, x0] * (1.0 - wx) + rows[:, :, :, x1] * wx


def reference(low_feature, high_feature, w_down_h, w_down_l, w_flow):
    _, _, H, W = low_feature.shape
    _, _, Hh, Wh = high_feature.shape
    dn = ("NCHW", "OIHW", "NCHW")
    hp = lax.Precision.HIGHEST

    low_c2 = lax.conv_general_dilated(low_feature, w_down_l, (1, 1), "VALID",
                                      dimension_numbers=dn, precision=hp)
    high_c2 = lax.conv_general_dilated(high_feature, w_down_h, (1, 1), "VALID",
                                       dimension_numbers=dn, precision=hp)
    high_up = _upsample_bilinear_align_corners(high_c2, H, W)
    feat = jnp.concatenate([high_up, low_c2], axis=1)
    flow = lax.conv_general_dilated(feat, w_flow, (1, 1), ((1, 1), (1, 1)),
                                    dimension_numbers=dn, precision=hp)

    base_y = jnp.broadcast_to(jnp.linspace(-1.0, 1.0, H)[:, None], (H, W))
    base_x = jnp.broadcast_to(jnp.linspace(-1.0, 1.0, W)[None, :], (H, W))
    gx = base_x[None] + flow[:, 0] / H       # same quirky norm order as torch code
    gy = base_y[None] + flow[:, 1] / W

    def sample_one(xn, gyn, gxn):
        ix = ((gxn + 1.0) * Wh - 1.0) / 2.0
        iy = ((gyn + 1.0) * Hh - 1.0) / 2.0
        x0 = jnp.floor(ix).astype(jnp.int32)
        y0 = jnp.floor(iy).astype(jnp.int32)
        x1 = x0 + 1
        y1 = y0 + 1
        wx1 = ix - x0
        wx0 = 1.0 - wx1
        wy1 = iy - y0
        wy0 = 1.0 - wy1

        def corner(yc, xc, wgt):
            valid = (xc >= 0) & (xc < Wh) & (yc >= 0) & (yc < Hh)
            v = xn[:, jnp.clip(yc, 0, Hh - 1), jnp.clip(xc, 0, Wh - 1)]
            return v * jnp.where(valid, wgt, 0.0)[None]

        return (corner(y0, x0, wy0 * wx0) + corner(y0, x1, wy0 * wx1) +
                corner(y1, x0, wy1 * wx0) + corner(y1, x1, wy1 * wx1))

    return jax.vmap(sample_one)(high_feature, gy, gx)


if __name__ == "__main__":
    N, C1, C2 = 2, 4, 8
    H = W = 16          # low_feature spatial size (output size)
    Hh = Wh = 8         # high_feature spatial size (coarser level)

    key = jax.random.PRNGKey(0)
    k1, k2, k3, k4, k5 = jax.random.split(key, 5)

    # PyTorch-convention inputs / weights (NCHW, OIHW, bias=False everywhere).
    low = jax.random.normal(k1, (N, C1, H, W), jnp.float32)
    high = jax.random.normal(k2, (N, C1, Hh, Wh), jnp.float32)
    w_down_h = 0.3 * jax.random.normal(k3, (C2, C1, 1, 1), jnp.float32)
    w_down_l = 0.3 * jax.random.normal(k4, (C2, C1, 1, 1), jnp.float32)
    w_flow = 0.1 * jax.random.normal(k5, (2, 2 * C2, 3, 3), jnp.float32)

    out = aligned_module(low, high, w_down_h, w_down_l, w_flow)
    out = jax.block_until_ready(out)

    ref = reference(low, high, w_down_h, w_down_l, w_flow)
    assert out.shape == (N, C1, H, W)
    max_err = float(jnp.max(jnp.abs(out - ref)))
    assert jnp.allclose(out, ref, atol=2e-3, rtol=2e-3), f"max abs err {max_err}"

    print("KERNEL_OK")
</pallas_src>

<mosaic_0001>
module attributes {stable_mosaic.version = 11 : i64} {
  func.func @aligned_kernel(%arg0: i32, %arg1: memref<1x4x256xf32, #tpu.memory_space<vmem>>, %arg2: memref<1x32x8xf32, #tpu.memory_space<vmem>>, %arg3: memref<16x4xf32, #tpu.memory_space<vmem>>, %arg4: memref<18x16xf32, #tpu.memory_space<vmem>>, %arg5: memref<1x4x256xf32, #tpu.memory_space<vmem>>) attributes {dimension_semantics = [#tpu.dimension_semantics<parallel>], iteration_bounds = array<i64: 2>, scalar_prefetch = 0 : i64, scratch_operands = 0 : i64, tpu.core_type = #tpu.core_type<tc>, window_params = [{transform_indices = @transform_0, window_bounds = array<i64: 1, 4, 256>}, {transform_indices = @transform_1, window_bounds = array<i64: 1, 32, 8>}, {pipeline_mode = #tpu.pipeline_mode<synchronous>, transform_indices = @transform_2, window_bounds = array<i64: 16, 4>}, {pipeline_mode = #tpu.pipeline_mode<synchronous>, transform_indices = @transform_3, window_bounds = array<i64: 18, 16>}, {transform_indices = @transform_4, window_bounds = array<i64: 1, 4, 256>}]} {
    %c0 = arith.constant 0 : index
    %c0_0 = arith.constant 0 : index
    %c0_1 = arith.constant 0 : index
    %0 = vector.load %arg1[%c0, %c0_0, %c0_1] : memref<1x4x256xf32, #tpu.memory_space<vmem>>, vector<1x4x256xf32>
    %1 = vector.shape_cast %0 : vector<1x4x256xf32> to vector<4x256xf32>
    %c0_2 = arith.constant 0 : index
    %c0_3 = arith.constant 0 : index
    %c0_4 = arith.constant 0 : index
    %2 = vector.load %arg2[%c0_2, %c0_3, %c0_4] : memref<1x32x8xf32, #tpu.memory_space<vmem>>, vector<1x32x8xf32>
    %3 = vector.shape_cast %2 : vector<1x32x8xf32> to vector<32x8xf32>
    %c0_5 = arith.constant 0 : index
    %c0_6 = arith.constant 0 : index
    %4 = vector.load %arg3[%c0_5, %c0_6] : memref<16x4xf32, #tpu.memory_space<vmem>>, vector<8x4xf32>
    %c8 = arith.constant 8 : index
    %c0_7 = arith.constant 0 : index
    %5 = vector.load %arg3[%c8, %c0_7] : memref<16x4xf32, #tpu.memory_space<vmem>>, vector<8x4xf32>
    %c0_8 = arith.constant 0 : index
    %c0_9 = arith.constant 0 : index
    %6 = vector.load %arg4[%c0_8, %c0_9] : memref<18x16xf32, #tpu.memory_space<vmem>>, vector<18x16xf32>
    %7 = tpu.iota {dimensions = array<i32: 1>} : vector<1x16x16xi32>
    %8 = vector.shape_cast %7 : vector<1x16x16xi32> to vector<1x256xi32>
    %9 = tpu.iota {dimensions = array<i32: 2>} : vector<1x16x16xi32>
    %10 = vector.shape_cast %9 : vector<1x16x16xi32> to vector<1x256xi32>
    %11 = arith.sitofp %8 : vector<1x256xi32> to vector<1x256xf32>
    %12 = arith.sitofp %10 : vector<1x256xi32> to vector<1x256xf32>
    %cst = arith.constant 0.466666669 : f32
    %13 = vector.broadcast %cst : f32 to vector<1x256xf32>
    %14 = arith.mulf %11, %13 : vector<1x256xf32>
    %cst_10 = arith.constant 0.466666669 : f32
    %15 = vector.broadcast %cst_10 : f32 to vector<1x256xf32>
    %16 = arith.mulf %12, %15 : vector<1x256xf32>
    %17 = math.floor %14 : vector<1x256xf32>
    %18 = math.floor %16 : vector<1x256xf32>
    %19 = arith.fptosi %17 : vector<1x256xf32> to vector<1x256xi32>
    %20 = arith.fptosi %18 : vector<1x256xf32> to vector<1x256xi32>
    %c1_i32 = arith.constant 1 : i32
    %21 = vector.broadcast %c1_i32 : i32 to vector<1x256xi32>
    %22 = arith.addi %19, %21 : vector<1x256xi32>
    %c7_i32 = arith.constant 7 : i32
    %23 = vector.broadcast %c7_i32 : i32 to vector<1x256xi32>
    %24 = arith.minsi %22, %23 : vector<1x256xi32>
    %c1_i32_11 = arith.constant 1 : i32
    %25 = vector.broadcast %c1_i32_11 : i32 to vector<1x256xi32>
    %26 = arith.addi %20, %25 : vector<1x256xi32>
    %c7_i32_12 = arith.constant 7 : i32
    %27 = vector.broadcast %c7_i32_12 : i32 to vector<1x256xi32>
    %28 = arith.minsi %26, %27 : vector<1x256xi32>
    %29 = arith.subf %14, %17 : vector<1x256xf32>
    %30 = arith.subf %16, %18 : vector<1x256xf32>
    %cst_13 = arith.constant 1.000000e+00 : f32
    %31 = vector.broadcast %cst_13 : f32 to vector<1x256xf32>
    %32 = arith.subf %31, %29 : vector<1x256xf32>
    %33 = tpu.iota {dimensions = array<i32: 0>} : vector<8x256xi32>
    %34 = vector.broadcast %19 : vector<1x256xi32> to vector<8x256xi32>
    %35 = arith.cmpi eq, %33, %34 : vector<8x256xi32>
    %cst_14 = arith.constant 0.000000e+00 : f32
    %36 = vector.shape_cast %32 : vector<1x256xf32> to vector<1x256xf32>
    %37 = vector.broadcast %36 : vector<1x256xf32> to vector<8x256xf32>
    %38 = vector.broadcast %cst_14 : f32 to vector<8x256xf32>
    %39 = arith.select %35, %37, %38 : vector<8x256xi1>, vector<8x256xf32>
    %40 = vector.broadcast %24 : vector<1x256xi32> to vector<8x256xi32>
    %41 = arith.cmpi eq, %33, %40 : vector<8x256xi32>
    %cst_15 = arith.constant 0.000000e+00 : f32
    %42 = vector.shape_cast %29 : vector<1x256xf32> to vector<1x256xf32>
    %43 = vector.broadcast %42 : vector<1x256xf32> to vector<8x256xf32>
    %44 = vector.broadcast %cst_15 : f32 to vector<8x256xf32>
    %45 = arith.select %41, %43, %44 : vector<8x256xi1>, vector<8x256xf32>
    %46 = arith.addf %39, %45 : vector<8x256xf32>
    %cst_16 = arith.constant 1.000000e+00 : f32
    %47 = vector.broadcast %cst_16 : f32 to vector<1x256xf32>
    %48 = arith.subf %47, %30 : vector<1x256xf32>
    %49 = tpu.iota {dimensions = array<i32: 0>} : vector<8x256xi32>
    %50 = vector.broadcast %20 : vector<1x256xi32> to vector<8x256xi32>
    %51 = arith.cmpi eq, %49, %50 : vector<8x256xi32>
    %cst_17 = arith.constant 0.000000e+00 : f32
    %52 = vector.shape_cast %48 : vector<1x256xf32> to vector<1x256xf32>
    %53 = vector.broadcast %52 : vector<1x256xf32> to vector<8x256xf32>
    %54 = vector.broadcast %cst_17 : f32 to vector<8x256xf32>
    %55 = arith.select %51, %53, %54 : vector<8x256xi1>, vector<8x256xf32>
    %56 = vector.broadcast %28 : vector<1x256xi32> to vector<8x256xi32>
    %57 = arith.cmpi eq, %49, %56 : vector<8x256xi32>
    %cst_18 = arith.constant 0.000000e+00 : f32
    %58 = vector.shape_cast %30 : vector<1x256xf32> to vector<1x256xf32>
    %59 = vector.broadcast %58 : vector<1x256xf32> to vector<8x256xf32>
    %60 = vector.broadcast %cst_18 : f32 to vector<8x256xf32>
    %61 = arith.select %57, %59, %60 : vector<8x256xi1>, vector<8x256xf32>
    %62 = arith.addf %55, %61 : vector<8x256xf32>
    %cst_19 = arith.constant dense<0.000000e+00> : vector<32x256xf32>
    %63 = tpu.matmul %3, %62, %cst_19 {dimension_numbers = #tpu.dot_dimension_numbers<[1], [0], [0], [1], [0, 0, 1, 1], [], []>} : vector<32x8xf32>, vector<8x256xf32>, vector<32x256xf32> -> vector<32x256xf32>
    %64 = vector.shape_cast %63 : vector<32x256xf32> to vector<4x8x256xf32>
    %65 = vector.shape_cast %46 : vector<8x256xf32> to vector<1x8x256xf32>
    %66 = vector.broadcast %65 : vector<1x8x256xf32> to vector<4x8x256xf32>
    %67 = arith.mulf %64, %66 : vector<4x8x256xf32>
    %cst_20 = arith.constant dense<0.000000e+00> : vector<4x256xf32>
    %68 = vector.multi_reduction <add>, %67, %cst_20 [1] : vector<4x8x256xf32> to vector<4x256xf32>
    %cst_21 = arith.constant dense<0.000000e+00> : vector<8x256xf32>
    %69 = tpu.matmul %4, %68, %cst_21 {dimension_numbers = #tpu.dot_dimension_numbers<[1], [0], [0], [1], [0, 0, 1, 1], [], []>} : vector<8x4xf32>, vector<4x256xf32>, vector<8x256xf32> -> vector<8x256xf32>
    %cst_22 = arith.constant dense<0.000000e+00> : vector<8x256xf32>
    %70 = tpu.matmul %5, %1, %cst_22 {dimension_numbers = #tpu.dot_dimension_numbers<[1], [0], [0], [1], [0, 0, 1, 1], [], []>} : vector<8x4xf32>, vector<4x256xf32>, vector<8x256xf32> -> vector<8x256xf32>
    %cst_23 = arith.constant 0.000000e+00 : f32
    %71 = vector.broadcast %cst_23 : f32 to vector<2x256xf32>
    %c17_i32 = arith.constant 17 : i32
    %72 = tpu.dynamic_rotate %69 by %c17_i32 dim 1 : vector<8x256xf32>, i32 -> vector<8x256xf32>
    %c17_i32_24 = arith.constant 17 : i32
    %73 = tpu.dynamic_rotate %70 by %c17_i32_24 dim 1 : vector<8x256xf32>, i32 -> vector<8x256xf32>
    %74 = vector.extract_strided_slice %6 {offsets = [0, 0], sizes = [2, 16], strides = [1, 1]} : vector<18x16xf32> to vector<2x16xf32>
    %75 = vector.extract_strided_slice %74 {offsets = [0, 0], sizes = [2, 8], strides = [1, 1]} : vector<2x16xf32> to vector<2x8xf32>
    %cst_25 = arith.constant dense<0.000000e+00> : vector<2x256xf32>
    %76 = tpu.matmul %75, %72, %cst_25 {dimension_numbers = #tpu.dot_dimension_numbers<[1], [0], [0], [1], [0, 0, 1, 1], [], []>} : vector<2x8xf32>, vector<8x256xf32>, vector<2x256xf32> -> vector<2x256xf32>
    %77 = vector.extract_strided_slice %74 {offsets = [0, 8], sizes = [2, 8], strides = [1, 1]} : vector<2x16xf32> to vector<2x8xf32>
    %cst_26 = arith.constant dense<0.000000e+00> : vector<2x256xf32>
    %78 = tpu.matmul %77, %73, %cst_26 {dimension_numbers = #tpu.dot_dimension_numbers<[1], [0], [0], [1], [0, 0, 1, 1], [], []>} : vector<2x8xf32>, vector<8x256xf32>, vector<2x256xf32> -> vector<2x256xf32>
    %79 = arith.addf %76, %78 : vector<2x256xf32>
    %c1_i32_27 = arith.constant 1 : i32
    %80 = vector.broadcast %c1_i32_27 : i32 to vector<1x256xi32>
    %81 = arith.cmpi sge, %8, %80 : vector<1x256xi32>
    %c1_i32_28 = arith.constant 1 : i32
    %82 = vector.broadcast %c1_i32_28 : i32 to vector<1x256xi32>
    %83 = arith.cmpi sge, %10, %82 : vector<1x256xi32>
    %84 = arith.andi %81, %83 : vector<1x256xi1>
    %cst_29 = arith.constant 0.000000e+00 : f32
    %85 = vector.shape_cast %84 : vector<1x256xi1> to vector<1x256xi1>
    %86 = vector.broadcast %85 : vector<1x256xi1> to vector<2x256xi1>
    %87 = vector.broadcast %cst_29 : f32 to vector<2x256xf32>
    %88 = arith.select %86, %79, %87 : vector<2x256xi1>, vector<2x256xf32>
    %89 = arith.addf %71, %88 : vector<2x256xf32>
    %c16_i32 = arith.constant 16 : i32
    %90 = tpu.dynamic_rotate %69 by %c16_i32 dim 1 : vector<8x256xf32>, i32 -> vector<8x256xf32>
    %c16_i32_30 = arith.constant 16 : i32
    %91 = tpu.dynamic_rotate %70 by %c16_i32_30 dim 1 : vector<8x256xf32>, i32 -> vector<8x256xf32>
    %92 = vector.extract_strided_slice %6 {offsets = [2, 0], sizes = [2, 16], strides = [1, 1]} : vector<18x16xf32> to vector<2x16xf32>
    %93 = vector.extract_strided_slice %92 {offsets = [0, 0], sizes = [2, 8], strides = [1, 1]} : vector<2x16xf32> to vector<2x8xf32>
    %cst_31 = arith.constant dense<0.000000e+00> : vector<2x256xf32>
    %94 = tpu.matmul %93, %90, %cst_31 {dimension_numbers = #tpu.dot_dimension_numbers<[1], [0], [0], [1], [0, 0, 1, 1], [], []>} : vector<2x8xf32>, vector<8x256xf32>, vector<2x256xf32> -> vector<2x256xf32>
    %95 = vector.extract_strided_slice %92 {offsets = [0, 8], sizes = [2, 8], strides = [1, 1]} : vector<2x16xf32> to vector<2x8xf32>
    %cst_32 = arith.constant dense<0.000000e+00> : vector<2x256xf32>
    %96 = tpu.matmul %95, %91, %cst_32 {dimension_numbers = #tpu.dot_dimension_numbers<[1], [0], [0], [1], [0, 0, 1, 1], [], []>} : vector<2x8xf32>, vector<8x256xf32>, vector<2x256xf32> -> vector<2x256xf32>
    %97 = arith.addf %94, %96 : vector<2x256xf32>
    %c1_i32_33 = arith.constant 1 : i32
    %98 = vector.broadcast %c1_i32_33 : i32 to vector<1x256xi32>
    %99 = arith.cmpi sge, %8, %98 : vector<1x256xi32>
    %cst_34 = arith.constant 0.000000e+00 : f32
    %100 = vector.shape_cast %99 : vector<1x256xi1> to vector<1x256xi1>
    %101 = vector.broadcast %100 : vector<1x256xi1> to vector<2x256xi1>
    %102 = vector.broadcast %cst_34 : f32 to vector<2x256xf32>
    %103 = arith.select %101, %97, %102 : vector<2x256xi1>, vector<2x256xf32>
    %104 = arith.addf %89, %103 : vector<2x256xf32>
    %c15_i32 = arith.constant 15 : i32
    %105 = tpu.dynamic_rotate %69 by %c15_i32 dim 1 : vector<8x256xf32>, i32 -> vector<8x256xf32>
    %c15_i32_35 = arith.constant 15 : i32
    %106 = tpu.dynamic_rotate %70 by %c15_i32_35 dim 1 : vector<8x256xf32>, i32 -> vector<8x256xf32>
    %107 = vector.extract_strided_slice %6 {offsets = [4, 0], sizes = [2, 16], strides = [1, 1]} : vector<18x16xf32> to vector<2x16xf32>
    %108 = vector.extract_strided_slice %107 {offsets = [0, 0], sizes = [2, 8], strides = [1, 1]} : vector<2x16xf32> to vector<2x8xf32>
    %cst_36 = arith.constant dense<0.000000e+00> : vector<2x256xf32>
    %109 = tpu.matmul %108, %105, %cst_36 {dimension_numbers = #tpu.dot_dimension_numbers<[1], [0], [0], [1], [0, 0, 1, 1], [], []>} : vector<2x8xf32>, vector<8x256xf32>, vector<2x256xf32> -> vector<2x256xf32>
    %110 = vector.extract_strided_slice %107 {offsets = [0, 8], sizes = [2, 8], strides = [1, 1]} : vector<2x16xf32> to vector<2x8xf32>
    %cst_37 = arith.constant dense<0.000000e+00> : vector<2x256xf32>
    %111 = tpu.matmul %110, %106, %cst_37 {dimension_numbers = #tpu.dot_dimension_numbers<[1], [0], [0], [1], [0, 0, 1, 1], [], []>} : vector<2x8xf32>, vector<8x256xf32>, vector<2x256xf32> -> vector<2x256xf32>
    %112 = arith.addf %109, %111 : vector<2x256xf32>
    %c1_i32_38 = arith.constant 1 : i32
    %113 = vector.broadcast %c1_i32_38 : i32 to vector<1x256xi32>
    %114 = arith.cmpi sge, %8, %113 : vector<1x256xi32>
    %c14_i32 = arith.constant 14 : i32
    %115 = vector.broadcast %c14_i32 : i32 to vector<1x256xi32>
    %116 = arith.cmpi sle, %10, %115 : vector<1x256xi32>
    %117 = arith.andi %114, %116 : vector<1x256xi1>
    %cst_39 = arith.constant 0.000000e+00 : f32
    %118 = vector.shape_cast %117 : vector<1x256xi1> to vector<1x256xi1>
    %119 = vector.broadcast %118 : vector<1x256xi1> to vector<2x256xi1>
    %120 = vector.broadcast %cst_39 : f32 to vector<2x256xf32>
    %121 = arith.select %119, %112, %120 : vector<2x256xi1>, vector<2x256xf32>
    %122 = arith.addf %104, %121 : vector<2x256xf32>
    %c1_i32_40 = arith.constant 1 : i32
    %123 = tpu.dynamic_rotate %69 by %c1_i32_40 dim 1 : vector<8x256xf32>, i32 -> vector<8x256xf32>
    %c1_i32_41 = arith.constant 1 : i32
    %124 = tpu.dynamic_rotate %70 by %c1_i32_41 dim 1 : vector<8x256xf32>, i32 -> vector<8x256xf32>
    %125 = vector.extract_strided_slice %6 {offsets = [6, 0], sizes = [2, 16], strides = [1, 1]} : vector<18x16xf32> to vector<2x16xf32>
    %126 = vector.extract_strided_slice %125 {offsets = [0, 0], sizes = [2, 8], strides = [1, 1]} : vector<2x16xf32> to vector<2x8xf32>
    %cst_42 = arith.constant dense<0.000000e+00> : vector<2x256xf32>
    %127 = tpu.matmul %126, %123, %cst_42 {dimension_numbers = #tpu.dot_dimension_numbers<[1], [0], [0], [1], [0, 0, 1, 1], [], []>} : vector<2x8xf32>, vector<8x256xf32>, vector<2x256xf32> -> vector<2x256xf32>
    %128 = vector.extract_strided_slice %125 {offsets = [0, 8], sizes = [2, 8], strides = [1, 1]} : vector<2x16xf32> to vector<2x8xf32>
    %cst_43 = arith.constant dense<0.000000e+00> : vector<2x256xf32>
    %129 = tpu.matmul %128, %124, %cst_43 {dimension_numbers = #tpu.dot_dimension_numbers<[1], [0], [0], [1], [0, 0, 1, 1], [], []>} : vector<2x8xf32>, vector<8x256xf32>, vector<2x256xf32> -> vector<2x256xf32>
    %130 = arith.addf %127, %129 : vector<2x256xf32>
    %c1_i32_44 = arith.constant 1 : i32
    %131 = vector.broadcast %c1_i32_44 : i32 to vector<1x256xi32>
    %132 = arith.cmpi sge, %10, %131 : vector<1x256xi32>
    %cst_45 = arith.constant 0.000000e+00 : f32
    %133 = vector.shape_cast %132 : vector<1x256xi1> to vector<1x256xi1>
    %134 = vector.broadcast %133 : vector<1x256xi1> to vector<2x256xi1>
    %135 = vector.broadcast %cst_45 : f32 to vector<2x256xf32>
    %136 = arith.select %134, %130, %135 : vector<2x256xi1>, vector<2x256xf32>
    %137 = arith.addf %122, %136 : vector<2x256xf32>
    %138 = vector.extract_strided_slice %6 {offsets = [8, 0], sizes = [2, 16], strides = [1, 1]} : vector<18x16xf32> to vector<2x16xf32>
    %139 = vector.extract_strided_slice %138 {offsets = [0, 0], sizes = [2, 8], strides = [1, 1]} : vector<2x16xf32> to vector<2x8xf32>
    %cst_46 = arith.constant dense<0.000000e+00> : vector<2x256xf32>
    %140 = tpu.matmul %139, %69, %cst_46 {dimension_numbers = #tpu.dot_dimension_numbers<[1], [0], [0], [1], [0, 0, 1, 1], [], []>} : vector<2x8xf32>, vector<8x256xf32>, vector<2x256xf32> -> vector<2x256xf32>
    %141 = vector.extract_strided_slice %138 {offsets = [0, 8], sizes = [2, 8], strides = [1, 1]} : vector<2x16xf32> to vector<2x8xf32>
    %cst_47 = arith.constant dense<0.000000e+00> : vector<2x256xf32>
    %142 = tpu.matmul %141, %70, %cst_47 {dimension_numbers = #tpu.dot_dimension_numbers<[1], [0], [0], [1], [0, 0, 1, 1], [], []>} : vector<2x8xf32>, vector<8x256xf32>, vector<2x256xf32> -> vector<2x256xf32>
    %143 = arith.addf %140, %142 : vector<2x256xf32>
    %144 = arith.addf %137, %143 : vector<2x256xf32>
    %c255_i32 = arith.constant 255 : i32
    %145 = tpu.dynamic_rotate %69 by %c255_i32 dim 1 : vector<8x256xf32>, i32 -> vector<8x256xf32>
    %c255_i32_48 = arith.constant 255 : i32
    %146 = tpu.dynamic_rotate %70 by %c255_i32_48 dim 1 : vector<8x256xf32>, i32 -> vector<8x256xf32>
    %147 = vector.extract_strided_slice %6 {offsets = [10, 0], sizes = [2, 16], strides = [1, 1]} : vector<18x16xf32> to vector<2x16xf32>
    %148 = vector.extract_strided_slice %147 {offsets = [0, 0], sizes = [2, 8], strides = [1, 1]} : vector<2x16xf32> to vector<2x8xf32>
    %cst_49 = arith.constant dense<0.000000e+00> : vector<2x256xf32>
    %149 = tpu.matmul %148, %145, %cst_49 {dimension_numbers = #tpu.dot_dimension_numbers<[1], [0], [0], [1], [0, 0, 1, 1], [], []>} : vector<2x8xf32>, vector<8x256xf32>, vector<2x256xf32> -> vector<2x256xf32>
    %150 = vector.extract_strided_slice %147 {offsets = [0, 8], sizes = [2, 8], strides = [1, 1]} : vector<2x16xf32> to vector<2x8xf32>
    %cst_50 = arith.constant dense<0.000000e+00> : vector<2x256xf32>
    %151 = tpu.matmul %150, %146, %cst_50 {dimension_numbers = #tpu.dot_dimension_numbers<[1], [0], [0], [1], [0, 0, 1, 1], [], []>} : vector<2x8xf32>, vector<8x256xf32>, vector<2x256xf32> -> vector<2x256xf32>
    %152 = arith.addf %149, %151 : vector<2x256xf32>
    %c14_i32_51 = arith.constant 14 : i32
    %153 = vector.broadcast %c14_i32_51 : i32 to vector<1x256xi32>
    %154 = arith.cmpi sle, %10, %153 : vector<1x256xi32>
    %cst_52 = arith.constant 0.000000e+00 : f32
    %155 = vector.shape_cast %154 : vector<1x256xi1> to vector<1x256xi1>
    %156 = vector.broadcast %155 : vector<1x256xi1> to vector<2x256xi1>
    %157 = vector.broadcast %cst_52 : f32 to vector<2x256xf32>
    %158 = arith.select %156, %152, %157 : vector<2x256xi1>, vector<2x256xf32>
    %159 = arith.addf %144, %158 : vector<2x256xf32>
    %c241_i32 = arith.constant 241 : i32
    %160 = tpu.dynamic_rotate %69 by %c241_i32 dim 1 : vector<8x256xf32>, i32 -> vector<8x256xf32>
    %c241_i32_53 = arith.constant 241 : i32
    %161 = tpu.dynamic_rotate %70 by %c241_i32_53 dim 1 : vector<8x256xf32>, i32 -> vector<8x256xf32>
    %162 = vector.extract_strided_slice %6 {offsets = [12, 0], sizes = [2, 16], strides = [1, 1]} : vector<18x16xf32> to vector<2x16xf32>
    %163 = vector.extract_strided_slice %162 {offsets = [0, 0], sizes = [2, 8], strides = [1, 1]} : vector<2x16xf32> to vector<2x8xf32>
    %cst_54 = arith.constant dense<0.000000e+00> : vector<2x256xf32>
    %164 = tpu.matmul %163, %160, %cst_54 {dimension_numbers = #tpu.dot_dimension_numbers<[1], [0], [0], [1], [0, 0, 1, 1], [], []>} : vector<2x8xf32>, vector<8x256xf32>, vector<2x256xf32> -> vector<2x256xf32>
    %165 = vector.extract_strided_slice %162 {offsets = [0, 8], sizes = [2, 8], strides = [1, 1]} : vector<2x16xf32> to vector<2x8xf32>
    %cst_55 = arith.constant dense<0.000000e+00> : vector<2x256xf32>
    %166 = tpu.matmul %165, %161, %cst_55 {dimension_numbers = #tpu.dot_dimension_numbers<[1], [0], [0], [1], [0, 0, 1, 1], [], []>} : vector<2x8xf32>, vector<8x256xf32>, vector<2x256xf32> -> vector<2x256xf32>
    %167 = arith.addf %164, %166 : vector<2x256xf32>
    %c14_i32_56 = arith.constant 14 : i32
    %168 = vector.broadcast %c14_i32_56 : i32 to vector<1x256xi32>
    %169 = arith.cmpi sle, %8, %168 : vector<1x256xi32>
    %c1_i32_57 = arith.constant 1 : i32
    %170 = vector.broadcast %c1_i32_57 : i32 to vector<1x256xi32>
    %171 = arith.cmpi sge, %10, %170 : vector<1x256xi32>
    %172 = arith.andi %169, %171 : vector<1x256xi1>
    %cst_58 = arith.constant 0.000000e+00 : f32
    %173 = vector.shape_cast %172 : vector<1x256xi1> to vector<1x256xi1>
    %174 = vector.broadcast %173 : vector<1x256xi1> to vector<2x256xi1>
    %175 = vector.broadcast %cst_58 : f32 to vector<2x256xf32>
    %176 = arith.select %174, %167, %175 : vector<2x256xi1>, vector<2x256xf32>
    %177 = arith.addf %159, %176 : vector<2x256xf32>
    %c240_i32 = arith.constant 240 : i32
    %178 = tpu.dynamic_rotate %69 by %c240_i32 dim 1 : vector<8x256xf32>, i32 -> vector<8x256xf32>
    %c240_i32_59 = arith.constant 240 : i32
    %179 = tpu.dynamic_rotate %70 by %c240_i32_59 dim 1 : vector<8x256xf32>, i32 -> vector<8x256xf32>
    %180 = vector.extract_strided_slice %6 {offsets = [14, 0], sizes = [2, 16], strides = [1, 1]} : vector<18x16xf32> to vector<2x16xf32>
    %181 = vector.extract_strided_slice %180 {offsets = [0, 0], sizes = [2, 8], strides = [1, 1]} : vector<2x16xf32> to vector<2x8xf32>
    %cst_60 = arith.constant dense<0.000000e+00> : vector<2x256xf32>
    %182 = tpu.matmul %181, %178, %cst_60 {dimension_numbers = #tpu.dot_dimension_numbers<[1], [0], [0], [1], [0, 0, 1, 1], [], []>} : vector<2x8xf32>, vector<8x256xf32>, vector<2x256xf32> -> vector<2x256xf32>
    %183 = vector.extract_strided_slice %180 {offsets = [0, 8], sizes = [2, 8], strides = [1, 1]} : vector<2x16xf32> to vector<2x8xf32>
    %cst_61 = arith.constant dense<0.000000e+00> : vector<2x256xf32>
    %184 = tpu.matmul %183, %179, %cst_61 {dimension_numbers = #tpu.dot_dimension_numbers<[1], [0], [0], [1], [0, 0, 1, 1], [], []>} : vector<2x8xf32>, vector<8x256xf32>, vector<2x256xf32> -> vector<2x256xf32>
    %185 = arith.addf %182, %184 : vector<2x256xf32>
    %c14_i32_62 = arith.constant 14 : i32
    %186 = vector.broadcast %c14_i32_62 : i32 to vector<1x256xi32>
    %187 = arith.cmpi sle, %8, %186 : vector<1x256xi32>
    %cst_63 = arith.constant 0.000000e+00 : f32
    %188 = vector.shape_cast %187 : vector<1x256xi1> to vector<1x256xi1>
    %189 = vector.broadcast %188 : vector<1x256xi1> to vector<2x256xi1>
    %190 = vector.broadcast %cst_63 : f32 to vector<2x256xf32>
    %191 = arith.select %189, %185, %190 : vector<2x256xi1>, vector<2x256xf32>
    %192 = arith.addf %177, %191 : vector<2x256xf32>
    %c239_i32 = arith.constant 239 : i32
    %193 = tpu.dynamic_rotate %69 by %c239_i32 dim 1 : vector<8x256xf32>, i32 -> vector<8x256xf32>
    %c239_i32_64 = arith.constant 239 : i32
    %194 = tpu.dynamic_rotate %70 by %c239_i32_64 dim 1 : vector<8x256xf32>, i32 -> vector<8x256xf32>
    %195 = vector.extract_strided_slice %6 {offsets = [16, 0], sizes = [2, 16], strides = [1, 1]} : vector<18x16xf32> to vector<2x16xf32>
    %196 = vector.extract_strided_slice %195 {offsets = [0, 0], sizes = [2, 8], strides = [1, 1]} : vector<2x16xf32> to vector<2x8xf32>
    %cst_65 = arith.constant dense<0.000000e+00> : vector<2x256xf32>
    %197 = tpu.matmul %196, %193, %cst_65 {dimension_numbers = #tpu.dot_dimension_numbers<[1], [0], [0], [1], [0, 0, 1, 1], [], []>} : vector<2x8xf32>, vector<8x256xf32>, vector<2x256xf32> -> vector<2x256xf32>
    %198 = vector.extract_strided_slice %195 {offsets = [0, 8], sizes = [2, 8], strides = [1, 1]} : vector<2x16xf32> to vector<2x8xf32>
    %cst_66 = arith.constant dense<0.000000e+00> : vector<2x256xf32>
    %199 = tpu.matmul %198, %194, %cst_66 {dimension_numbers = #tpu.dot_dimension_numbers<[1], [0], [0], [1], [0, 0, 1, 1], [], []>} : vector<2x8xf32>, vector<8x256xf32>, vector<2x256xf32> -> vector<2x256xf32>
    %200 = arith.addf %197, %199 : vector<2x256xf32>
    %c14_i32_67 = arith.constant 14 : i32
    %201 = vector.broadcast %c14_i32_67 : i32 to vector<1x256xi32>
    %202 = arith.cmpi sle, %8, %201 : vector<1x256xi32>
    %c14_i32_68 = arith.constant 14 : i32
    %203 = vector.broadcast %c14_i32_68 : i32 to vector<1x256xi32>
    %204 = arith.cmpi sle, %10, %203 : vector<1x256xi32>
    %205 = arith.andi %202, %204 : vector<1x256xi1>
    %cst_69 = arith.constant 0.000000e+00 : f32
    %206 = vector.shape_cast %205 : vector<1x256xi1> to vector<1x256xi1>
    %207 = vector.broadcast %206 : vector<1x256xi1> to vector<2x256xi1>
    %208 = vector.broadcast %cst_69 : f32 to vector<2x256xf32>
    %209 = arith.select %207, %200, %208 : vector<2x256xi1>, vector<2x256xf32>
    %210 = arith.addf %192, %209 : vector<2x256xf32>
    %211 = vector.extract_strided_slice %210 {offsets = [0, 0], sizes = [1, 256], strides = [1, 1]} : vector<2x256xf32> to vector<1x256xf32>
    %212 = vector.extract_strided_slice %210 {offsets = [1, 0], sizes = [1, 256], strides = [1, 1]} : vector<2x256xf32> to vector<1x256xf32>
    %cst_70 = arith.constant 2.000000e+00 : f32
    %213 = vector.broadcast %cst_70 : f32 to vector<1x256xf32>
    %214 = arith.mulf %213, %12 : vector<1x256xf32>
    %cst_71 = arith.constant 0.0666666701 : f32
    %215 = vector.broadcast %cst_71 : f32 to vector<1x256xf32>
    %216 = arith.mulf %214, %215 : vector<1x256xf32>
    %cst_72 = arith.constant 1.000000e+00 : f32
    %217 = vector.broadcast %cst_72 : f32 to vector<1x256xf32>
    %218 = arith.subf %216, %217 : vector<1x256xf32>
    %cst_73 = arith.constant 2.000000e+00 : f32
    %219 = vector.broadcast %cst_73 : f32 to vector<1x256xf32>
    %220 = arith.mulf %219, %11 : vector<1x256xf32>
    %cst_74 = arith.constant 0.0666666701 : f32
    %221 = vector.broadcast %cst_74 : f32 to vector<1x256xf32>
    %222 = arith.mulf %220, %221 : vector<1x256xf32>
    %cst_75 = arith.constant 1.000000e+00 : f32
    %223 = vector.broadcast %cst_75 : f32 to vector<1x256xf32>
    %224 = arith.subf %222, %223 : vector<1x256xf32>
    %cst_76 = arith.constant 6.250000e-02 : f32
    %225 = vector.broadcast %cst_76 : f32 to vector<1x256xf32>
    %226 = arith.mulf %211, %225 : vector<1x256xf32>
    %227 = arith.addf %218, %226 : vector<1x256xf32>
    %cst_77 = arith.constant 6.250000e-02 : f32
    %228 = vector.broadcast %cst_77 : f32 to vector<1x256xf32>
    %229 = arith.mulf %212, %228 : vector<1x256xf32>
    %230 = arith.addf %224, %229 : vector<1x256xf32>
    %cst_78 = arith.constant 1.000000e+00 : f32
    %231 = vector.broadcast %cst_78 : f32 to vector<1x256xf32>
    %232 = arith.addf %227, %231 : vector<1x256xf32>
    %cst_79 = arith.constant 8.000000e+00 : f32
    %233 = vector.broadcast %cst_79 : f32 to vector<1x256xf32>
    %234 = arith.mulf %232, %233 : vector<1x256xf32>
    %cst_80 = arith.constant 1.000000e+00 : f32
    %235 = vector.broadcast %cst_80 : f32 to vector<1x256xf32>
    %236 = arith.subf %234, %235 : vector<1x256xf32>
    %cst_81 = arith.constant 5.000000e-01 : f32
    %237 = vector.broadcast %cst_81 : f32 to vector<1x256xf32>
    %238 = arith.mulf %236, %237 : vector<1x256xf32>
    %cst_82 = arith.constant 1.000000e+00 : f32
    %239 = vector.broadcast %cst_82 : f32 to vector<1x256xf32>
    %240 = arith.addf %230, %239 : vector<1x256xf32>
    %cst_83 = arith.constant 8.000000e+00 : f32
    %241 = vector.broadcast %cst_83 : f32 to vector<1x256xf32>
    %242 = arith.mulf %240, %241 : vector<1x256xf32>
    %cst_84 = arith.constant 1.000000e+00 : f32
    %243 = vector.broadcast %cst_84 : f32 to vector<1x256xf32>
    %244 = arith.subf %242, %243 : vector<1x256xf32>
    %cst_85 = arith.constant 5.000000e-01 : f32
    %245 = vector.broadcast %cst_85 : f32 to vector<1x256xf32>
    %246 = arith.mulf %244, %245 : vector<1x256xf32>
    %247 = math.floor %238 : vector<1x256xf32>
    %248 = math.floor %246 : vector<1x256xf32>
    %249 = arith.fptosi %247 : vector<1x256xf32> to vector<1x256xi32>
    %250 = arith.fptosi %248 : vector<1x256xf32> to vector<1x256xi32>
    %251 = arith.subf %238, %247 : vector<1x256xf32>
    %252 = arith.subf %246, %248 : vector<1x256xf32>
    %c1_i32_86 = arith.constant 1 : i32
    %253 = vector.broadcast %c1_i32_86 : i32 to vector<1x256xi32>
    %254 = arith.addi %249, %253 : vector<1x256xi32>
    %cst_87 = arith.constant 1.000000e+00 : f32
    %255 = vector.broadcast %cst_87 : f32 to vector<1x256xf32>
    %256 = arith.subf %255, %251 : vector<1x256xf32>
    %257 = tpu.iota {dimensions = array<i32: 0>} : vector<8x256xi32>
    %258 = vector.broadcast %249 : vector<1x256xi32> to vector<8x256xi32>
    %259 = arith.cmpi eq, %257, %258 : vector<8x256xi32>
    %cst_88 = arith.constant 0.000000e+00 : f32
    %260 = vector.shape_cast %256 : vector<1x256xf32> to vector<1x256xf32>
    %261 = vector.broadcast %260 : vector<1x256xf32> to vector<8x256xf32>
    %262 = vector.broadcast %cst_88 : f32 to vector<8x256xf32>
    %263 = arith.select %259, %261, %262 : vector<8x256xi1>, vector<8x256xf32>
    %264 = vector.broadcast %254 : vector<1x256xi32> to vector<8x256xi32>
    %265 = arith.cmpi eq, %257, %264 : vector<8x256xi32>
    %cst_89 = arith.constant 0.000000e+00 : f32
    %266 = vector.shape_cast %251 : vector<1x256xf32> to vector<1x256xf32>
    %267 = vector.broadcast %266 : vector<1x256xf32> to vector<8x256xf32>
    %268 = vector.broadcast %cst_89 : f32 to vector<8x256xf32>
    %269 = arith.select %265, %267, %268 : vector<8x256xi1>, vector<8x256xf32>
    %270 = arith.addf %263, %269 : vector<8x256xf32>
    %c1_i32_90 = arith.constant 1 : i32
    %271 = vector.broadcast %c1_i32_90 : i32 to vector<1x256xi32>
    %272 = arith.addi %250, %271 : vector<1x256xi32>
    %cst_91 = arith.constant 1.000000e+00 : f32
    %273 = vector.broadcast %cst_91 : f32 to vector<1x256xf32>
    %274 = arith.subf %273, %252 : vector<1x256xf32>
    %275 = tpu.iota {dimensions = array<i32: 0>} : vector<8x256xi32>
    %276 = vector.broadcast %250 : vector<1x256xi32> to vector<8x256xi32>
    %277 = arith.cmpi eq, %275, %276 : vector<8x256xi32>
    %cst_92 = arith.constant 0.000000e+00 : f32
    %278 = vector.shape_cast %274 : vector<1x256xf32> to vector<1x256xf32>
    %279 = vector.broadcast %278 : vector<1x256xf32> to vector<8x256xf32>
    %280 = vector.broadcast %cst_92 : f32 to vector<8x256xf32>
    %281 = arith.select %277, %279, %280 : vector<8x256xi1>, vector<8x256xf32>
    %282 = vector.broadcast %272 : vector<1x256xi32> to vector<8x256xi32>
    %283 = arith.cmpi eq, %275, %282 : vector<8x256xi32>
    %cst_93 = arith.constant 0.000000e+00 : f32
    %284 = vector.shape_cast %252 : vector<1x256xf32> to vector<1x256xf32>
    %285 = vector.broadcast %284 : vector<1x256xf32> to vector<8x256xf32>
    %286 = vector.broadcast %cst_93 : f32 to vector<8x256xf32>
    %287 = arith.select %283, %285, %286 : vector<8x256xi1>, vector<8x256xf32>
    %288 = arith.addf %281, %287 : vector<8x256xf32>
    %cst_94 = arith.constant dense<0.000000e+00> : vector<32x256xf32>
    %289 = tpu.matmul %3, %270, %cst_94 {dimension_numbers = #tpu.dot_dimension_numbers<[1], [0], [0], [1], [0, 0, 1, 1], [], []>} : vector<32x8xf32>, vector<8x256xf32>, vector<32x256xf32> -> vector<32x256xf32>
    %290 = vector.shape_cast %289 : vector<32x256xf32> to vector<4x8x256xf32>
    %291 = vector.shape_cast %288 : vector<8x256xf32> to vector<1x8x256xf32>
    %292 = vector.broadcast %291 : vector<1x8x256xf32> to vector<4x8x256xf32>
    %293 = arith.mulf %290, %292 : vector<4x8x256xf32>
    %cst_95 = arith.constant dense<0.000000e+00> : vector<4x256xf32>
    %294 = vector.multi_reduction <add>, %293, %cst_95 [1] : vector<4x8x256xf32> to vector<4x256xf32>
    %c0_96 = arith.constant 0 : index
    %c0_97 = arith.constant 0 : index
    %c0_98 = arith.constant 0 : index
    %295 = vector.load %arg5[%c0_96, %c0_97, %c0_98] : memref<1x4x256xf32, #tpu.memory_space<vmem>>, vector<1x4x256xf32>
    %296 = vector.shape_cast %295 : vector<1x4x256xf32> to vector<4x256xf32>
    %297 = vector.shape_cast %294 : vector<4x256xf32> to vector<1x4x256xf32>
    tpu.vector_store %arg5[%c0_96, %c0_97, %c0_98], %297 {strides = array<i32>} : memref<1x4x256xf32, #tpu.memory_space<vmem>>, vector<1x4x256xf32>,
    return
  }
  func.func @transform_0(%arg0: i32) -> (i32, i32, i32) {
    %c0_i32 = arith.constant 0 : i32
    %c0_i32_0 = arith.constant 0 : i32
    %c0_i32_1 = arith.constant 0 : i32
    return %arg0, %c0_i32, %c0_i32_0 : i32, i32, i32
  }
  func.func @transform_1(%arg0: i32) -> (i32, i32, i32) {
    %c0_i32 = arith.constant 0 : i32
    %c0_i32_0 = arith.constant 0 : i32
    %c0_i32_1 = arith.constant 0 : i32
    return %arg0, %c0_i32, %c0_i32_0 : i32, i32, i32
  }
  func.func @transform_2(%arg0: i32) -> (i32, i32) {
    %c0_i32 = arith.constant 0 : i32
    %c0_i32_0 = arith.constant 0 : i32
    %c0_i32_1 = arith.constant 0 : i32
    return %c0_i32, %c0_i32_0 : i32, i32
  }
  func.func @transform_3(%arg0: i32) -> (i32, i32) {
    %c0_i32 = arith.constant 0 : i32
    %c0_i32_0 = arith.constant 0 : i32
    %c0_i32_1 = arith.constant 0 : i32
    return %c0_i32, %c0_i32_0 : i32, i32
  }
  func.func @transform_4(%arg0: i32) -> (i32, i32, i32) {
    %c0_i32 = arith.constant 0 : i32
    %c0_i32_0 = arith.constant 0 : i32
    %c0_i32_1 = arith.constant 0 : i32
    return %arg0, %c0_i32, %c0_i32_0 : i32, i32, i32
  }
}

</mosaic_0001>

<llo_original>
// kernel: aligned_module.1
$region0: #{aligned_module.1}
  #allocation0 [shape = 'u32[]', space=smem, size = 0x4, offset = 0x4, fixed_abs, tag = 'smem constant byte address 0x4 - core index']
  #allocation1 [shape = 'u32[144,128]{1,0:T(1,128)}', space=vmem, size = 0x12000, scoped, tag = 'internal scratch']
  %s0 = inlined_call_operand.vmem [shape: f32[2,4,256], index: 0, kind: input, shape index: {}]
  %s1 = inlined_call_operand.vmem [shape: f32[2,32,8], index: 1, kind: input, shape index: {}]
  %s2 = inlined_call_operand.vmem [shape: f32[16,4], index: 2, kind: input, shape index: {}]
  %s3 = inlined_call_operand.vmem [shape: f32[18,16], index: 3, kind: input, shape index: {}]
  %s4 = inlined_call_operand.vmem [shape: f32[2,4,256], index: 4, kind: output, shape index: {}]
  %s5 = sld [smem:[#allocation0]]
  $region49: #{aligned_module.1} parent=0
    _
  %s7 = ssub.s32 1, %s5
  %s8 = scalar_select 0, %s7, %s5
  loop: start=0, step=1, limit=4
  $region2: #{aligned_module.1} parent=0 // loop_pre_header
    _
  $region3: #{aligned_module.1} parent=0 // loop_header
    %s10 = sphi 0, %s14
    %p11 = scmp.ge.s32.totalorder %s10, 4
    %s20 = sphi 0, %s22
    %s23 = sphi 0, %s20
    %s24 = sphi 0, %s23
    %s40 = sphi 0, %s24
    %s46 = sphi 0, %s48
    %s49 = sphi 0, %s46
    %s50 = sphi 0, %s49
    %s66 = sphi 0, %s50
    %s70 = sphi 0, %s70
    %s72 = sphi 0, %s70
    %s73 = sphi 0, %s72
    %s87 = sphi 0, %s73
    %s91 = sphi 0, %s91
    %s93 = sphi 0, %s91
    %s94 = sphi 0, %s93
    %s108 = sphi 0, %s94
    %s114 = sphi 0, %s116
    %s117 = sphi 0, %s114
    %s118 = sphi 0, %s117
    %s134 = sphi 0, %s118
  $region4: #{aligned_module.1} parent=0 // loop_header_branch
    %13 = sbr.rel (%p11) target = $region8
  $region5: #{aligned_module.1} parent=0 // loop_body
    %s15 = ssub.s32 %s10, 1
    %s16 = ssub.s32 %s10, 2
    %s17 = sadd.s32 %s10, 1
    %s18 = ssub.s32 %s10, %s17
    %p19 = scmp.eq.s32.totalorder %s18, 0
    %s21 = sadd.s32 %s20, 1
    %s22 = scalar_select %p19, %s20, %s21
    %p25 = pneg %p19
    %p26 = scmp.eq.s32.totalorder %s10, 1
    %p27 = por %p25, %p26
    %p28 = scmp.ne.s32.totalorder %s20, %s23
    %p29 = scmp.eq.s32.totalorder %s10, 0
    %p30 = por %p28, %p29
    %p31 = scmp.ne.s32.totalorder %s20, %s23
    %p32 = scmp.eq.s32.totalorder %s15, 1
    %p33 = por %p31, %p32
    %p34 = scmp.ne.s32.totalorder %s23, %s24
    %p35 = scmp.eq.s32.totalorder %s15, 0
    %p36 = por %p34, %p35
    %p37 = scmp.ne.s32.totalorder %s23, %s24
    %p38 = scmp.eq.s32.totalorder %s16, 1
    %p39 = por %p37, %p38
    %p41 = scmp.ne.s32.totalorder %s24, %s40
    %p42 = scmp.eq.s32.totalorder %s16, 0
    %p43 = por %p41, %p42
    %s44 = ssub.s32 %s10, %s17
    %p45 = scmp.eq.s32.totalorder %s44, 0
    %s47 = sadd.s32 %s46, 1
    %s48 = scalar_select %p45, %s46, %s47
    %p51 = pneg %p45
    %p52 = scmp.eq.s32.totalorder %s10, 1
    %p53 = por %p51, %p52
    %p54 = scmp.ne.s32.totalorder %s46, %s49
    %p55 = scmp.eq.s32.totalorder %s10, 0
    %p56 = por %p54, %p55
    %p57 = scmp.ne.s32.totalorder %s46, %s49
    %p58 = scmp.eq.s32.totalorder %s15, 1
    %p59 = por %p57, %p58
    %p60 = scmp.ne.s32.totalorder %s49, %s50
    %p61 = scmp.eq.s32.totalorder %s15, 0
    %p62 = por %p60, %p61
    %p63 = scmp.ne.s32.totalorder %s49, %s50
    %p64 = scmp.eq.s32.totalorder %s16, 1
    %p65 = por %p63, %p64
    %p67 = scmp.ne.s32.totalorder %s50, %s66
    %p68 = scmp.eq.s32.totalorder %s16, 0
    %p69 = por %p67, %p68
    %s71 = sadd.s32 %s70, 1
    %p74 = scmp.eq.s32.totalorder %s10, 1
    %p75 = scmp.ne.s32.totalorder %s70, %s72
    %p76 = scmp.eq.s32.totalorder %s10, 0
    %p77 = por %p75, %p76
    %p78 = scmp.ne.s32.totalorder %s70, %s72
    %p79 = scmp.eq.s32.totalorder %s15, 1
    %p80 = por %p78, %p79
    %p81 = scmp.ne.s32.totalorder %s72, %s73
    %p82 = scmp.eq.s32.totalorder %s15, 0
    %p83 = por %p81, %p82
    %p84 = scmp.ne.s32.totalorder %s72, %s73
    %p85 = scmp.eq.s32.totalorder %s16, 1
    %p86 = por %p84, %p85
    %p88 = scmp.ne.s32.totalorder %s73, %s87
    %p89 = scmp.eq.s32.totalorder %s16, 0
    %p90 = por %p88, %p89
    %s92 = sadd.s32 %s91, 1
    %p95 = scmp.eq.s32.totalorder %s10, 1
    %p96 = scmp.ne.s32.totalorder %s91, %s93
    %p97 = scmp.eq.s32.totalorder %s10, 0
    %p98 = por %p96, %p97
    %p99 = scmp.ne.s32.totalorder %s91, %s93
    %p100 = scmp.eq.s32.totalorder %s15, 1
    %p101 = por %p99, %p100
    %p102 = scmp.ne.s32.totalorder %s93, %s94
    %p103 = scmp.eq.s32.totalorder %s15, 0
    %p104 = por %p102, %p103
    %p105 = scmp.ne.s32.totalorder %s93, %s94
    %p106 = scmp.eq.s32.totalorder %s16, 1
    %p107 = por %p105, %p106
    %p109 = scmp.ne.s32.totalorder %s94, %s108
    %p110 = scmp.eq.s32.totalorder %s16, 0
    %p111 = por %p109, %p110
    %s112 = ssub.s32 %s10, %s17
    %p113 = scmp.eq.s32.totalorder %s112, 0
    %s115 = sadd.s32 %s114, 1
    %s116 = scalar_select %p113, %s114, %s115
    %p119 = pneg %p113
    %p120 = scmp.eq.s32.totalorder %s10, 1
    %p121 = por %p119, %p120
    %p122 = scmp.ne.s32.totalorder %s114, %s117
    %p123 = scmp.eq.s32.totalorder %s10, 0
    %p124 = por %p122, %p123
    %p125 = scmp.ne.s32.totalorder %s114, %s117
    %p126 = scmp.eq.s32.totalorder %s15, 1
    %p127 = por %p125, %p126
    %p128 = scmp.ne.s32.totalorder %s117, %s118
    %p129 = scmp.eq.s32.totalorder %s15, 0
    %p130 = por %p128, %p129
    %p131 = scmp.ne.s32.totalorder %s117, %s118
    %p132 = scmp.eq.s32.totalorder %s16, 1
    %p133 = por %p131, %p132
    %p135 = scmp.ne.s32.totalorder %s118, %s134
    %p136 = scmp.eq.s32.totalorder %s16, 0
    %p137 = por %p135, %p136
    %p138 = scmp.le.s32.totalorder 1, %s10
    %p139 = scmp.lt.s32.totalorder %s10, 3
    %p140 = pnand %p138, %p139
    %p141 = pneg %p140
    // Predicated region
    $region9: #{aligned_module.1} parent=5 // pred_check
      _
    $region10: #{aligned_module.1} parent=5 // pred_check_branch
      %143 = sbr.rel (%p140) target = $region12
    $region11: #{aligned_module.1} parent=5 // pred_region
      %s144 = ssub.s32 %s10, 1
      // Predicated region
      $region13: #{aligned_module.1} parent=11 // pred_check
        %p145 = pneg %p83
      $region14: #{aligned_module.1} parent=11 // pred_check_branch
        %147 = sbr.rel (%p145) target = $region16
      $region15: #{aligned_module.1} parent=11 // pred_region
        _
      $region16: #{aligned_module.1} parent=11 // pred_fallthru
        _
      // Predicated region
      $region17: #{aligned_module.1} parent=11 // pred_check
        %p148 = pneg %p104
      $region18: #{aligned_module.1} parent=11 // pred_check_branch
        %150 = sbr.rel (%p148) target = $region20
      $region19: #{aligned_module.1} parent=11 // pred_region
        _
      $region20: #{aligned_module.1} parent=11 // pred_fallthru
        _
    $region12: #{aligned_module.1} parent=5 // pred_fallthru
      _
    %p151 = scmp.lt.s32.totalorder %s10, 2
    // Predicated region
    $region21: #{aligned_module.1} parent=5 // pred_check
      %p152 = pneg %p151
    $region22: #{aligned_module.1} parent=5 // pred_check_branch
      %154 = sbr.rel (%p152) target = $region24
    $region23: #{aligned_module.1} parent=5 // pred_region
      // Predicated region
      $region25: #{aligned_module.1} parent=23 // pred_check
        %p155 = pneg %p30
      $region26: #{aligned_module.1} parent=23 // pred_check_branch
        %157 = sbr.rel (%p155) target = $region28
      $region27: #{aligned_module.1} parent=23 // pred_region
        %p158 = scmp.lt.s32.totalorder %s10, 1
        %s159 = scalar_select %p158, %s10, 1
        %s160 = smul.addr %s159, 2
        %s161 = smul.addr %s160, 4
        %s162 = scalar_lea.vmem %s0, %s161
      $region28: #{aligned_module.1} parent=23 // pred_fallthru
        _
      // Predicated region
      $region29: #{aligned_module.1} parent=23 // pred_check
        %p163 = pneg %p56
      $region30: #{aligned_module.1} parent=23 // pred_check_branch
        %165 = sbr.rel (%p163) target = $region32
      $region31: #{aligned_module.1} parent=23 // pred_region
        %p166 = scmp.lt.s32.totalorder %s10, 1
        %s167 = scalar_select %p166, %s10, 1
        %s168 = smul.addr %s167, 4
        %s169 = smul.addr %s168, 8
        %s170 = scalar_lea.vmem %s1, %s169
      $region32: #{aligned_module.1} parent=23 // pred_fallthru
        _
    $region24: #{aligned_module.1} parent=5 // pred_fallthru
      _
    %p171 = scmp.le.s32.totalorder 1, %s10
    %p172 = scmp.lt.s32.totalorder %s10, 3
    %p173 = pnand %p171, %p172
    %p174 = pneg %p173
    // Predicated region
    $region33: #{aligned_module.1} parent=5 // pred_check
      _
    $region34: #{aligned_module.1} parent=5 // pred_check_branch
      %176 = sbr.rel (%p173) target = $region36
    $region35: #{aligned_module.1} parent=5 // pred_region
      %s177 = ssub.s32 %s10, 1
      %p178 = scmp.lt.s32.totalorder %s15, 1
      %s179 = scalar_select %p178, %s15, 1
      %s180 = smul.addr %s179, 2
      %s181 = smul.addr %s180, 4
      %s182 = scalar_lea.vmem %s0, %s181
      %p183 = pneg %p36
      %p184 = pneg %p33
      %p185 = scmp.lt.s32.totalorder %s15, 1
      %s186 = scalar_select %p185, %s15, 1
      %s187 = smul.addr %s186, 4
      %s188 = smul.addr %s187, 8
      %s189 = scalar_lea.vmem %s1, %s188
      %p190 = pneg %p62
      %p191 = pneg %p59
      %p192 = pneg %p83
      %p193 = pneg %p80
      %p194 = pneg %p104
      %p195 = pneg %p101
      %p196 = pneg %p130
      %p197 = pneg %p127
      %p198 = scmp.lt.s32.totalorder %s15, 1
      %s199 = scalar_select %p198, %s15, 1
      %s200 = smul.addr %s199, 2
      %s201 = smul.addr %s200, 4
      %s202 = scalar_lea.vmem %s4, %s201
      %p203 = scmp.lt.s32.totalorder %s15, 1
      %s204 = scalar_select %p203, %s15, 1
      %s205 = smul.addr %s204, 2
      %s206 = smul.addr %s205, 4
      %s207 = scalar_lea.vmem %s0, %s206
      %p208 = scmp.lt.s32.totalorder %s15, 1
      %s209 = scalar_select %p208, %s15, 1
      %s210 = smul.addr %s209, 4
      %s211 = smul.addr %s210, 8
      %s212 = scalar_lea.vmem %s1, %s211
      %p213 = scmp.lt.s32.totalorder %s15, 1
      %s214 = scalar_select %p213, %s15, 1
      %s215 = smul.addr %s214, 2
      %s216 = smul.addr %s215, 4
      %s217 = scalar_lea.vmem %s4, %s216
      %v218 = vld [vmem:[%s207] sm:$0xff]
      %v219 = vld [vmem:[%s212] sm:$0xff]
      %v220 = vld [vmem:[%s212 + $0x8] sm:$0xff]
      %v221 = vld [vmem:[%s212 + $0x10] sm:$0xff]
      %v222 = vld [vmem:[%s212 + $0x18] sm:$0xff]
      %v223 = vld [vmem:[%s2] sm:$0xff]
      %v224 = vld [vmem:[%s2 + $0x8] sm:$0xff]
      %v225 = vld [vmem:[%s3] sm:$0xff]
      %v226 = vld [vmem:[%s3 + $0x8] sm:$0xff]
      %v227 = vld [vmem:[%s3 + $0x10] sm:$0x3]
      %v228 = vlaneseq
      %v229 = vshrl.u32 %v228, 7
      %v230 = vadd.s32 %v229, 8
      %v231 = vcombine.high %v229, 0
      %v233 = vunpack.c.l.s4 1983009808
      %v234 = vunpack.c.0.s8 %v233
      %v235 = vlaneseq
      %v236 = vshrl.u32 %v235, 7
      %v237 = vsub.s32 %v234, %v236
      %v238 = vrot.slane %v229, %v237
      %v240 = vunpack.c.l.s4 1983009808
      %v241 = vunpack.c.0.s8 %v240
      %v242 = vlaneseq
      %v243 = vshrl.u32 %v242, 7
      %v244 = vsub.s32 %v241, %v243
      %v245 = vrot.slane %v231, %v244
      %v246 = vcombine.high %v238, 0
      %v248 = vunpack.c.l.s4 1934713408
      %v249 = vunpack.c.0.s8 %v248
      %v250 = vlaneseq
      %v251 = vshrl.u32 %v250, 7
      %v252 = vsub.s32 %v249, %v251
      %v253 = vrot.slane %v238, %v252
      %v255 = vunpack.c.l.s4 1934713408
      %v256 = vunpack.c.0.s8 %v255
      %v257 = vlaneseq
      %v258 = vshrl.u32 %v257, 7
      %v259 = vsub.s32 %v256, %v258
      %v260 = vrot.slane %v246, %v259
      %v261 = vcombine.high %v245, 0
      %v263 = vunpack.c.l.s4 1934713408
      %v264 = vunpack.c.0.s8 %v263
      %v265 = vlaneseq
      %v266 = vshrl.u32 %v265, 7
      %v267 = vsub.s32 %v264, %v266
      %v268 = vrot.slane %v245, %v267
      %v270 = vunpack.c.l.s4 1934713408
      %v271 = vunpack.c.0.s8 %v270
      %v272 = vlaneseq
      %v273 = vshrl.u32 %v272, 7
      %v274 = vsub.s32 %v271, %v273
      %v275 = vrot.slane %v261, %v274
      %v276 = vcombine.high %v253, 0
      %v277 = vcombine.high %v260, 0
      %v278 = vcombine.high %v268, 0
      %v279 = vcombine.high %v275, 0
      %v280 = vcombine.high %v230, 0
      %v282 = vunpack.c.l.s4 1983009808
      %v283 = vunpack.c.0.s8 %v282
      %v284 = vlaneseq
      %v285 = vshrl.u32 %v284, 7
      %v286 = vsub.s32 %v283, %v285
      %v287 = vrot.slane %v230, %v286
      %v289 = vunpack.c.l.s4 1983009808
      %v290 = vunpack.c.0.s8 %v289
      %v291 = vlaneseq
      %v292 = vshrl.u32 %v291, 7
      %v293 = vsub.s32 %v290, %v292
      %v294 = vrot.slane %v280, %v293
      %v295 = vcombine.high %v287, 0
      %v297 = vunpack.c.l.s4 1934713408
      %v298 = vunpack.c.0.s8 %v297
      %v299 = vlaneseq
      %v300 = vshrl.u32 %v299, 7
      %v301 = vsub.s32 %v298, %v300
      %v302 = vrot.slane %v287, %v301
      %v304 = vunpack.c.l.s4 1934713408
      %v305 = vunpack.c.0.s8 %v304
      %v306 = vlaneseq
      %v307 = vshrl.u32 %v306, 7
      %v308 = vsub.s32 %v305, %v307
      %v309 = vrot.slane %v295, %v308
      %v310 = vcombine.high %v294, 0
      %v312 = vunpack.c.l.s4 1934713408
      %v313 = vunpack.c.0.s8 %v312
      %v314 = vlaneseq
      %v315 = vshrl.u32 %v314, 7
      %v316 = vsub.s32 %v313, %v315
      %v317 = vrot.slane %v294, %v316
      %v319 = vunpack.c.l.s4 1934713408
      %v320 = vunpack.c.0.s8 %v319
      %v321 = vlaneseq
      %v322 = vshrl.u32 %v321, 7
      %v323 = vsub.s32 %v320, %v322
      %v324 = vrot.slane %v310, %v323
      %v325 = vcombine.high %v302, 0
      %v326 = vcombine.high %v309, 0
      %v327 = vcombine.high %v317, 0
      %v328 = vcombine.high %v324, 0
      %329 = vrot.lane.b32.xlu0 %v276, 16
      %v330 = vpop.permute.xlu0 %329
      %331 = vrot.lane.b32.xlu0 %v260, 32
      %v332 = vpop.permute.xlu0 %331
      %333 = vrot.lane.b32.xlu0 %v277, 48
      %v334 = vpop.permute.xlu0 %333
      %335 = vrot.lane.b32.xlu0 %v268, 64
      %v336 = vpop.permute.xlu0 %335
      %337 = vrot.lane.b32.xlu0 %v278, 80
      %v338 = vpop.permute.xlu0 %337
      %339 = vrot.lane.b32.xlu0 %v275, 96
      %v340 = vpop.permute.xlu0 %339
      %341 = vrot.lane.b32.xlu0 %v279, 112
      %v342 = vpop.permute.xlu0 %341
      %343 = vrot.lane.b32.xlu0 %v325, 16
      %v344 = vpop.permute.xlu0 %343
      %345 = vrot.lane.b32.xlu0 %v309, 32
      %v346 = vpop.permute.xlu0 %345
      %347 = vrot.lane.b32.xlu0 %v326, 48
      %v348 = vpop.permute.xlu0 %347
      %349 = vrot.lane.b32.xlu0 %v317, 64
      %v350 = vpop.permute.xlu0 %349
      %351 = vrot.lane.b32.xlu0 %v327, 80
      %v352 = vpop.permute.xlu0 %351
      %353 = vrot.lane.b32.xlu0 %v324, 96
      %v354 = vpop.permute.xlu0 %353
      %355 = vrot.lane.b32.xlu0 %v328, 112
      %v356 = vpop.permute.xlu0 %355
      %vm357 = vcmask 130048
      %v358 = vsel %vm357, %v253, %v330
      %vm359 = vcmask 261120
      %v360 = vsel %vm359, %v358, %v332
      %vm361 = vcmask 392192
      %v362 = vsel %vm361, %v360, %v334
      %vm363 = vcmask 523264
      %v364 = vsel %vm363, %v362, %v336
      %vm365 = vcmask 654336
      %v366 = vsel %vm365, %v364, %v338
      %vm367 = vcmask 785408
      %v368 = vsel %vm367, %v366, %v340
      %vm369 = vcmask 916480
      %v370 = vsel %vm369, %v368, %v342
      %v371 = vsel %vm357, %v302, %v344
      %v372 = vsel %vm359, %v371, %v346
      %v373 = vsel %vm361, %v372, %v348
      %v374 = vsel %vm363, %v373, %v350
      %v375 = vsel %vm365, %v374, %v352
      %v376 = vsel %vm367, %v375, %v354
      %v377 = vsel %vm369, %v376, %v356
      %v378 = vlaneseq
      %v379 = vand.u32 %v378, 127
      %v380 = vcombine.high %v379, 0
      %v382 = vunpack.c.l.s4 1983009808
      %v383 = vunpack.c.0.s8 %v382
      %v384 = vlaneseq
      %v385 = vshrl.u32 %v384, 7
      %v386 = vsub.s32 %v383, %v385
      %v387 = vrot.slane %v379, %v386
      %v389 = vunpack.c.l.s4 1983009808
      %v390 = vunpack.c.0.s8 %v389
      %v391 = vlaneseq
      %v392 = vshrl.u32 %v391, 7
      %v393 = vsub.s32 %v390, %v392
      %v394 = vrot.slane %v380, %v393
      %v395 = vcombine.high %v387, 0
      %v397 = vunpack.c.l.s4 1934713408
      %v398 = vunpack.c.0.s8 %v397
      %v399 = vlaneseq
      %v400 = vshrl.u32 %v399, 7
      %v401 = vsub.s32 %v398, %v400
      %v402 = vrot.slane %v387, %v401
      %v404 = vunpack.c.l.s4 1934713408
      %v405 = vunpack.c.0.s8 %v404
      %v406 = vlaneseq
      %v407 = vshrl.u32 %v406, 7
      %v408 = vsub.s32 %v405, %v407
      %v409 = vrot.slane %v395, %v408
      %v410 = vcombine.high %v394, 0
      %v412 = vunpack.c.l.s4 1934713408
      %v413 = vunpack.c.0.s8 %v412
      %v414 = vlaneseq
      %v415 = vshrl.u32 %v414, 7
      %v416 = vsub.s32 %v413, %v415
      %v417 = vrot.slane %v394, %v416
      %v419 = vunpack.c.l.s4 1934713408
      %v420 = vunpack.c.0.s8 %v419
      %v421 = vlaneseq
      %v422 = vshrl.u32 %v421, 7
      %v423 = vsub.s32 %v420, %v422
      %v424 = vrot.slane %v410, %v423
      %v425 = vcombine.high %v402, 0
      %v426 = vcombine.high %v409, 0
      %v427 = vcombine.high %v417, 0
      %v428 = vcombine.high %v424, 0
      %429 = vrot.lane.b32.xlu0 %v425, 16
      %v430 = vpop.permute.xlu0 %429
      %431 = vrot.lane.b32.xlu0 %v409, 32
      %v432 = vpop.permute.xlu0 %431
      %433 = vrot.lane.b32.xlu0 %v426, 48
      %v434 = vpop.permute.xlu0 %433
      %435 = vrot.lane.b32.xlu0 %v417, 64
      %v436 = vpop.permute.xlu0 %435
      %437 = vrot.lane.b32.xlu0 %v427, 80
      %v438 = vpop.permute.xlu0 %437
      %439 = vrot.lane.b32.xlu0 %v424, 96
      %v440 = vpop.permute.xlu0 %439
      %441 = vrot.lane.b32.xlu0 %v428, 112
      %v442 = vpop.permute.xlu0 %441
      %v443 = vsel %vm357, %v402, %v430
      %v444 = vsel %vm359, %v443, %v432
      %v445 = vsel %vm361, %v444, %v434
      %v446 = vsel %vm363, %v445, %v436
      %v447 = vsel %vm365, %v446, %v438
      %v448 = vsel %vm367, %v447, %v440
      %v449 = vsel %vm369, %v448, %v442
      %v450 = vcvt.s32.f32 %v370
      %v451 = vcvt.s32.f32 %v377
      %v452 = vcvt.s32.f32 %v449
      %v453 = vmul.f32 %v450, 0.46666667
      %v454 = vmul.f32 %v451, 0.46666667
      %v455 = vmul.f32 %v452, 0.46666667
      %v456 = vfloor.f32 %v453
      %v457 = vfloor.f32 %v454
      %v458 = vfloor.f32 %v455
      %v459 = vcvt.f32.s32.to.zero.pseudo %v456
      %v460 = vcvt.f32.s32.to.zero.pseudo %v457
      %v461 = vcvt.f32.s32.to.zero.pseudo %v458
      %v462 = vadd.s32 %v459, 1
      %v463 = vadd.s32 %v460, 1
      %vm464 = vcmp.lt.s32.totalorder %v462, 7
      %v465 = vsel %vm464, %v462, 7
      %vm466 = vcmp.lt.s32.totalorder %v463, 7
      %v467 = vsel %vm466, %v463, 7
      %v468 = vadd.s32 %v461, 1
      %vm469 = vcmp.lt.s32.totalorder %v468, 7
      %v470 = vsel %vm469, %v468, 7
      %v471 = vsub.f32 %v453, %v456
      %v472 = vsub.f32 %v454, %v457
      %v473 = vsub.f32 %v455, %v458
      %v474 = vsub.f32 1.0, %v471
      %v475 = vsub.f32 1.0, %v472
      %v476 = vlaneseq
      %v477 = vshrl.u32 %v476, 7
      %v478 = vsub.s32 0, %v477
      %v479 = vrot.slane %v459, %v478
      %v480 = vlaneseq
      %v481 = vshrl.u32 %v480, 7
      %v482 = vsub.s32 0, %v481
      %v483 = vrot.slane %v460, %v482
      %vm484 = vcmp.eq.s32.totalorder %v229, %v479
      %vm485 = vcmp.eq.s32.totalorder %v229, %v483
      %v486 = vlaneseq
      %v487 = vshrl.u32 %v486, 7
      %v488 = vsub.s32 0, %v487
      %v489 = vrot.slane %v474, %v488
      %v490 = vlaneseq
      %v491 = vshrl.u32 %v490, 7
      %v492 = vsub.s32 0, %v491
      %v493 = vrot.slane %v475, %v492
      %v494 = vsel %vm484, %v489, 0.0
      %v495 = vsel %vm485, %v493, 0.0
      %v496 = vlaneseq
      %v497 = vshrl.u32 %v496, 7
      %v498 = vsub.s32 0, %v497
      %v499 = vrot.slane %v465, %v498
      %v500 = vlaneseq
      %v501 = vshrl.u32 %v500, 7
      %v502 = vsub.s32 0, %v501
      %v503 = vrot.slane %v467, %v502
      %vm504 = vcmp.eq.s32.totalorder %v229, %v499
      %vm505 = vcmp.eq.s32.totalorder %v229, %v503
      %v506 = vlaneseq
      %v507 = vshrl.u32 %v506, 7
      %v508 = vsub.s32 0, %v507
      %v509 = vrot.slane %v471, %v508
      %v510 = vlaneseq
      %v511 = vshrl.u32 %v510, 7
      %v512 = vsub.s32 0, %v511
      %v513 = vrot.slane %v472, %v512
      %v514 = vsel %vm504, %v509, 0.0
      %v515 = vsel %vm505, %v513, 0.0
      %v516 = vadd.f32 %v494, %v514
      %v517 = vadd.f32 %v495, %v515
      %v518 = vsub.f32 1.0, %v473
      %v519 = vlaneseq
      %v520 = vshrl.u32 %v519, 7
      %v521 = vsub.s32 0, %v520
      %v522 = vrot.slane %v461, %v521
      %vm523 = vcmp.eq.s32.totalorder %v229, %v522
      %v524 = vlaneseq
      %v525 = vshrl.u32 %v524, 7
      %v526 = vsub.s32 0, %v525
      %v527 = vrot.slane %v518, %v526
      %v528 = vsel %vm523, %v527, 0.0
      %v529 = vlaneseq
      %v530 = vshrl.u32 %v529, 7
      %v531 = vsub.s32 0, %v530
      %v532 = vrot.slane %v470, %v531
      %vm533 = vcmp.eq.s32.totalorder %v229, %v532
      %v534 = vlaneseq
      %v535 = vshrl.u32 %v534, 7
      %v536 = vsub.s32 0, %v535
      %v537 = vrot.slane %v473, %v536
      %v538 = vsel %vm533, %v537, 0.0
      %v539 = vadd.f32 %v528, %v538
      %vm540 = vcmask 64512
      %v542 = vsel %vm540, %v219, 0
      %v545 = vsel %vm540, %v220, 0
      %v548 = vsel %vm540, %v221, 0
      %v551 = vsel %vm540, %v222, 0
      %553 = vmatprep.subr.mxu0 %v539
      %554 = vmatpush1.msra.mxu0 %v539
      %555 = vmatprep.subr.mxu0 0.0
      %556 = vmatpush1.msra.mxu0 0.0
      %557 = vmatprep.subr.mxu0 0.0
      %558 = vmatpush1.msra.mxu0 0.0
      %559 = vmatprep.subr.mxu0 0.0
      %560 = vmatpush1.msra.mxu0 0.0
      %561 = vmatprep.subr.mxu0 0.0
      %562 = vmatpush1.msra.mxu0 0.0
      %563 = vmatprep.subr.mxu0 0.0
      %564 = vmatpush1.msra.mxu0 0.0
      %565 = vmatprep.subr.mxu0 0.0
      %566 = vmatpush1.msra.mxu0 0.0
      %567 = vmatprep.subr.mxu0 0.0
      %568 = vmatpush1.msra.mxu0 0.0
      %569 = vmatprep.subr.mxu0 0.0
      %570 = vmatpush1.msra.mxu0 0.0
      %571 = vmatprep.subr.mxu0 0.0
      %572 = vmatpush1.msra.mxu0 0.0
      %573 = vmatprep.subr.mxu0 0.0
      %574 = vmatpush1.msra.mxu0 0.0
      %575 = vmatprep.subr.mxu0 0.0
      %576 = vmatpush1.msra.mxu0 0.0
      %577 = vmatprep.subr.mxu0 0.0
      %578 = vmatpush1.msra.mxu0 0.0
      %579 = vmatprep.subr.mxu0 0.0
      %580 = vmatpush1.msra.mxu0 0.0
      %581 = vmatprep.subr.mxu0 0.0
      %582 = vmatpush1.msra.mxu0 0.0
      %583 = vmatprep.subr.mxu0 0.0
      %584 = vmatpush1.msra.mxu0 0.0
      %585 = vmatprep.subr.mxu0 0.0
      %586 = vmatpush1.msra.mxu0 0.0
      %587 = vmatprep.subr.mxu0 0.0
      %588 = vmatpush1.msra.mxu0 0.0
      %589 = vmatprep.subr.mxu0 0.0
      %590 = vmatpush1.msra.mxu0 0.0
      %591 = vmatprep.subr.mxu0 0.0
      %592 = vmatpush1.msra.mxu0 0.0
      %593 = vmatprep.subr.mxu0 0.0
      %594 = vmatpush1.msra.mxu0 0.0
      %595 = vmatprep.subr.mxu0 0.0
      %596 = vmatpush1.msra.mxu0 0.0
      %597 = vmatprep.subr.mxu0 0.0
      %598 = vmatpush1.msra.mxu0 0.0
      %599 = vmatprep.subr.mxu0 0.0
      %600 = vmatpush1.msra.mxu0 0.0
      %601 = vmatprep.subr.mxu0 0.0
      %602 = vmatpush1.msra.mxu0 0.0
      %603 = vmatprep.subr.mxu0 0.0
      %604 = vmatpush1.msra.mxu0 0.0
      %605 = vmatprep.subr.mxu0 0.0
      %606 = vmatpush1.msra.mxu0 0.0
      %607 = vmatprep.subr.mxu0 0.0
      %608 = vmatpush1.msra.mxu0 0.0
      %609 = vmatprep.subr.mxu0 0.0
      %610 = vmatpush1.msra.mxu0 0.0
      %611 = vmatprep.subr.mxu0 0.0
      %612 = vmatpush1.msra.mxu0 0.0
      %613 = vmatprep.subr.mxu0 0.0
      %614 = vmatpush1.msra.mxu0 0.0
      %615 = vmatprep.subr.mxu0 0.0
      %616 = vmatpush1.msra.mxu0 0.0
      %617 = vmatprep.mubr.f32.mxu0 0.0
      %618 = vmatmul.mubr.f32.gmra.mrb[0].mxu0 %v542
      %v619 = vpop.f32.mrb[0].mxu0
      %v620 = vadd.f32 0.0, %v619
      %v621 = vpop.f32.mrb[0].mxu0
      %v622 = vadd.f32 0.0, %v621
      %623 = vmatprep.mubr.f32.mxu0 0.0
      %624 = vmatmul.mubr.f32.gmra.mrb[0].mxu0 %v545
      %v625 = vpop.f32.mrb[0].mxu0
      %v626 = vadd.f32 0.0, %v625
      %v627 = vpop.f32.mrb[0].mxu0
      %v628 = vadd.f32 0.0, %v627
      %629 = vmatprep.mubr.f32.mxu0 0.0
      %630 = vmatmul.mubr.f32.gmra.mrb[0].mxu0 %v548
      %v631 = vpop.f32.mrb[0].mxu0
      %v632 = vadd.f32 0.0, %v631
      %v633 = vpop.f32.mrb[0].mxu0
      %v634 = vadd.f32 0.0, %v633
      %635 = vmatprep.mubr.f32.mxu0 0.0
      %636 = vmatmul.mubr.f32.gmra.mrb[0].mxu0 %v551
      %v637 = vpop.f32.mrb[0].mxu0
      %v638 = vadd.f32 0.0, %v637
      %v639 = vpop.f32.mrb[0].mxu0
      %v640 = vadd.f32 0.0, %v639
      %641 = vdwg.mxu0
      %v642 = vmul.f32 %v620, %v516
      %v643 = vmul.f32 %v622, %v517
      %v644 = vmul.f32 %v626, %v516
      %v645 = vmul.f32 %v628, %v517
      %v646 = vmul.f32 %v632, %v516
      %v647 = vmul.f32 %v634, %v517
      %v648 = vmul.f32 %v638, %v516
      %v649 = vmul.f32 %v640, %v517
      %v650 = vrot.slane %v642, 4
      %v651 = vadd.f32 %v642, %v650
      %v652 = vrot.slane %v651, 2
      %v653 = vadd.f32 %v651, %v652
      %v654 = vrot.slane %v653, 1
      %v655 = vadd.f32 %v653, %v654
      %v656 = vrot.slane %v643, 4
      %v657 = vadd.f32 %v643, %v656
      %v658 = vrot.slane %v657, 2
      %v659 = vadd.f32 %v657, %v658
      %v660 = vrot.slane %v659, 1
      %v661 = vadd.f32 %v659, %v660
      %v662 = vrot.slane %v644, 4
      %v663 = vadd.f32 %v644, %v662
      %v664 = vrot.slane %v663, 2
      %v665 = vadd.f32 %v663, %v664
      %v666 = vrot.slane %v665, 1
      %v667 = vadd.f32 %v665, %v666
      %v668 = vrot.slane %v645, 4
      %v669 = vadd.f32 %v645, %v668
      %v670 = vrot.slane %v669, 2
      %v671 = vadd.f32 %v669, %v670
      %v672 = vrot.slane %v671, 1
      %v673 = vadd.f32 %v671, %v672
      %v674 = vrot.slane %v646, 4
      %v675 = vadd.f32 %v646, %v674
      %v676 = vrot.slane %v675, 2
      %v677 = vadd.f32 %v675, %v676
      %v678 = vrot.slane %v677, 1
      %v679 = vadd.f32 %v677, %v678
      %v680 = vrot.slane %v647, 4
      %v681 = vadd.f32 %v647, %v680
      %v682 = vrot.slane %v681, 2
      %v683 = vadd.f32 %v681, %v682
      %v684 = vrot.slane %v683, 1
      %v685 = vadd.f32 %v683, %v684
      %v686 = vrot.slane %v648, 4
      %v687 = vadd.f32 %v648, %v686
      %v688 = vrot.slane %v687, 2
      %v689 = vadd.f32 %v687, %v688
      %v690 = vrot.slane %v689, 1
      %v691 = vadd.f32 %v689, %v690
      %v692 = vrot.slane %v649, 4
      %v693 = vadd.f32 %v649, %v692
      %v694 = vrot.slane %v693, 2
      %v695 = vadd.f32 %v693, %v694
      %v696 = vrot.slane %v695, 1
      %v697 = vadd.f32 %v695, %v696
      %vm706 = vcmask 1041409
      %v707 = vsel %vm706, %v667, %v655
      %vm708 = vcmask 1042434
      %v709 = vsel %vm708, %v679, %v707
      %vm710 = vcmask 1043459
      %v711 = vsel %vm710, %v691, %v709
      %v712 = vsel %vm706, %v673, %v661
      %v713 = vsel %vm708, %v685, %v712
      %v714 = vsel %vm710, %v697, %v713
      %vm715 = vcmask 31744
      %v717 = vsel %vm715, %v223, 0
      %vm719 = vcmask 1043456
      %v720 = vsel %vm719, %v711, 0
      %v722 = vsel %vm719, %v714, 0
      %724 = vmatprep.subr.mxu0 %v722
      %725 = vmatpush1.msra.mxu0 %v720
      %726 = vmatprep.subr.mxu0 0.0
      %727 = vmatpush1.msra.mxu0 0.0
      %728 = vmatprep.subr.mxu0 0.0
      %729 = vmatpush1.msra.mxu0 0.0
      %730 = vmatprep.subr.mxu0 0.0
      %731 = vmatpush1.msra.mxu0 0.0
      %732 = vmatprep.subr.mxu0 0.0
      %733 = vmatpush1.msra.mxu0 0.0
      %734 = vmatprep.subr.mxu0 0.0
      %735 = vmatpush1.msra.mxu0 0.0
      %736 = vmatprep.subr.mxu0 0.0
      %737 = vmatpush1.msra.mxu0 0.0
      %738 = vmatprep.subr.mxu0 0.0
      %739 = vmatpush1.msra.mxu0 0.0
      %740 = vmatprep.subr.mxu0 0.0
      %741 = vmatpush1.msra.mxu0 0.0
      %742 = vmatprep.subr.mxu0 0.0
      %743 = vmatpush1.msra.mxu0 0.0
      %744 = vmatprep.subr.mxu0 0.0
      %745 = vmatpush1.msra.mxu0 0.0
      %746 = vmatprep.subr.mxu0 0.0
      %747 = vmatpush1.msra.mxu0 0.0
      %748 = vmatprep.subr.mxu0 0.0
      %749 = vmatpush1.msra.mxu0 0.0
      %750 = vmatprep.subr.mxu0 0.0
      %751 = vmatpush1.msra.mxu0 0.0
      %752 = vmatprep.subr.mxu0 0.0
      %753 = vmatpush1.msra.mxu0 0.0
      %754 = vmatprep.subr.mxu0 0.0
      %755 = vmatpush1.msra.mxu0 0.0
      %756 = vmatprep.subr.mxu0 0.0
      %757 = vmatpush1.msra.mxu0 0.0
      %758 = vmatprep.subr.mxu0 0.0
      %759 = vmatpush1.msra.mxu0 0.0
      %760 = vmatprep.subr.mxu0 0.0
      %761 = vmatpush1.msra.mxu0 0.0
      %762 = vmatprep.subr.mxu0 0.0
      %763 = vmatpush1.msra.mxu0 0.0
      %764 = vmatprep.subr.mxu0 0.0
      %765 = vmatpush1.msra.mxu0 0.0
      %766 = vmatprep.subr.mxu0 0.0
      %767 = vmatpush1.msra.mxu0 0.0
      %768 = vmatprep.subr.mxu0 0.0
      %769 = vmatpush1.msra.mxu0 0.0
      %770 = vmatprep.subr.mxu0 0.0
      %771 = vmatpush1.msra.mxu0 0.0
      %772 = vmatprep.subr.mxu0 0.0
      %773 = vmatpush1.msra.mxu0 0.0
      %774 = vmatprep.subr.mxu0 0.0
      %775 = vmatpush1.msra.mxu0 0.0
      %776 = vmatprep.subr.mxu0 0.0
      %777 = vmatpush1.msra.mxu0 0.0
      %778 = vmatprep.subr.mxu0 0.0
      %779 = vmatpush1.msra.mxu0 0.0
      %780 = vmatprep.subr.mxu0 0.0
      %781 = vmatpush1.msra.mxu0 0.0
      %782 = vmatprep.subr.mxu0 0.0
      %783 = vmatpush1.msra.mxu0 0.0
      %784 = vmatprep.subr.mxu0 0.0
      %785 = vmatpush1.msra.mxu0 0.0
      %786 = vmatprep.subr.mxu0 0.0
      %787 = vmatpush1.msra.mxu0 0.0
      %788 = vmatprep.mubr.f32.mxu0 0.0
      %789 = vmatmul.mubr.f32.gmra.mrb[0].mxu0 %v717
      %v790 = vpop.f32.mrb[0].mxu0
      %v791 = vadd.f32 0.0, %v790
      %v792 = vpop.f32.mrb[0].mxu0
      %v793 = vadd.f32 0.0, %v792
      %794 = vdwg.mxu0
      %v796 = vcombine.high %v218, %v218
      %v798 = vsel %vm715, %v224, 0
      %v800 = vsel %vm719, %v218, 0
      %v802 = vsel %vm719, %v796, 0
      %804 = vmatprep.subr.mxu0 %v802
      %805 = vmatpush1.msra.mxu0 %v800
      %806 = vmatprep.subr.mxu0 0.0
      %807 = vmatpush1.msra.mxu0 0.0
      %808 = vmatprep.subr.mxu0 0.0
      %809 = vmatpush1.msra.mxu0 0.0
      %810 = vmatprep.subr.mxu0 0.0
      %811 = vmatpush1.msra.mxu0 0.0
      %812 = vmatprep.subr.mxu0 0.0
      %813 = vmatpush1.msra.mxu0 0.0
      %814 = vmatprep.subr.mxu0 0.0
      %815 = vmatpush1.msra.mxu0 0.0
      %816 = vmatprep.subr.mxu0 0.0
      %817 = vmatpush1.msra.mxu0 0.0
      %818 = vmatprep.subr.mxu0 0.0
      %819 = vmatpush1.msra.mxu0 0.0
      %820 = vmatprep.subr.mxu0 0.0
      %821 = vmatpush1.msra.mxu0 0.0
      %822 = vmatprep.subr.mxu0 0.0
      %823 = vmatpush1.msra.mxu0 0.0
      %824 = vmatprep.subr.mxu0 0.0
      %825 = vmatpush1.msra.mxu0 0.0
      %826 = vmatprep.subr.mxu0 0.0
      %827 = vmatpush1.msra.mxu0 0.0
      %828 = vmatprep.subr.mxu0 0.0
      %829 = vmatpush1.msra.mxu0 0.0
      %830 = vmatprep.subr.mxu0 0.0
      %831 = vmatpush1.msra.mxu0 0.0
      %832 = vmatprep.subr.mxu0 0.0
      %833 = vmatpush1.msra.mxu0 0.0
      %834 = vmatprep.subr.mxu0 0.0
      %835 = vmatpush1.msra.mxu0 0.0
      %836 = vmatprep.subr.mxu0 0.0
      %837 = vmatpush1.msra.mxu0 0.0
      %838 = vmatprep.subr.mxu0 0.0
      %839 = vmatpush1.msra.mxu0 0.0
      %840 = vmatprep.subr.mxu0 0.0
      %841 = vmatpush1.msra.mxu0 0.0
      %842 = vmatprep.subr.mxu0 0.0
      %843 = vmatpush1.msra.mxu0 0.0
      %844 = vmatprep.subr.mxu0 0.0
      %845 = vmatpush1.msra.mxu0 0.0
      %846 = vmatprep.subr.mxu0 0.0
      %847 = vmatpush1.msra.mxu0 0.0
      %848 = vmatprep.subr.mxu0 0.0
      %849 = vmatpush1.msra.mxu0 0.0
      %850 = vmatprep.subr.mxu0 0.0
      %851 = vmatpush1.msra.mxu0 0.0
      %852 = vmatprep.subr.mxu0 0.0
      %853 = vmatpush1.msra.mxu0 0.0
      %854 = vmatprep.subr.mxu0 0.0
      %855 = vmatpush1.msra.mxu0 0.0
      %856 = vmatprep.subr.mxu0 0.0
      %857 = vmatpush1.msra.mxu0 0.0
      %858 = vmatprep.subr.mxu0 0.0
      %859 = vmatpush1.msra.mxu0 0.0
      %860 = vmatprep.subr.mxu0 0.0
      %861 = vmatpush1.msra.mxu0 0.0
      %862 = vmatprep.subr.mxu0 0.0
      %863 = vmatpush1.msra.mxu0 0.0
      %864 = vmatprep.subr.mxu0 0.0
      %865 = vmatpush1.msra.mxu0 0.0
      %866 = vmatprep.subr.mxu0 0.0
      %867 = vmatpush1.msra.mxu0 0.0
      %868 = vmatprep.mubr.f32.mxu0 0.0
      %869 = vmatmul.mubr.f32.gmra.mrb[0].mxu0 %v798
      %v870 = vpop.f32.mrb[0].mxu0
      %v871 = vadd.f32 0.0, %v870
      %v872 = vpop.f32.mrb[0].mxu0
      %v873 = vadd.f32 0.0, %v872
      %874 = vdwg.mxu0
      %875 = vrot.lane.b32.xlu0 %v791, 17
      %v876 = vpop.permute.xlu0 %875
      %877 = vrot.lane.b32.xlu0 %v793, 17
      %v878 = vpop.permute.xlu0 %877
      %vm879 = vcmp.lt.s32.totalorder %v379, 17
      %v880 = vsel %vm879, %v876, %v878
      %v881 = vsel %vm879, %v878, %v876
      %882 = vrot.lane.b32.xlu0 %v871, 17
      %v883 = vpop.permute.xlu0 %882
      %884 = vrot.lane.b32.xlu0 %v873, 17
      %v885 = vpop.permute.xlu0 %884
      %v886 = vsel %vm879, %v883, %v885
      %v887 = vsel %vm879, %v885, %v883
      %889 = vrot.lane.b32.xlu0 %v225, 120
      %v890 = vpop.permute.xlu0 %889
      %v891 = vsel %vm540, %v890, 0
      %893 = vmatprep.subr.mxu0 %v886
      %894 = vmatpush1.msra.mxu0 %v887
      %895 = vmatprep.subr.mxu0 0.0
      %896 = vmatpush1.msra.mxu0 0.0
      %897 = vmatprep.subr.mxu0 0.0
      %898 = vmatpush1.msra.mxu0 0.0
      %899 = vmatprep.subr.mxu0 0.0
      %900 = vmatpush1.msra.mxu0 0.0
      %901 = vmatprep.subr.mxu0 0.0
      %902 = vmatpush1.msra.mxu0 0.0
      %903 = vmatprep.subr.mxu0 0.0
      %904 = vmatpush1.msra.mxu0 0.0
      %905 = vmatprep.subr.mxu0 0.0
      %906 = vmatpush1.msra.mxu0 0.0
      %907 = vmatprep.subr.mxu0 0.0
      %908 = vmatpush1.msra.mxu0 0.0
      %909 = vmatprep.subr.mxu0 0.0
      %910 = vmatpush1.msra.mxu0 0.0
      %911 = vmatprep.subr.mxu0 0.0
      %912 = vmatpush1.msra.mxu0 0.0
      %913 = vmatprep.subr.mxu0 0.0
      %914 = vmatpush1.msra.mxu0 0.0
      %915 = vmatprep.subr.mxu0 0.0
      %916 = vmatpush1.msra.mxu0 0.0
      %917 = vmatprep.subr.mxu0 0.0
      %918 = vmatpush1.msra.mxu0 0.0
      %919 = vmatprep.subr.mxu0 0.0
      %920 = vmatpush1.msra.mxu0 0.0
      %921 = vmatprep.subr.mxu0 0.0
      %922 = vmatpush1.msra.mxu0 0.0
      %923 = vmatprep.subr.mxu0 0.0
      %924 = vmatpush1.msra.mxu0 0.0
      %925 = vmatprep.subr.mxu0 0.0
      %926 = vmatpush1.msra.mxu0 0.0
      %927 = vmatprep.subr.mxu0 0.0
      %928 = vmatpush1.msra.mxu0 0.0
      %929 = vmatprep.subr.mxu0 0.0
      %930 = vmatpush1.msra.mxu0 0.0
      %931 = vmatprep.subr.mxu0 0.0
      %932 = vmatpush1.msra.mxu0 0.0
      %933 = vmatprep.subr.mxu0 0.0
      %934 = vmatpush1.msra.mxu0 0.0
      %935 = vmatprep.subr.mxu0 0.0
      %936 = vmatpush1.msra.mxu0 0.0
      %937 = vmatprep.subr.mxu0 0.0
      %938 = vmatpush1.msra.mxu0 0.0
      %939 = vmatprep.subr.mxu0 0.0
      %940 = vmatpush1.msra.mxu0 0.0
      %941 = vmatprep.subr.mxu0 0.0
      %942 = vmatpush1.msra.mxu0 0.0
      %943 = vmatprep.subr.mxu0 0.0
      %944 = vmatpush1.msra.mxu0 0.0
      %945 = vmatprep.subr.mxu0 0.0
      %946 = vmatpush1.msra.mxu0 0.0
      %947 = vmatprep.subr.mxu0 0.0
      %948 = vmatpush1.msra.mxu0 0.0
      %949 = vmatprep.subr.mxu0 0.0
      %950 = vmatpush1.msra.mxu0 0.0
      %951 = vmatprep.subr.mxu0 0.0
      %952 = vmatpush1.msra.mxu0 0.0
      %953 = vmatprep.subr.mxu0 0.0
      %954 = vmatpush1.msra.mxu0 0.0
      %955 = vmatprep.subr.mxu0 0.0
      %956 = vmatpush1.msra.mxu0 0.0
      %957 = vmatprep.mubr.f32.mxu0 0.0
      %958 = vmatmul.mubr.f32.gmra.mrb[0].mxu0 %v891
      %v959 = vpop.f32.mrb[0].mxu0
      %v960 = vadd.f32 0.0, %v959
      %v961 = vpop.f32.mrb[0].mxu0
      %v962 = vadd.f32 0.0, %v961
      %963 = vdwg.mxu0
      %v964 = vsel %vm540, %v225, 0
      %966 = vmatprep.subr.mxu0 %v880
      %967 = vmatpush1.msra.mxu0 %v881
      %968 = vmatprep.subr.mxu0 0.0
      %969 = vmatpush1.msra.mxu0 0.0
      %970 = vmatprep.subr.mxu0 0.0
      %971 = vmatpush1.msra.mxu0 0.0
      %972 = vmatprep.subr.mxu0 0.0
      %973 = vmatpush1.msra.mxu0 0.0
      %974 = vmatprep.subr.mxu0 0.0
      %975 = vmatpush1.msra.mxu0 0.0
      %976 = vmatprep.subr.mxu0 0.0
      %977 = vmatpush1.msra.mxu0 0.0
      %978 = vmatprep.subr.mxu0 0.0
      %979 = vmatpush1.msra.mxu0 0.0
      %980 = vmatprep.subr.mxu0 0.0
      %981 = vmatpush1.msra.mxu0 0.0
      %982 = vmatprep.subr.mxu0 0.0
      %983 = vmatpush1.msra.mxu0 0.0
      %984 = vmatprep.subr.mxu0 0.0
      %985 = vmatpush1.msra.mxu0 0.0
      %986 = vmatprep.subr.mxu0 0.0
      %987 = vmatpush1.msra.mxu0 0.0
      %988 = vmatprep.subr.mxu0 0.0
      %989 = vmatpush1.msra.mxu0 0.0
      %990 = vmatprep.subr.mxu0 0.0
      %991 = vmatpush1.msra.mxu0 0.0
      %992 = vmatprep.subr.mxu0 0.0
      %993 = vmatpush1.msra.mxu0 0.0
      %994 = vmatprep.subr.mxu0 0.0
      %995 = vmatpush1.msra.mxu0 0.0
      %996 = vmatprep.subr.mxu0 0.0
      %997 = vmatpush1.msra.mxu0 0.0
      %998 = vmatprep.subr.mxu0 0.0
      %999 = vmatpush1.msra.mxu0 0.0
      %1000 = vmatprep.subr.mxu0 0.0
      %1001 = vmatpush1.msra.mxu0 0.0
      %1002 = vmatprep.subr.mxu0 0.0
      %1003 = vmatpush1.msra.mxu0 0.0
      %1004 = vmatprep.subr.mxu0 0.0
      %1005 = vmatpush1.msra.mxu0 0.0
      %1006 = vmatprep.subr.mxu0 0.0
      %1007 = vmatpush1.msra.mxu0 0.0
      %1008 = vmatprep.subr.mxu0 0.0
      %1009 = vmatpush1.msra.mxu0 0.0
      %1010 = vmatprep.subr.mxu0 0.0
      %1011 = vmatpush1.msra.mxu0 0.0
      %1012 = vmatprep.subr.mxu0 0.0
      %1013 = vmatpush1.msra.mxu0 0.0
      %1014 = vmatprep.subr.mxu0 0.0
      %1015 = vmatpush1.msra.mxu0 0.0
      %1016 = vmatprep.subr.mxu0 0.0
      %1017 = vmatpush1.msra.mxu0 0.0
      %1018 = vmatprep.subr.mxu0 0.0
      %1019 = vmatpush1.msra.mxu0 0.0
      %1020 = vmatprep.subr.mxu0 0.0
      %1021 = vmatpush1.msra.mxu0 0.0
      %1022 = vmatprep.subr.mxu0 0.0
      %1023 = vmatpush1.msra.mxu0 0.0
      %1024 = vmatprep.subr.mxu0 0.0
      %1025 = vmatpush1.msra.mxu0 0.0
      %1026 = vmatprep.subr.mxu0 0.0
      %1027 = vmatpush1.msra.mxu0 0.0
      %1028 = vmatprep.subr.mxu0 0.0
      %1029 = vmatpush1.msra.mxu0 0.0
      %1030 = vmatprep.mubr.f32.mxu0 0.0
      %1031 = vmatmul.mubr.f32.gmra.mrb[0].mxu0 %v964
      %v1032 = vpop.f32.mrb[0].mxu0
      %v1033 = vadd.f32 %v960, %v1032
      %v1034 = vpop.f32.mrb[0].mxu0
      %v1035 = vadd.f32 %v962, %v1034
      %1036 = vdwg.mxu0
      %vm1037 = vcmp.ge.s32.totalorder %v370, 1
      %vm1038 = vcmp.ge.s32.totalorder %v377, 1
      %vm1039 = vcmp.ge.s32.totalorder %v449, 1
      %vm1040 = vmand %vm1037, %vm1039
      %vm1041 = vmand %vm1038, %vm1039
      %v1042 = vsel %vm1040, 1, 0
      %v1043 = vsel %vm1041, 1, 0
      %v1044 = vlaneseq
      %v1045 = vshrl.u32 %v1044, 7
      %v1046 = vsub.s32 0, %v1045
      %v1047 = vrot.slane %v1042, %v1046
      %v1048 = vlaneseq
      %v1049 = vshrl.u32 %v1048, 7
      %v1050 = vsub.s32 0, %v1049
      %v1051 = vrot.slane %v1043, %v1050
      %vm1052 = vcmp.eq.s32.totalorder %v1047, 1
      %vm1053 = vcmp.eq.s32.totalorder %v1051, 1
      %v1054 = vsel %vm1052, %v1033, 0.0
      %v1055 = vsel %vm1053, %v1035, 0.0
      %v1056 = vadd.f32 %v1054, 0.0
      %v1057 = vadd.f32 %v1055, 0.0
      %1058 = vrot.lane.b32.xlu0 %v791, 16
      %v1059 = vpop.permute.xlu0 %1058
      %1060 = vrot.lane.b32.xlu0 %v793, 16
      %v1061 = vpop.permute.xlu0 %1060
      %vm1062 = vcmp.lt.s32.totalorder %v379, 16
      %v1063 = vsel %vm1062, %v1059, %v1061
      %v1064 = vsel %vm1062, %v1061, %v1059
      %1065 = vrot.lane.b32.xlu0 %v871, 16
      %v1066 = vpop.permute.xlu0 %1065
      %1067 = vrot.lane.b32.xlu0 %v873, 16
      %v1068 = vpop.permute.xlu0 %1067
      %v1069 = vsel %vm1062, %v1066, %v1068
      %v1070 = vsel %vm1062, %v1068, %v1066
      %v1071 = vrot.slane %v225, 2
      %1072 = vrot.lane.b32.xlu0 %v1071, 120
      %v1073 = vpop.permute.xlu0 %1072
      %v1074 = vsel %vm540, %v1073, 0
      %1076 = vmatprep.subr.mxu0 %v1069
      %1077 = vmatpush1.msra.mxu0 %v1070
      %1078 = vmatprep.subr.mxu0 0.0
      %1079 = vmatpush1.msra.mxu0 0.0
      %1080 = vmatprep.subr.mxu0 0.0
      %1081 = vmatpush1.msra.mxu0 0.0
      %1082 = vmatprep.subr.mxu0 0.0
      %1083 = vmatpush1.msra.mxu0 0.0
      %1084 = vmatprep.subr.mxu0 0.0
      %1085 = vmatpush1.msra.mxu0 0.0
      %1086 = vmatprep.subr.mxu0 0.0
      %1087 = vmatpush1.msra.mxu0 0.0
      %1088 = vmatprep.subr.mxu0 0.0
      %1089 = vmatpush1.msra.mxu0 0.0
      %1090 = vmatprep.subr.mxu0 0.0
      %1091 = vmatpush1.msra.mxu0 0.0
      %1092 = vmatprep.subr.mxu0 0.0
      %1093 = vmatpush1.msra.mxu0 0.0
      %1094 = vmatprep.subr.mxu0 0.0
      %1095 = vmatpush1.msra.mxu0 0.0
      %1096 = vmatprep.subr.mxu0 0.0
      %1097 = vmatpush1.msra.mxu0 0.0
      %1098 = vmatprep.subr.mxu0 0.0
      %1099 = vmatpush1.msra.mxu0 0.0
      %1100 = vmatprep.subr.mxu0 0.0
      %1101 = vmatpush1.msra.mxu0 0.0
      %1102 = vmatprep.subr.mxu0 0.0
      %1103 = vmatpush1.msra.mxu0 0.0
      %1104 = vmatprep.subr.mxu0 0.0
      %1105 = vmatpush1.msra.mxu0 0.0
      %1106 = vmatprep.subr.mxu0 0.0
      %1107 = vmatpush1.msra.mxu0 0.0
      %1108 = vmatprep.subr.mxu0 0.0
      %1109 = vmatpush1.msra.mxu0 0.0
      %1110 = vmatprep.subr.mxu0 0.0
      %1111 = vmatpush1.msra.mxu0 0.0
      %1112 = vmatprep.subr.mxu0 0.0
      %1113 = vmatpush1.msra.mxu0 0.0
      %1114 = vmatprep.subr.mxu0 0.0
      %1115 = vmatpush1.msra.mxu0 0.0
      %1116 = vmatprep.subr.mxu0 0.0
      %1117 = vmatpush1.msra.mxu0 0.0
      %1118 = vmatprep.subr.mxu0 0.0
      %1119 = vmatpush1.msra.mxu0 0.0
      %1120 = vmatprep.subr.mxu0 0.0
      %1121 = vmatpush1.msra.mxu0 0.0
      %1122 = vmatprep.subr.mxu0 0.0
      %1123 = vmatpush1.msra.mxu0 0.0
      %1124 = vmatprep.subr.mxu0 0.0
      %1125 = vmatpush1.msra.mxu0 0.0
      %1126 = vmatprep.subr.mxu0 0.0
      %1127 = vmatpush1.msra.mxu0 0.0
      %1128 = vmatprep.subr.mxu0 0.0
      %1129 = vmatpush1.msra.mxu0 0.0
      %1130 = vmatprep.subr.mxu0 0.0
      %1131 = vmatpush1.msra.mxu0 0.0
      %1132 = vmatprep.subr.mxu0 0.0
      %1133 = vmatpush1.msra.mxu0 0.0
      %1134 = vmatprep.subr.mxu0 0.0
      %1135 = vmatpush1.msra.mxu0 0.0
      %1136 = vmatprep.subr.mxu0 0.0
      %1137 = vmatpush1.msra.mxu0 0.0
      %1138 = vmatprep.subr.mxu0 0.0
      %1139 = vmatpush1.msra.mxu0 0.0
      %1140 = vmatprep.mubr.f32.mxu0 0.0
      %1141 = vmatmul.mubr.f32.gmra.mrb[0].mxu0 %v1074
      %v1142 = vpop.f32.mrb[0].mxu0
      %v1143 = vadd.f32 0.0, %v1142
      %v1144 = vpop.f32.mrb[0].mxu0
      %v1145 = vadd.f32 0.0, %v1144
      %1146 = vdwg.mxu0
      %v1147 = vsel %vm540, %v1071, 0
      %1149 = vmatprep.subr.mxu0 %v1063
      %1150 = vmatpush1.msra.mxu0 %v1064
      %1151 = vmatprep.subr.mxu0 0.0
      %1152 = vmatpush1.msra.mxu0 0.0
      %1153 = vmatprep.subr.mxu0 0.0
      %1154 = vmatpush1.msra.mxu0 0.0
      %1155 = vmatprep.subr.mxu0 0.0
      %1156 = vmatpush1.msra.mxu0 0.0
      %1157 = vmatprep.subr.mxu0 0.0
      %1158 = vmatpush1.msra.mxu0 0.0
      %1159 = vmatprep.subr.mxu0 0.0
      %1160 = vmatpush1.msra.mxu0 0.0
      %1161 = vmatprep.subr.mxu0 0.0
      %1162 = vmatpush1.msra.mxu0 0.0
      %1163 = vmatprep.subr.mxu0 0.0
      %1164 = vmatpush1.msra.mxu0 0.0
      %1165 = vmatprep.subr.mxu0 0.0
      %1166 = vmatpush1.msra.mxu0 0.0
      %1167 = vmatprep.subr.mxu0 0.0
      %1168 = vmatpush1.msra.mxu0 0.0
      %1169 = vmatprep.subr.mxu0 0.0
      %1170 = vmatpush1.msra.mxu0 0.0
      %1171 = vmatprep.subr.mxu0 0.0
      %1172 = vmatpush1.msra.mxu0 0.0
      %1173 = vmatprep.subr.mxu0 0.0
      %1174 = vmatpush1.msra.mxu0 0.0
      %1175 = vmatprep.subr.mxu0 0.0
      %1176 = vmatpush1.msra.mxu0 0.0
      %1177 = vmatprep.subr.mxu0 0.0
      %1178 = vmatpush1.msra.mxu0 0.0
      %1179 = vmatprep.subr.mxu0 0.0
      %1180 = vmatpush1.msra.mxu0 0.0
      %1181 = vmatprep.subr.mxu0 0.0
      %1182 = vmatpush1.msra.mxu0 0.0
      %1183 = vmatprep.subr.mxu0 0.0
      %1184 = vmatpush1.msra.mxu0 0.0
      %1185 = vmatprep.subr.mxu0 0.0
      %1186 = vmatpush1.msra.mxu0 0.0
      %1187 = vmatprep.subr.mxu0 0.0
      %1188 = vmatpush1.msra.mxu0 0.0
      %1189 = vmatprep.subr.mxu0 0.0
      %1190 = vmatpush1.msra.mxu0 0.0
      %1191 = vmatprep.subr.mxu0 0.0
      %1192 = vmatpush1.msra.mxu0 0.0
      %1193 = vmatprep.subr.mxu0 0.0
      %1194 = vmatpush1.msra.mxu0 0.0
      %1195 = vmatprep.subr.mxu0 0.0
      %1196 = vmatpush1.msra.mxu0 0.0
      %1197 = vmatprep.subr.mxu0 0.0
      %1198 = vmatpush1.msra.mxu0 0.0
      %1199 = vmatprep.subr.mxu0 0.0
      %1200 = vmatpush1.msra.mxu0 0.0
      %1201 = vmatprep.subr.mxu0 0.0
      %1202 = vmatpush1.msra.mxu0 0.0
      %1203 = vmatprep.subr.mxu0 0.0
      %1204 = vmatpush1.msra.mxu0 0.0
      %1205 = vmatprep.subr.mxu0 0.0
      %1206 = vmatpush1.msra.mxu0 0.0
      %1207 = vmatprep.subr.mxu0 0.0
      %1208 = vmatpush1.msra.mxu0 0.0
      %1209 = vmatprep.subr.mxu0 0.0
      %1210 = vmatpush1.msra.mxu0 0.0
      %1211 = vmatprep.subr.mxu0 0.0
      %1212 = vmatpush1.msra.mxu0 0.0
      %1213 = vmatprep.mubr.f32.mxu0 0.0
      %1214 = vmatmul.mubr.f32.gmra.mrb[0].mxu0 %v1147
      %v1215 = vpop.f32.mrb[0].mxu0
      %v1216 = vadd.f32 %v1143, %v1215
      %v1217 = vpop.f32.mrb[0].mxu0
      %v1218 = vadd.f32 %v1145, %v1217
      %1219 = vdwg.mxu0
      %v1220 = vsel %vm1037, 1, 0
      %v1221 = vsel %vm1038, 1, 0
      %v1222 = vlaneseq
      %v1223 = vshrl.u32 %v1222, 7
      %v1224 = vsub.s32 0, %v1223
      %v1225 = vrot.slane %v1220, %v1224
      %v1226 = vlaneseq
      %v1227 = vshrl.u32 %v1226, 7
      %v1228 = vsub.s32 0, %v1227
      %v1229 = vrot.slane %v1221, %v1228
      %vm1230 = vcmp.eq.s32.totalorder %v1225, 1
      %vm1231 = vcmp.eq.s32.totalorder %v1229, 1
      %v1232 = vsel %vm1230, %v1216, 0.0
      %v1233 = vsel %vm1231, %v1218, 0.0
      %v1234 = vadd.f32 %v1056, %v1232
      %v1235 = vadd.f32 %v1057, %v1233
      %1236 = vrot.lane.b32.xlu0 %v791, 15
      %v1237 = vpop.permute.xlu0 %1236
      %1238 = vrot.lane.b32.xlu0 %v793, 15
      %v1239 = vpop.permute.xlu0 %1238
      %vm1240 = vcmp.lt.s32.totalorder %v379, 15
      %v1241 = vsel %vm1240, %v1237, %v1239
      %v1242 = vsel %vm1240, %v1239, %v1237
      %1243 = vrot.lane.b32.xlu0 %v871, 15
      %v1244 = vpop.permute.xlu0 %1243
      %1245 = vrot.lane.b32.xlu0 %v873, 15
      %v1246 = vpop.permute.xlu0 %1245
      %v1247 = vsel %vm1240, %v1244, %v1246
      %v1248 = vsel %vm1240, %v1246, %v1244
      %v1249 = vrot.slane %v225, 4
      %1250 = vrot.lane.b32.xlu0 %v1249, 120
      %v1251 = vpop.permute.xlu0 %1250
      %v1252 = vsel %vm540, %v1251, 0
      %1254 = vmatprep.subr.mxu0 %v1247
      %1255 = vmatpush1.msra.mxu0 %v1248
      %1256 = vmatprep.subr.mxu0 0.0
      %1257 = vmatpush1.msra.mxu0 0.0
      %1258 = vmatprep.subr.mxu0 0.0
      %1259 = vmatpush1.msra.mxu0 0.0
      %1260 = vmatprep.subr.mxu0 0.0
      %1261 = vmatpush1.msra.mxu0 0.0
      %1262 = vmatprep.subr.mxu0 0.0
      %1263 = vmatpush1.msra.mxu0 0.0
      %1264 = vmatprep.subr.mxu0 0.0
      %1265 = vmatpush1.msra.mxu0 0.0
      %1266 = vmatprep.subr.mxu0 0.0
      %1267 = vmatpush1.msra.mxu0 0.0
      %1268 = vmatprep.subr.mxu0 0.0
      %1269 = vmatpush1.msra.mxu0 0.0
      %1270 = vmatprep.subr.mxu0 0.0
      %1271 = vmatpush1.msra.mxu0 0.0
      %1272 = vmatprep.subr.mxu0 0.0
      %1273 = vmatpush1.msra.mxu0 0.0
      %1274 = vmatprep.subr.mxu0 0.0
      %1275 = vmatpush1.msra.mxu0 0.0
      %1276 = vmatprep.subr.mxu0 0.0
      %1277 = vmatpush1.msra.mxu0 0.0
      %1278 = vmatprep.subr.mxu0 0.0
      %1279 = vmatpush1.msra.mxu0 0.0
      %1280 = vmatprep.subr.mxu0 0.0
      %1281 = vmatpush1.msra.mxu0 0.0
      %1282 = vmatprep.subr.mxu0 0.0
      %1283 = vmatpush1.msra.mxu0 0.0
      %1284 = vmatprep.subr.mxu0 0.0
      %1285 = vmatpush1.msra.mxu0 0.0
      %1286 = vmatprep.subr.mxu0 0.0
      %1287 = vmatpush1.msra.mxu0 0.0
      %1288 = vmatprep.subr.mxu0 0.0
      %1289 = vmatpush1.msra.mxu0 0.0
      %1290 = vmatprep.subr.mxu0 0.0
      %1291 = vmatpush1.msra.mxu0 0.0
      %1292 = vmatprep.subr.mxu0 0.0
      %1293 = vmatpush1.msra.mxu0 0.0
      %1294 = vmatprep.subr.mxu0 0.0
      %1295 = vmatpush1.msra.mxu0 0.0
      %1296 = vmatprep.subr.mxu0 0.0
      %1297 = vmatpush1.msra.mxu0 0.0
      %1298 = vmatprep.subr.mxu0 0.0
      %1299 = vmatpush1.msra.mxu0 0.0
      %1300 = vmatprep.subr.mxu0 0.0
      %1301 = vmatpush1.msra.mxu0 0.0
      %1302 = vmatprep.subr.mxu0 0.0
      %1303 = vmatpush1.msra.mxu0 0.0
      %1304 = vmatprep.subr.mxu0 0.0
      %1305 = vmatpush1.msra.mxu0 0.0
      %1306 = vmatprep.subr.mxu0 0.0
      %1307 = vmatpush1.msra.mxu0 0.0
      %1308 = vmatprep.subr.mxu0 0.0
      %1309 = vmatpush1.msra.mxu0 0.0
      %1310 = vmatprep.subr.mxu0 0.0
      %1311 = vmatpush1.msra.mxu0 0.0
      %1312 = vmatprep.subr.mxu0 0.0
      %1313 = vmatpush1.msra.mxu0 0.0
      %1314 = vmatprep.subr.mxu0 0.0
      %1315 = vmatpush1.msra.mxu0 0.0
      %1316 = vmatprep.subr.mxu0 0.0
      %1317 = vmatpush1.msra.mxu0 0.0
      %1318 = vmatprep.mubr.f32.mxu0 0.0
      %1319 = vmatmul.mubr.f32.gmra.mrb[0].mxu0 %v1252
      %v1320 = vpop.f32.mrb[0].mxu0
      %v1321 = vadd.f32 0.0, %v1320
      %v1322 = vpop.f32.mrb[0].mxu0
      %v1323 = vadd.f32 0.0, %v1322
      %1324 = vdwg.mxu0
      %v1325 = vsel %vm540, %v1249, 0
      %1327 = vmatprep.subr.mxu0 %v1241
      %1328 = vmatpush1.msra.mxu0 %v1242
      %1329 = vmatprep.subr.mxu0 0.0
      %1330 = vmatpush1.msra.mxu0 0.0
      %1331 = vmatprep.subr.mxu0 0.0
      %1332 = vmatpush1.msra.mxu0 0.0
      %1333 = vmatprep.subr.mxu0 0.0
      %1334 = vmatpush1.msra.mxu0 0.0
      %1335 = vmatprep.subr.mxu0 0.0
      %1336 = vmatpush1.msra.mxu0 0.0
      %1337 = vmatprep.subr.mxu0 0.0
      %1338 = vmatpush1.msra.mxu0 0.0
      %1339 = vmatprep.subr.mxu0 0.0
      %1340 = vmatpush1.msra.mxu0 0.0
      %1341 = vmatprep.subr.mxu0 0.0
      %1342 = vmatpush1.msra.mxu0 0.0
      %1343 = vmatprep.subr.mxu0 0.0
      %1344 = vmatpush1.msra.mxu0 0.0
      %1345 = vmatprep.subr.mxu0 0.0
      %1346 = vmatpush1.msra.mxu0 0.0
      %1347 = vmatprep.subr.mxu0 0.0
      %1348 = vmatpush1.msra.mxu0 0.0
      %1349 = vmatprep.subr.mxu0 0.0
      %1350 = vmatpush1.msra.mxu0 0.0
      %1351 = vmatprep.subr.mxu0 0.0
      %1352 = vmatpush1.msra.mxu0 0.0
      %1353 = vmatprep.subr.mxu0 0.0
      %1354 = vmatpush1.msra.mxu0 0.0
      %1355 = vmatprep.subr.mxu0 0.0
      %1356 = vmatpush1.msra.mxu0 0.0
      %1357 = vmatprep.subr.mxu0 0.0
      %1358 = vmatpush1.msra.mxu0 0.0
      %1359 = vmatprep.subr.mxu0 0.0
      %1360 = vmatpush1.msra.mxu0 0.0
      %1361 = vmatprep.subr.mxu0 0.0
      %1362 = vmatpush1.msra.mxu0 0.0
      %1363 = vmatprep.subr.mxu0 0.0
      %1364 = vmatpush1.msra.mxu0 0.0
      %1365 = vmatprep.subr.mxu0 0.0
      %1366 = vmatpush1.msra.mxu0 0.0
      %1367 = vmatprep.subr.mxu0 0.0
      %1368 = vmatpush1.msra.mxu0 0.0
      %1369 = vmatprep.subr.mxu0 0.0
      %1370 = vmatpush1.msra.mxu0 0.0
      %1371 = vmatprep.subr.mxu0 0.0
      %1372 = vmatpush1.msra.mxu0 0.0
      %1373 = vmatprep.subr.mxu0 0.0
      %1374 = vmatpush1.msra.mxu0 0.0
      %1375 = vmatprep.subr.mxu0 0.0
      %1376 = vmatpush1.msra.mxu0 0.0
      %1377 = vmatprep.subr.mxu0 0.0
      %1378 = vmatpush1.msra.mxu0 0.0
      %1379 = vmatprep.subr.mxu0 0.0
      %1380 = vmatpush1.msra.mxu0 0.0
      %1381 = vmatprep.subr.mxu0 0.0
      %1382 = vmatpush1.msra.mxu0 0.0
      %1383 = vmatprep.subr.mxu0 0.0
      %1384 = vmatpush1.msra.mxu0 0.0
      %1385 = vmatprep.subr.mxu0 0.0
      %1386 = vmatpush1.msra.mxu0 0.0
      %1387 = vmatprep.subr.mxu0 0.0
      %1388 = vmatpush1.msra.mxu0 0.0
      %1389 = vmatprep.subr.mxu0 0.0
      %1390 = vmatpush1.msra.mxu0 0.0
      %1391 = vmatprep.mubr.f32.mxu0 0.0
      %1392 = vmatmul.mubr.f32.gmra.mrb[0].mxu0 %v1325
      %v1393 = vpop.f32.mrb[0].mxu0
      %v1394 = vadd.f32 %v1321, %v1393
      %v1395 = vpop.f32.mrb[0].mxu0
      %v1396 = vadd.f32 %v1323, %v1395
      %1397 = vdwg.mxu0
      %vm1398 = vcmp.le.s32.totalorder %v449, 14
      %vm1399 = vmand %vm1037, %vm1398
      %vm1400 = vmand %vm1038, %vm1398
      %v1401 = vsel %vm1399, 1, 0
      %v1402 = vsel %vm1400, 1, 0
      %v1403 = vlaneseq
      %v1404 = vshrl.u32 %v1403, 7
      %v1405 = vsub.s32 0, %v1404
      %v1406 = vrot.slane %v1401, %v1405
      %v1407 = vlaneseq
      %v1408 = vshrl.u32 %v1407, 7
      %v1409 = vsub.s32 0, %v1408
      %v1410 = vrot.slane %v1402, %v1409
      %vm1411 = vcmp.eq.s32.totalorder %v1406, 1
      %vm1412 = vcmp.eq.s32.totalorder %v1410, 1
      %v1413 = vsel %vm1411, %v1394, 0.0
      %v1414 = vsel %vm1412, %v1396, 0.0
      %v1415 = vadd.f32 %v1234, %v1413
      %v1416 = vadd.f32 %v1235, %v1414
      %1417 = vrot.lane.b32.xlu0 %v791, 1
      %v1418 = vpop.permute.xlu0 %1417
      %1419 = vrot.lane.b32.xlu0 %v793, 1
      %v1420 = vpop.permute.xlu0 %1419
      %vm1421 = vcmp.lt.s32.totalorder %v379, 1
      %v1422 = vsel %vm1421, %v1418, %v1420
      %v1423 = vsel %vm1421, %v1420, %v1418
      %1424 = vrot.lane.b32.xlu0 %v871, 1
      %v1425 = vpop.permute.xlu0 %1424
      %1426 = vrot.lane.b32.xlu0 %v873, 1
      %v1427 = vpop.permute.xlu0 %1426
      %v1428 = vsel %vm1421, %v1425, %v1427
      %v1429 = vsel %vm1421, %v1427, %v1425
      %v1430 = vrot.slane %v225, 6
      %1431 = vrot.lane.b32.xlu0 %v1430, 120
      %v1432 = vpop.permute.xlu0 %1431
      %v1433 = vsel %vm540, %v1432, 0
      %1435 = vmatprep.subr.mxu0 %v1428
      %1436 = vmatpush1.msra.mxu0 %v1429
      %1437 = vmatprep.subr.mxu0 0.0
      %1438 = vmatpush1.msra.mxu0 0.0
      %1439 = vmatprep.subr.mxu0 0.0
      %1440 = vmatpush1.msra.mxu0 0.0
      %1441 = vmatprep.subr.mxu0 0.0
      %1442 = vmatpush1.msra.mxu0 0.0
      %1443 = vmatprep.subr.mxu0 0.0
      %1444 = vmatpush1.msra.mxu0 0.0
      %1445 = vmatprep.subr.mxu0 0.0
      %1446 = vmatpush1.msra.mxu0 0.0
      %1447 = vmatprep.subr.mxu0 0.0
      %1448 = vmatpush1.msra.mxu0 0.0
      %1449 = vmatprep.subr.mxu0 0.0
      %1450 = vmatpush1.msra.mxu0 0.0
      %1451 = vmatprep.subr.mxu0 0.0
      %1452 = vmatpush1.msra.mxu0 0.0
      %1453 = vmatprep.subr.mxu0 0.0
      %1454 = vmatpush1.msra.mxu0 0.0
      %1455 = vmatprep.subr.mxu0 0.0
      %1456 = vmatpush1.msra.mxu0 0.0
      %1457 = vmatprep.subr.mxu0 0.0
      %1458 = vmatpush1.msra.mxu0 0.0
      %1459 = vmatprep.subr.mxu0 0.0
      %1460 = vmatpush1.msra.mxu0 0.0
      %1461 = vmatprep.subr.mxu0 0.0
      %1462 = vmatpush1.msra.mxu0 0.0
      %1463 = vmatprep.subr.mxu0 0.0
      %1464 = vmatpush1.msra.mxu0 0.0
      %1465 = vmatprep.subr.mxu0 0.0
      %1466 = vmatpush1.msra.mxu0 0.0
      %1467 = vmatprep.subr.mxu0 0.0
      %1468 = vmatpush1.msra.mxu0 0.0
      %1469 = vmatprep.subr.mxu0 0.0
      %1470 = vmatpush1.msra.mxu0 0.0
      %1471 = vmatprep.subr.mxu0 0.0
      %1472 = vmatpush1.msra.mxu0 0.0
      %1473 = vmatprep.subr.mxu0 0.0
      %1474 = vmatpush1.msra.mxu0 0.0
      %1475 = vmatprep.subr.mxu0 0.0
      %1476 = vmatpush1.msra.mxu0 0.0
      %1477 = vmatprep.subr.mxu0 0.0
      %1478 = vmatpush1.msra.mxu0 0.0
      %1479 = vmatprep.subr.mxu0 0.0
      %1480 = vmatpush1.msra.mxu0 0.0
      %1481 = vmatprep.subr.mxu0 0.0
      %1482 = vmatpush1.msra.mxu0 0.0
      %1483 = vmatprep.subr.mxu0 0.0
      %1484 = vmatpush1.msra.mxu0 0.0
      %1485 = vmatprep.subr.mxu0 0.0
      %1486 = vmatpush1.msra.mxu0 0.0
      %1487 = vmatprep.subr.mxu0 0.0
      %1488 = vmatpush1.msra.mxu0 0.0
      %1489 = vmatprep.subr.mxu0 0.0
      %1490 = vmatpush1.msra.mxu0 0.0
      %1491 = vmatprep.subr.mxu0 0.0
      %1492 = vmatpush1.msra.mxu0 0.0
      %1493 = vmatprep.subr.mxu0 0.0
      %1494 = vmatpush1.msra.mxu0 0.0
      %1495 = vmatprep.subr.mxu0 0.0
      %1496 = vmatpush1.msra.mxu0 0.0
      %1497 = vmatprep.subr.mxu0 0.0
      %1498 = vmatpush1.msra.mxu0 0.0
      %1499 = vmatprep.mubr.f32.mxu0 0.0
      %1500 = vmatmul.mubr.f32.gmra.mrb[0].mxu0 %v1433
      %v1501 = vpop.f32.mrb[0].mxu0
      %v1502 = vadd.f32 0.0, %v1501
      %v1503 = vpop.f32.mrb[0].mxu0
      %v1504 = vadd.f32 0.0, %v1503
      %1505 = vdwg.mxu0
      %v1506 = vsel %vm540, %v1430, 0
      %1508 = vmatprep.subr.mxu0 %v1422
      %1509 = vmatpush1.msra.mxu0 %v1423
      %1510 = vmatprep.subr.mxu0 0.0
      %1511 = vmatpush1.msra.mxu0 0.0
      %1512 = vmatprep.subr.mxu0 0.0
      %1513 = vmatpush1.msra.mxu0 0.0
      %1514 = vmatprep.subr.mxu0 0.0
      %1515 = vmatpush1.msra.mxu0 0.0
      %1516 = vmatprep.subr.mxu0 0.0
      %1517 = vmatpush1.msra.mxu0 0.0
      %1518 = vmatprep.subr.mxu0 0.0
      %1519 = vmatpush1.msra.mxu0 0.0
      %1520 = vmatprep.subr.mxu0 0.0
      %1521 = vmatpush1.msra.mxu0 0.0
      %1522 = vmatprep.subr.mxu0 0.0
      %1523 = vmatpush1.msra.mxu0 0.0
      %1524 = vmatprep.subr.mxu0 0.0
      %1525 = vmatpush1.msra.mxu0 0.0
      %1526 = vmatprep.subr.mxu0 0.0
      %1527 = vmatpush1.msra.mxu0 0.0
      %1528 = vmatprep.subr.mxu0 0.0
      %1529 = vmatpush1.msra.mxu0 0.0
      %1530 = vmatprep.subr.mxu0 0.0
      %1531 = vmatpush1.msra.mxu0 0.0
      %1532 = vmatprep.subr.mxu0 0.0
      %1533 = vmatpush1.msra.mxu0 0.0
      %1534 = vmatprep.subr.mxu0 0.0
      %1535 = vmatpush1.msra.mxu0 0.0
      %1536 = vmatprep.subr.mxu0 0.0
      %1537 = vmatpush1.msra.mxu0 0.0
      %1538 = vmatprep.subr.mxu0 0.0
      %1539 = vmatpush1.msra.mxu0 0.0
      %1540 = vmatprep.subr.mxu0 0.0
      %1541 = vmatpush1.msra.mxu0 0.0
      %1542 = vmatprep.subr.mxu0 0.0
      %1543 = vmatpush1.msra.mxu0 0.0
      %1544 = vmatprep.subr.mxu0 0.0
      %1545 = vmatpush1.msra.mxu0 0.0
      %1546 = vmatprep.subr.mxu0 0.0
      %1547 = vmatpush1.msra.mxu0 0.0
      %1548 = vmatprep.subr.mxu0 0.0
      %1549 = vmatpush1.msra.mxu0 0.0
      %1550 = vmatprep.subr.mxu0 0.0
      %1551 = vmatpush1.msra.mxu0 0.0
      %1552 = vmatprep.subr.mxu0 0.0
      %1553 = vmatpush1.msra.mxu0 0.0
      %1554 = vmatprep.subr.mxu0 0.0
      %1555 = vmatpush1.msra.mxu0 0.0
      %1556 = vmatprep.subr.mxu0 0.0
      %1557 = vmatpush1.msra.mxu0 0.0
      %1558 = vmatprep.subr.mxu0 0.0
      %1559 = vmatpush1.msra.mxu0 0.0
      %1560 = vmatprep.subr.mxu0 0.0
      %1561 = vmatpush1.msra.mxu0 0.0
      %1562 = vmatprep.subr.mxu0 0.0
      %1563 = vmatpush1.msra.mxu0 0.0
      %1564 = vmatprep.subr.mxu0 0.0
      %1565 = vmatpush1.msra.mxu0 0.0
      %1566 = vmatprep.subr.mxu0 0.0
      %1567 = vmatpush1.msra.mxu0 0.0
      %1568 = vmatprep.subr.mxu0 0.0
      %1569 = vmatpush1.msra.mxu0 0.0
      %1570 = vmatprep.subr.mxu0 0.0
      %1571 = vmatpush1.msra.mxu0 0.0
      %1572 = vmatprep.mubr.f32.mxu0 0.0
      %1573 = vmatmul.mubr.f32.gmra.mrb[0].mxu0 %v1506
      %v1574 = vpop.f32.mrb[0].mxu0
      %v1575 = vadd.f32 %v1502, %v1574
      %v1576 = vpop.f32.mrb[0].mxu0
      %v1577 = vadd.f32 %v1504, %v1576
      %1578 = vdwg.mxu0
      %v1579 = vsel %vm1039, 1, 0
      %v1580 = vlaneseq
      %v1581 = vshrl.u32 %v1580, 7
      %v1582 = vsub.s32 0, %v1581
      %v1583 = vrot.slane %v1579, %v1582
      %vm1584 = vcmp.eq.s32.totalorder %v1583, 1
      %v1585 = vsel %vm1584, %v1575, 0.0
      %v1586 = vsel %vm1584, %v1577, 0.0
      %v1587 = vadd.f32 %v1415, %v1585
      %v1588 = vadd.f32 %v1416, %v1586
      %1590 = vrot.lane.b32.xlu0 %v226, 120
      %v1591 = vpop.permute.xlu0 %1590
      %v1592 = vsel %vm540, %v1591, 0
      %1594 = vmatprep.subr.mxu0 %v873
      %1595 = vmatpush1.msra.mxu0 %v871
      %1596 = vmatprep.subr.mxu0 0.0
      %1597 = vmatpush1.msra.mxu0 0.0
      %1598 = vmatprep.subr.mxu0 0.0
      %1599 = vmatpush1.msra.mxu0 0.0
      %1600 = vmatprep.subr.mxu0 0.0
      %1601 = vmatpush1.msra.mxu0 0.0
      %1602 = vmatprep.subr.mxu0 0.0
      %1603 = vmatpush1.msra.mxu0 0.0
      %1604 = vmatprep.subr.mxu0 0.0
      %1605 = vmatpush1.msra.mxu0 0.0
      %1606 = vmatprep.subr.mxu0 0.0
      %1607 = vmatpush1.msra.mxu0 0.0
      %1608 = vmatprep.subr.mxu0 0.0
      %1609 = vmatpush1.msra.mxu0 0.0
      %1610 = vmatprep.subr.mxu0 0.0
      %1611 = vmatpush1.msra.mxu0 0.0
      %1612 = vmatprep.subr.mxu0 0.0
      %1613 = vmatpush1.msra.mxu0 0.0
      %1614 = vmatprep.subr.mxu0 0.0
      %1615 = vmatpush1.msra.mxu0 0.0
      %1616 = vmatprep.subr.mxu0 0.0
      %1617 = vmatpush1.msra.mxu0 0.0
      %1618 = vmatprep.subr.mxu0 0.0
      %1619 = vmatpush1.msra.mxu0 0.0
      %1620 = vmatprep.subr.mxu0 0.0
      %1621 = vmatpush1.msra.mxu0 0.0
      %1622 = vmatprep.subr.mxu0 0.0
      %1623 = vmatpush1.msra.mxu0 0.0
      %1624 = vmatprep.subr.mxu0 0.0
      %1625 = vmatpush1.msra.mxu0 0.0
      %1626 = vmatprep.subr.mxu0 0.0
      %1627 = vmatpush1.msra.mxu0 0.0
      %1628 = vmatprep.subr.mxu0 0.0
      %1629 = vmatpush1.msra.mxu0 0.0
      %1630 = vmatprep.subr.mxu0 0.0
      %1631 = vmatpush1.msra.mxu0 0.0
      %1632 = vmatprep.subr.mxu0 0.0
      %1633 = vmatpush1.msra.mxu0 0.0
      %1634 = vmatprep.subr.mxu0 0.0
      %1635 = vmatpush1.msra.mxu0 0.0
      %1636 = vmatprep.subr.mxu0 0.0
      %1637 = vmatpush1.msra.mxu0 0.0
      %1638 = vmatprep.subr.mxu0 0.0
      %1639 = vmatpush1.msra.mxu0 0.0
      %1640 = vmatprep.subr.mxu0 0.0
      %1641 = vmatpush1.msra.mxu0 0.0
      %1642 = vmatprep.subr.mxu0 0.0
      %1643 = vmatpush1.msra.mxu0 0.0
      %1644 = vmatprep.subr.mxu0 0.0
      %1645 = vmatpush1.msra.mxu0 0.0
      %1646 = vmatprep.subr.mxu0 0.0
      %1647 = vmatpush1.msra.mxu0 0.0
      %1648 = vmatprep.subr.mxu0 0.0
      %1649 = vmatpush1.msra.mxu0 0.0
      %1650 = vmatprep.subr.mxu0 0.0
      %1651 = vmatpush1.msra.mxu0 0.0
      %1652 = vmatprep.subr.mxu0 0.0
      %1653 = vmatpush1.msra.mxu0 0.0
      %1654 = vmatprep.subr.mxu0 0.0
      %1655 = vmatpush1.msra.mxu0 0.0
      %1656 = vmatprep.subr.mxu0 0.0
      %1657 = vmatpush1.msra.mxu0 0.0
      %1658 = vmatprep.mubr.f32.mxu0 0.0
      %1659 = vmatmul.mubr.f32.gmra.mrb[0].mxu0 %v1592
      %v1660 = vpop.f32.mrb[0].mxu0
      %v1661 = vadd.f32 0.0, %v1660
      %v1662 = vpop.f32.mrb[0].mxu0
      %v1663 = vadd.f32 0.0, %v1662
      %1664 = vdwg.mxu0
      %v1665 = vsel %vm540, %v226, 0
      %1667 = vmatprep.subr.mxu0 %v793
      %1668 = vmatpush1.msra.mxu0 %v791
      %1669 = vmatprep.subr.mxu0 0.0
      %1670 = vmatpush1.msra.mxu0 0.0
      %1671 = vmatprep.subr.mxu0 0.0
      %1672 = vmatpush1.msra.mxu0 0.0
      %1673 = vmatprep.subr.mxu0 0.0
      %1674 = vmatpush1.msra.mxu0 0.0
      %1675 = vmatprep.subr.mxu0 0.0
      %1676 = vmatpush1.msra.mxu0 0.0
      %1677 = vmatprep.subr.mxu0 0.0
      %1678 = vmatpush1.msra.mxu0 0.0
      %1679 = vmatprep.subr.mxu0 0.0
      %1680 = vmatpush1.msra.mxu0 0.0
      %1681 = vmatprep.subr.mxu0 0.0
      %1682 = vmatpush1.msra.mxu0 0.0
      %1683 = vmatprep.subr.mxu0 0.0
      %1684 = vmatpush1.msra.mxu0 0.0
      %1685 = vmatprep.subr.mxu0 0.0
      %1686 = vmatpush1.msra.mxu0 0.0
      %1687 = vmatprep.subr.mxu0 0.0
      %1688 = vmatpush1.msra.mxu0 0.0
      %1689 = vmatprep.subr.mxu0 0.0
      %1690 = vmatpush1.msra.mxu0 0.0
      %1691 = vmatprep.subr.mxu0 0.0
      %1692 = vmatpush1.msra.mxu0 0.0
      %1693 = vmatprep.subr.mxu0 0.0
      %1694 = vmatpush1.msra.mxu0 0.0
      %1695 = vmatprep.subr.mxu0 0.0
      %1696 = vmatpush1.msra.mxu0 0.0
      %1697 = vmatprep.subr.mxu0 0.0
      %1698 = vmatpush1.msra.mxu0 0.0
      %1699 = vmatprep.subr.mxu0 0.0
      %1700 = vmatpush1.msra.mxu0 0.0
      %1701 = vmatprep.subr.mxu0 0.0
      %1702 = vmatpush1.msra.mxu0 0.0
      %1703 = vmatprep.subr.mxu0 0.0
      %1704 = vmatpush1.msra.mxu0 0.0
      %1705 = vmatprep.subr.mxu0 0.0
      %1706 = vmatpush1.msra.mxu0 0.0
      %1707 = vmatprep.subr.mxu0 0.0
      %1708 = vmatpush1.msra.mxu0 0.0
      %1709 = vmatprep.subr.mxu0 0.0
      %1710 = vmatpush1.msra.mxu0 0.0
      %1711 = vmatprep.subr.mxu0 0.0
      %1712 = vmatpush1.msra.mxu0 0.0
      %1713 = vmatprep.subr.mxu0 0.0
      %1714 = vmatpush1.msra.mxu0 0.0
      %1715 = vmatprep.subr.mxu0 0.0
      %1716 = vmatpush1.msra.mxu0 0.0
      %1717 = vmatprep.subr.mxu0 0.0
      %1718 = vmatpush1.msra.mxu0 0.0
      %1719 = vmatprep.subr.mxu0 0.0
      %1720 = vmatpush1.msra.mxu0 0.0
      %1721 = vmatprep.subr.mxu0 0.0
      %1722 = vmatpush1.msra.mxu0 0.0
      %1723 = vmatprep.subr.mxu0 0.0
      %1724 = vmatpush1.msra.mxu0 0.0
      %1725 = vmatprep.subr.mxu0 0.0
      %1726 = vmatpush1.msra.mxu0 0.0
      %1727 = vmatprep.subr.mxu0 0.0
      %1728 = vmatpush1.msra.mxu0 0.0
      %1729 = vmatprep.subr.mxu0 0.0
      %1730 = vmatpush1.msra.mxu0 0.0
      %1731 = vmatprep.mubr.f32.mxu0 0.0
      %1732 = vmatmul.mubr.f32.gmra.mrb[0].mxu0 %v1665
      %v1733 = vpop.f32.mrb[0].mxu0
      %v1734 = vadd.f32 %v1661, %v1733
      %v1735 = vpop.f32.mrb[0].mxu0
      %v1736 = vadd.f32 %v1663, %v1735
      %1737 = vdwg.mxu0
      %v1738 = vadd.f32 %v1587, %v1734
      %v1739 = vadd.f32 %v1588, %v1736
      %1740 = vrot.lane.b32.xlu0 %v791, 127
      %v1741 = vpop.permute.xlu0 %1740
      %1742 = vrot.lane.b32.xlu0 %v793, 127
      %v1743 = vpop.permute.xlu0 %1742
      %vm1744 = vcmp.lt.s32.totalorder %v379, 127
      %v1745 = vsel %vm1744, %v1741, %v1743
      %v1746 = vsel %vm1744, %v1743, %v1741
      %1747 = vrot.lane.b32.xlu0 %v871, 127
      %v1748 = vpop.permute.xlu0 %1747
      %1749 = vrot.lane.b32.xlu0 %v873, 127
      %v1750 = vpop.permute.xlu0 %1749
      %v1751 = vsel %vm1744, %v1748, %v1750
      %v1752 = vsel %vm1744, %v1750, %v1748
      %v1753 = vrot.slane %v226, 2
      %1754 = vrot.lane.b32.xlu0 %v1753, 120
      %v1755 = vpop.permute.xlu0 %1754
      %v1756 = vsel %vm540, %v1755, 0
      %1758 = vmatprep.subr.mxu0 %v1752
      %1759 = vmatpush1.msra.mxu0 %v1751
      %1760 = vmatprep.subr.mxu0 0.0
      %1761 = vmatpush1.msra.mxu0 0.0
      %1762 = vmatprep.subr.mxu0 0.0
      %1763 = vmatpush1.msra.mxu0 0.0
      %1764 = vmatprep.subr.mxu0 0.0
      %1765 = vmatpush1.msra.mxu0 0.0
      %1766 = vmatprep.subr.mxu0 0.0
      %1767 = vmatpush1.msra.mxu0 0.0
      %1768 = vmatprep.subr.mxu0 0.0
      %1769 = vmatpush1.msra.mxu0 0.0
      %1770 = vmatprep.subr.mxu0 0.0
      %1771 = vmatpush1.msra.mxu0 0.0
      %1772 = vmatprep.subr.mxu0 0.0
      %1773 = vmatpush1.msra.mxu0 0.0
      %1774 = vmatprep.subr.mxu0 0.0
      %1775 = vmatpush1.msra.mxu0 0.0
      %1776 = vmatprep.subr.mxu0 0.0
      %1777 = vmatpush1.msra.mxu0 0.0
      %1778 = vmatprep.subr.mxu0 0.0
      %1779 = vmatpush1.msra.mxu0 0.0
      %1780 = vmatprep.subr.mxu0 0.0
      %1781 = vmatpush1.msra.mxu0 0.0
      %1782 = vmatprep.subr.mxu0 0.0
      %1783 = vmatpush1.msra.mxu0 0.0
      %1784 = vmatprep.subr.mxu0 0.0
      %1785 = vmatpush1.msra.mxu0 0.0
      %1786 = vmatprep.subr.mxu0 0.0
      %1787 = vmatpush1.msra.mxu0 0.0
      %1788 = vmatprep.subr.mxu0 0.0
      %1789 = vmatpush1.msra.mxu0 0.0
      %1790 = vmatprep.subr.mxu0 0.0
      %1791 = vmatpush1.msra.mxu0 0.0
      %1792 = vmatprep.subr.mxu0 0.0
      %1793 = vmatpush1.msra.mxu0 0.0
      %1794 = vmatprep.subr.mxu0 0.0
      %1795 = vmatpush1.msra.mxu0 0.0
      %1796 = vmatprep.subr.mxu0 0.0
      %1797 = vmatpush1.msra.mxu0 0.0
      %1798 = vmatprep.subr.mxu0 0.0
      %1799 = vmatpush1.msra.mxu0 0.0
      %1800 = vmatprep.subr.mxu0 0.0
      %1801 = vmatpush1.msra.mxu0 0.0
      %1802 = vmatprep.subr.mxu0 0.0
      %1803 = vmatpush1.msra.mxu0 0.0
      %1804 = vmatprep.subr.mxu0 0.0
      %1805 = vmatpush1.msra.mxu0 0.0
      %1806 = vmatprep.subr.mxu0 0.0
      %1807 = vmatpush1.msra.mxu0 0.0
      %1808 = vmatprep.subr.mxu0 0.0
      %1809 = vmatpush1.msra.mxu0 0.0
      %1810 = vmatprep.subr.mxu0 0.0
      %1811 = vmatpush1.msra.mxu0 0.0
      %1812 = vmatprep.subr.mxu0 0.0
      %1813 = vmatpush1.msra.mxu0 0.0
      %1814 = vmatprep.subr.mxu0 0.0
      %1815 = vmatpush1.msra.mxu0 0.0
      %1816 = vmatprep.subr.mxu0 0.0
      %1817 = vmatpush1.msra.mxu0 0.0
      %1818 = vmatprep.subr.mxu0 0.0
      %1819 = vmatpush1.msra.mxu0 0.0
      %1820 = vmatprep.subr.mxu0 0.0
      %1821 = vmatpush1.msra.mxu0 0.0
      %1822 = vmatprep.mubr.f32.mxu0 0.0
      %1823 = vmatmul.mubr.f32.gmra.mrb[0].mxu0 %v1756
      %v1824 = vpop.f32.mrb[0].mxu0
      %v1825 = vadd.f32 0.0, %v1824
      %v1826 = vpop.f32.mrb[0].mxu0
      %v1827 = vadd.f32 0.0, %v1826
      %1828 = vdwg.mxu0
      %v1829 = vsel %vm540, %v1753, 0
      %1831 = vmatprep.subr.mxu0 %v1746
      %1832 = vmatpush1.msra.mxu0 %v1745
      %1833 = vmatprep.subr.mxu0 0.0
      %1834 = vmatpush1.msra.mxu0 0.0
      %1835 = vmatprep.subr.mxu0 0.0
      %1836 = vmatpush1.msra.mxu0 0.0
      %1837 = vmatprep.subr.mxu0 0.0
      %1838 = vmatpush1.msra.mxu0 0.0
      %1839 = vmatprep.subr.mxu0 0.0
      %1840 = vmatpush1.msra.mxu0 0.0
      %1841 = vmatprep.subr.mxu0 0.0
      %1842 = vmatpush1.msra.mxu0 0.0
      %1843 = vmatprep.subr.mxu0 0.0
      %1844 = vmatpush1.msra.mxu0 0.0
      %1845 = vmatprep.subr.mxu0 0.0
      %1846 = vmatpush1.msra.mxu0 0.0
      %1847 = vmatprep.subr.mxu0 0.0
      %1848 = vmatpush1.msra.mxu0 0.0
      %1849 = vmatprep.subr.mxu0 0.0
      %1850 = vmatpush1.msra.mxu0 0.0
      %1851 = vmatprep.subr.mxu0 0.0
      %1852 = vmatpush1.msra.mxu0 0.0
      %1853 = vmatprep.subr.mxu0 0.0
      %1854 = vmatpush1.msra.mxu0 0.0
      %1855 = vmatprep.subr.mxu0 0.0
      %1856 = vmatpush1.msra.mxu0 0.0
      %1857 = vmatprep.subr.mxu0 0.0
      %1858 = vmatpush1.msra.mxu0 0.0
      %1859 = vmatprep.subr.mxu0 0.0
      %1860 = vmatpush1.msra.mxu0 0.0
      %1861 = vmatprep.subr.mxu0 0.0
      %1862 = vmatpush1.msra.mxu0 0.0
      %1863 = vmatprep.subr.mxu0 0.0
      %1864 = vmatpush1.msra.mxu0 0.0
      %1865 = vmatprep.subr.mxu0 0.0
      %1866 = vmatpush1.msra.mxu0 0.0
      %1867 = vmatprep.subr.mxu0 0.0
      %1868 = vmatpush1.msra.mxu0 0.0
      %1869 = vmatprep.subr.mxu0 0.0
      %1870 = vmatpush1.msra.mxu0 0.0
      %1871 = vmatprep.subr.mxu0 0.0
      %1872 = vmatpush1.msra.mxu0 0.0
      %1873 = vmatprep.subr.mxu0 0.0
      %1874 = vmatpush1.msra.mxu0 0.0
      %1875 = vmatprep.subr.mxu0 0.0
      %1876 = vmatpush1.msra.mxu0 0.0
      %1877 = vmatprep.subr.mxu0 0.0
      %1878 = vmatpush1.msra.mxu0 0.0
      %1879 = vmatprep.subr.mxu0 0.0
      %1880 = vmatpush1.msra.mxu0 0.0
      %1881 = vmatprep.subr.mxu0 0.0
      %1882 = vmatpush1.msra.mxu0 0.0
      %1883 = vmatprep.subr.mxu0 0.0
      %1884 = vmatpush1.msra.mxu0 0.0
      %1885 = vmatprep.subr.mxu0 0.0
      %1886 = vmatpush1.msra.mxu0 0.0
      %1887 = vmatprep.subr.mxu0 0.0
      %1888 = vmatpush1.msra.mxu0 0.0
      %1889 = vmatprep.subr.mxu0 0.0
      %1890 = vmatpush1.msra.mxu0 0.0
      %1891 = vmatprep.subr.mxu0 0.0
      %1892 = vmatpush1.msra.mxu0 0.0
      %1893 = vmatprep.subr.mxu0 0.0
      %1894 = vmatpush1.msra.mxu0 0.0
      %1895 = vmatprep.mubr.f32.mxu0 0.0
      %1896 = vmatmul.mubr.f32.gmra.mrb[0].mxu0 %v1829
      %v1897 = vpop.f32.mrb[0].mxu0
      %v1898 = vadd.f32 %v1825, %v1897
      %v1899 = vpop.f32.mrb[0].mxu0
      %v1900 = vadd.f32 %v1827, %v1899
      %1901 = vdwg.mxu0
      %v1902 = vsel %vm1398, 1, 0
      %v1903 = vlaneseq
      %v1904 = vshrl.u32 %v1903, 7
      %v1905 = vsub.s32 0, %v1904
      %v1906 = vrot.slane %v1902, %v1905
      %vm1907 = vcmp.eq.s32.totalorder %v1906, 1
      %v1908 = vsel %vm1907, %v1898, 0.0
      %v1909 = vsel %vm1907, %v1900, 0.0
      %v1910 = vadd.f32 %v1738, %v1908
      %v1911 = vadd.f32 %v1739, %v1909
      %1912 = vrot.lane.b32.xlu0 %v791, 113
      %v1913 = vpop.permute.xlu0 %1912
      %1914 = vrot.lane.b32.xlu0 %v793, 113
      %v1915 = vpop.permute.xlu0 %1914
      %vm1916 = vcmp.lt.s32.totalorder %v379, 113
      %v1917 = vsel %vm1916, %v1913, %v1915
      %v1918 = vsel %vm1916, %v1915, %v1913
      %1919 = vrot.lane.b32.xlu0 %v871, 113
      %v1920 = vpop.permute.xlu0 %1919
      %1921 = vrot.lane.b32.xlu0 %v873, 113
      %v1922 = vpop.permute.xlu0 %1921
      %v1923 = vsel %vm1916, %v1920, %v1922
      %v1924 = vsel %vm1916, %v1922, %v1920
      %v1925 = vrot.slane %v226, 4
      %1926 = vrot.lane.b32.xlu0 %v1925, 120
      %v1927 = vpop.permute.xlu0 %1926
      %v1928 = vsel %vm540, %v1927, 0
      %1930 = vmatprep.subr.mxu0 %v1924
      %1931 = vmatpush1.msra.mxu0 %v1923
      %1932 = vmatprep.subr.mxu0 0.0
      %1933 = vmatpush1.msra.mxu0 0.0
      %1934 = vmatprep.subr.mxu0 0.0
      %1935 = vmatpush1.msra.mxu0 0.0
      %1936 = vmatprep.subr.mxu0 0.0
      %1937 = vmatpush1.msra.mxu0 0.0
      %1938 = vmatprep.subr.mxu0 0.0
      %1939 = vmatpush1.msra.mxu0 0.0
      %1940 = vmatprep.subr.mxu0 0.0
      %1941 = vmatpush1.msra.mxu0 0.0
      %1942 = vmatprep.subr.mxu0 0.0
      %1943 = vmatpush1.msra.mxu0 0.0
      %1944 = vmatprep.subr.mxu0 0.0
      %1945 = vmatpush1.msra.mxu0 0.0
      %1946 = vmatprep.subr.mxu0 0.0
      %1947 = vmatpush1.msra.mxu0 0.0
      %1948 = vmatprep.subr.mxu0 0.0
      %1949 = vmatpush1.msra.mxu0 0.0
      %1950 = vmatprep.subr.mxu0 0.0
      %1951 = vmatpush1.msra.mxu0 0.0
      %1952 = vmatprep.subr.mxu0 0.0
      %1953 = vmatpush1.msra.mxu0 0.0
      %1954 = vmatprep.subr.mxu0 0.0
      %1955 = vmatpush1.msra.mxu0 0.0
      %1956 = vmatprep.subr.mxu0 0.0
      %1957 = vmatpush1.msra.mxu0 0.0
      %1958 = vmatprep.subr.mxu0 0.0
      %1959 = vmatpush1.msra.mxu0 0.0
      %1960 = vmatprep.subr.mxu0 0.0
      %1961 = vmatpush1.msra.mxu0 0.0
      %1962 = vmatprep.subr.mxu0 0.0
      %1963 = vmatpush1.msra.mxu0 0.0
      %1964 = vmatprep.subr.mxu0 0.0
      %1965 = vmatpush1.msra.mxu0 0.0
      %1966 = vmatprep.subr.mxu0 0.0
      %1967 = vmatpush1.msra.mxu0 0.0
      %1968 = vmatprep.subr.mxu0 0.0
      %1969 = vmatpush1.msra.mxu0 0.0
      %1970 = vmatprep.subr.mxu0 0.0
      %1971 = vmatpush1.msra.mxu0 0.0
      %1972 = vmatprep.subr.mxu0 0.0
      %1973 = vmatpush1.msra.mxu0 0.0
      %1974 = vmatprep.subr.mxu0 0.0
      %1975 = vmatpush1.msra.mxu0 0.0
      %1976 = vmatprep.subr.mxu0 0.0
      %1977 = vmatpush1.msra.mxu0 0.0
      %1978 = vmatprep.subr.mxu0 0.0
      %1979 = vmatpush1.msra.mxu0 0.0
      %1980 = vmatprep.subr.mxu0 0.0
      %1981 = vmatpush1.msra.mxu0 0.0
      %1982 = vmatprep.subr.mxu0 0.0
      %1983 = vmatpush1.msra.mxu0 0.0
      %1984 = vmatprep.subr.mxu0 0.0
      %1985 = vmatpush1.msra.mxu0 0.0
      %1986 = vmatprep.subr.mxu0 0.0
      %1987 = vmatpush1.msra.mxu0 0.0
      %1988 = vmatprep.subr.mxu0 0.0
      %1989 = vmatpush1.msra.mxu0 0.0
      %1990 = vmatprep.subr.mxu0 0.0
      %1991 = vmatpush1.msra.mxu0 0.0
      %1992 = vmatprep.subr.mxu0 0.0
      %1993 = vmatpush1.msra.mxu0 0.0
      %1994 = vmatprep.mubr.f32.mxu0 0.0
      %1995 = vmatmul.mubr.f32.gmra.mrb[0].mxu0 %v1928
      %v1996 = vpop.f32.mrb[0].mxu0
      %v1997 = vadd.f32 0.0, %v1996
      %v1998 = vpop.f32.mrb[0].mxu0
      %v1999 = vadd.f32 0.0, %v1998
      %2000 = vdwg.mxu0
      %v2001 = vsel %vm540, %v1925, 0
      %2003 = vmatprep.subr.mxu0 %v1918
      %2004 = vmatpush1.msra.mxu0 %v1917
      %2005 = vmatprep.subr.mxu0 0.0
      %2006 = vmatpush1.msra.mxu0 0.0
      %2007 = vmatprep.subr.mxu0 0.0
      %2008 = vmatpush1.msra.mxu0 0.0
      %2009 = vmatprep.subr.mxu0 0.0
      %2010 = vmatpush1.msra.mxu0 0.0
      %2011 = vmatprep.subr.mxu0 0.0
      %2012 = vmatpush1.msra.mxu0 0.0
      %2013 = vmatprep.subr.mxu0 0.0
      %2014 = vmatpush1.msra.mxu0 0.0
      %2015 = vmatprep.subr.mxu0 0.0
      %2016 = vmatpush1.msra.mxu0 0.0
      %2017 = vmatprep.subr.mxu0 0.0
      %2018 = vmatpush1.msra.mxu0 0.0
      %2019 = vmatprep.subr.mxu0 0.0
      %2020 = vmatpush1.msra.mxu0 0.0
      %2021 = vmatprep.subr.mxu0 0.0
      %2022 = vmatpush1.msra.mxu0 0.0
      %2023 = vmatprep.subr.mxu0 0.0
      %2024 = vmatpush1.msra.mxu0 0.0
      %2025 = vmatprep.subr.mxu0 0.0
      %2026 = vmatpush1.msra.mxu0 0.0
      %2027 = vmatprep.subr.mxu0 0.0
      %2028 = vmatpush1.msra.mxu0 0.0
      %2029 = vmatprep.subr.mxu0 0.0
      %2030 = vmatpush1.msra.mxu0 0.0
      %2031 = vmatprep.subr.mxu0 0.0
      %2032 = vmatpush1.msra.mxu0 0.0
      %2033 = vmatprep.subr.mxu0 0.0
      %2034 = vmatpush1.msra.mxu0 0.0
      %2035 = vmatprep.subr.mxu0 0.0
      %2036 = vmatpush1.msra.mxu0 0.0
      %2037 = vmatprep.subr.mxu0 0.0
      %2038 = vmatpush1.msra.mxu0 0.0
      %2039 = vmatprep.subr.mxu0 0.0
      %2040 = vmatpush1.msra.mxu0 0.0
      %2041 = vmatprep.subr.mxu0 0.0
      %2042 = vmatpush1.msra.mxu0 0.0
      %2043 = vmatprep.subr.mxu0 0.0
      %2044 = vmatpush1.msra.mxu0 0.0
      %2045 = vmatprep.subr.mxu0 0.0
      %2046 = vmatpush1.msra.mxu0 0.0
      %2047 = vmatprep.subr.mxu0 0.0
      %2048 = vmatpush1.msra.mxu0 0.0
      %2049 = vmatprep.subr.mxu0 0.0
      %2050 = vmatpush1.msra.mxu0 0.0
      %2051 = vmatprep.subr.mxu0 0.0
      %2052 = vmatpush1.msra.mxu0 0.0
      %2053 = vmatprep.subr.mxu0 0.0
      %2054 = vmatpush1.msra.mxu0 0.0
      %2055 = vmatprep.subr.mxu0 0.0
      %2056 = vmatpush1.msra.mxu0 0.0
      %2057 = vmatprep.subr.mxu0 0.0
      %2058 = vmatpush1.msra.mxu0 0.0
      %2059 = vmatprep.subr.mxu0 0.0
      %2060 = vmatpush1.msra.mxu0 0.0
      %2061 = vmatprep.subr.mxu0 0.0
      %2062 = vmatpush1.msra.mxu0 0.0
      %2063 = vmatprep.subr.mxu0 0.0
      %2064 = vmatpush1.msra.mxu0 0.0
      %2065 = vmatprep.subr.mxu0 0.0
      %2066 = vmatpush1.msra.mxu0 0.0
      %2067 = vmatprep.mubr.f32.mxu0 0.0
      %2068 = vmatmul.mubr.f32.gmra.mrb[0].mxu0 %v2001
      %v2069 = vpop.f32.mrb[0].mxu0
      %v2070 = vadd.f32 %v1997, %v2069
      %v2071 = vpop.f32.mrb[0].mxu0
      %v2072 = vadd.f32 %v1999, %v2071
      %2073 = vdwg.mxu0
      %vm2074 = vcmp.le.s32.totalorder %v370, 14
      %vm2075 = vcmp.le.s32.totalorder %v377, 14
      %vm2076 = vmand %vm2074, %vm1039
      %vm2077 = vmand %vm2075, %vm1039
      %v2078 = vsel %vm2076, 1, 0
      %v2079 = vsel %vm2077, 1, 0
      %v2080 = vlaneseq
      %v2081 = vshrl.u32 %v2080, 7
      %v2082 = vsub.s32 0, %v2081
      %v2083 = vrot.slane %v2078, %v2082
      %v2084 = vlaneseq
      %v2085 = vshrl.u32 %v2084, 7
      %v2086 = vsub.s32 0, %v2085
      %v2087 = vrot.slane %v2079, %v2086
      %vm2088 = vcmp.eq.s32.totalorder %v2083, 1
      %vm2089 = vcmp.eq.s32.totalorder %v2087, 1
      %v2090 = vsel %vm2088, %v2070, 0.0
      %v2091 = vsel %vm2089, %v2072, 0.0
      %v2092 = vadd.f32 %v1910, %v2090
      %v2093 = vadd.f32 %v1911, %v2091
      %2094 = vrot.lane.b32.xlu0 %v791, 112
      %v2095 = vpop.permute.xlu0 %2094
      %2096 = vrot.lane.b32.xlu0 %v793, 112
      %v2097 = vpop.permute.xlu0 %2096
      %vm2098 = vcmp.lt.s32.totalorder %v379, 112
      %v2099 = vsel %vm2098, %v2095, %v2097
      %v2100 = vsel %vm2098, %v2097, %v2095
      %2101 = vrot.lane.b32.xlu0 %v871, 112
      %v2102 = vpop.permute.xlu0 %2101
      %2103 = vrot.lane.b32.xlu0 %v873, 112
      %v2104 = vpop.permute.xlu0 %2103
      %v2105 = vsel %vm2098, %v2102, %v2104
      %v2106 = vsel %vm2098, %v2104, %v2102
      %v2107 = vrot.slane %v226, 6
      %2108 = vrot.lane.b32.xlu0 %v2107, 120
      %v2109 = vpop.permute.xlu0 %2108
      %v2110 = vsel %vm540, %v2109, 0
      %2112 = vmatprep.subr.mxu0 %v2106
      %2113 = vmatpush1.msra.mxu0 %v2105
      %2114 = vmatprep.subr.mxu0 0.0
      %2115 = vmatpush1.msra.mxu0 0.0
      %2116 = vmatprep.subr.mxu0 0.0
      %2117 = vmatpush1.msra.mxu0 0.0
      %2118 = vmatprep.subr.mxu0 0.0
      %2119 = vmatpush1.msra.mxu0 0.0
      %2120 = vmatprep.subr.mxu0 0.0
      %2121 = vmatpush1.msra.mxu0 0.0
      %2122 = vmatprep.subr.mxu0 0.0
      %2123 = vmatpush1.msra.mxu0 0.0
      %2124 = vmatprep.subr.mxu0 0.0
      %2125 = vmatpush1.msra.mxu0 0.0
      %2126 = vmatprep.subr.mxu0 0.0
      %2127 = vmatpush1.msra.mxu0 0.0
      %2128 = vmatprep.subr.mxu0 0.0
      %2129 = vmatpush1.msra.mxu0 0.0
      %2130 = vmatprep.subr.mxu0 0.0
      %2131 = vmatpush1.msra.mxu0 0.0
      %2132 = vmatprep.subr.mxu0 0.0
      %2133 = vmatpush1.msra.mxu0 0.0
      %2134 = vmatprep.subr.mxu0 0.0
      %2135 = vmatpush1.msra.mxu0 0.0
      %2136 = vmatprep.subr.mxu0 0.0
      %2137 = vmatpush1.msra.mxu0 0.0
      %2138 = vmatprep.subr.mxu0 0.0
      %2139 = vmatpush1.msra.mxu0 0.0
      %2140 = vmatprep.subr.mxu0 0.0
      %2141 = vmatpush1.msra.mxu0 0.0
      %2142 = vmatprep.subr.mxu0 0.0
      %2143 = vmatpush1.msra.mxu0 0.0
      %2144 = vmatprep.subr.mxu0 0.0
      %2145 = vmatpush1.msra.mxu0 0.0
      %2146 = vmatprep.subr.mxu0 0.0
      %2147 = vmatpush1.msra.mxu0 0.0
      %2148 = vmatprep.subr.mxu0 0.0
      %2149 = vmatpush1.msra.mxu0 0.0
      %2150 = vmatprep.subr.mxu0 0.0
      %2151 = vmatpush1.msra.mxu0 0.0
      %2152 = vmatprep.subr.mxu0 0.0
      %2153 = vmatpush1.msra.mxu0 0.0
      %2154 = vmatprep.subr.mxu0 0.0
      %2155 = vmatpush1.msra.mxu0 0.0
      %2156 = vmatprep.subr.mxu0 0.0
      %2157 = vmatpush1.msra.mxu0 0.0
      %2158 = vmatprep.subr.mxu0 0.0
      %2159 = vmatpush1.msra.mxu0 0.0
      %2160 = vmatprep.subr.mxu0 0.0
      %2161 = vmatpush1.msra.mxu0 0.0
      %2162 = vmatprep.subr.mxu0 0.0
      %2163 = vmatpush1.msra.mxu0 0.0
      %2164 = vmatprep.subr.mxu0 0.0
      %2165 = vmatpush1.msra.mxu0 0.0
      %2166 = vmatprep.subr.mxu0 0.0
      %2167 = vmatpush1.msra.mxu0 0.0
      %2168 = vmatprep.subr.mxu0 0.0
      %2169 = vmatpush1.msra.mxu0 0.0
      %2170 = vmatprep.subr.mxu0 0.0
      %2171 = vmatpush1.msra.mxu0 0.0
      %2172 = vmatprep.subr.mxu0 0.0
      %2173 = vmatpush1.msra.mxu0 0.0
      %2174 = vmatprep.subr.mxu0 0.0
      %2175 = vmatpush1.msra.mxu0 0.0
      %2176 = vmatprep.mubr.f32.mxu0 0.0
      %2177 = vmatmul.mubr.f32.gmra.mrb[0].mxu0 %v2110
      %v2178 = vpop.f32.mrb[0].mxu0
      %v2179 = vadd.f32 0.0, %v2178
      %v2180 = vpop.f32.mrb[0].mxu0
      %v2181 = vadd.f32 0.0, %v2180
      %2182 = vdwg.mxu0
      %v2183 = vsel %vm540, %v2107, 0
      %2185 = vmatprep.subr.mxu0 %v2100
      %2186 = vmatpush1.msra.mxu0 %v2099
      %2187 = vmatprep.subr.mxu0 0.0
      %2188 = vmatpush1.msra.mxu0 0.0
      %2189 = vmatprep.subr.mxu0 0.0
      %2190 = vmatpush1.msra.mxu0 0.0
      %2191 = vmatprep.subr.mxu0 0.0
      %2192 = vmatpush1.msra.mxu0 0.0
      %2193 = vmatprep.subr.mxu0 0.0
      %2194 = vmatpush1.msra.mxu0 0.0
      %2195 = vmatprep.subr.mxu0 0.0
      %2196 = vmatpush1.msra.mxu0 0.0
      %2197 = vmatprep.subr.mxu0 0.0
      %2198 = vmatpush1.msra.mxu0 0.0
      %2199 = vmatprep.subr.mxu0 0.0
      %2200 = vmatpush1.msra.mxu0 0.0
      %2201 = vmatprep.subr.mxu0 0.0
      %2202 = vmatpush1.msra.mxu0 0.0
      %2203 = vmatprep.subr.mxu0 0.0
      %2204 = vmatpush1.msra.mxu0 0.0
      %2205 = vmatprep.subr.mxu0 0.0
      %2206 = vmatpush1.msra.mxu0 0.0
      %2207 = vmatprep.subr.mxu0 0.0
      %2208 = vmatpush1.msra.mxu0 0.0
      %2209 = vmatprep.subr.mxu0 0.0
      %2210 = vmatpush1.msra.mxu0 0.0
      %2211 = vmatprep.subr.mxu0 0.0
      %2212 = vmatpush1.msra.mxu0 0.0
      %2213 = vmatprep.subr.mxu0 0.0
      %2214 = vmatpush1.msra.mxu0 0.0
      %2215 = vmatprep.subr.mxu0 0.0
      %2216 = vmatpush1.msra.mxu0 0.0
      %2217 = vmatprep.subr.mxu0 0.0
      %2218 = vmatpush1.msra.mxu0 0.0
      %2219 = vmatprep.subr.mxu0 0.0
      %2220 = vmatpush1.msra.mxu0 0.0
      %2221 = vmatprep.subr.mxu0 0.0
      %2222 = vmatpush1.msra.mxu0 0.0
      %2223 = vmatprep.subr.mxu0 0.0
      %2224 = vmatpush1.msra.mxu0 0.0
      %2225 = vmatprep.subr.mxu0 0.0
      %2226 = vmatpush1.msra.mxu0 0.0
      %2227 = vmatprep.subr.mxu0 0.0
      %2228 = vmatpush1.msra.mxu0 0.0
      %2229 = vmatprep.subr.mxu0 0.0
      %2230 = vmatpush1.msra.mxu0 0.0
      %2231 = vmatprep.subr.mxu0 0.0
      %2232 = vmatpush1.msra.mxu0 0.0
      %2233 = vmatprep.subr.mxu0 0.0
      %2234 = vmatpush1.msra.mxu0 0.0
      %2235 = vmatprep.subr.mxu0 0.0
      %2236 = vmatpush1.msra.mxu0 0.0
      %2237 = vmatprep.subr.mxu0 0.0
      %2238 = vmatpush1.msra.mxu0 0.0
      %2239 = vmatprep.subr.mxu0 0.0
      %2240 = vmatpush1.msra.mxu0 0.0
      %2241 = vmatprep.subr.mxu0 0.0
      %2242 = vmatpush1.msra.mxu0 0.0
      %2243 = vmatprep.subr.mxu0 0.0
      %2244 = vmatpush1.msra.mxu0 0.0
      %2245 = vmatprep.subr.mxu0 0.0
      %2246 = vmatpush1.msra.mxu0 0.0
      %2247 = vmatprep.subr.mxu0 0.0
      %2248 = vmatpush1.msra.mxu0 0.0
      %2249 = vmatprep.mubr.f32.mxu0 0.0
      %2250 = vmatmul.mubr.f32.gmra.mrb[0].mxu0 %v2183
      %v2251 = vpop.f32.mrb[0].mxu0
      %v2252 = vadd.f32 %v2179, %v2251
      %v2253 = vpop.f32.mrb[0].mxu0
      %v2254 = vadd.f32 %v2181, %v2253
      %2255 = vdwg.mxu0
      %v2256 = vsel %vm2074, 1, 0
      %v2257 = vsel %vm2075, 1, 0
      %v2258 = vlaneseq
      %v2259 = vshrl.u32 %v2258, 7
      %v2260 = vsub.s32 0, %v2259
      %v2261 = vrot.slane %v2256, %v2260
      %v2262 = vlaneseq
      %v2263 = vshrl.u32 %v2262, 7
      %v2264 = vsub.s32 0, %v2263
      %v2265 = vrot.slane %v2257, %v2264
      %vm2266 = vcmp.eq.s32.totalorder %v2261, 1
      %vm2267 = vcmp.eq.s32.totalorder %v2265, 1
      %v2268 = vsel %vm2266, %v2252, 0.0
      %v2269 = vsel %vm2267, %v2254, 0.0
      %v2270 = vadd.f32 %v2092, %v2268
      %v2271 = vadd.f32 %v2093, %v2269
      %2272 = vrot.lane.b32.xlu0 %v791, 111
      %v2273 = vpop.permute.xlu0 %2272
      %2274 = vrot.lane.b32.xlu0 %v793, 111
      %v2275 = vpop.permute.xlu0 %2274
      %vm2276 = vcmp.lt.s32.totalorder %v379, 111
      %v2277 = vsel %vm2276, %v2273, %v2275
      %v2278 = vsel %vm2276, %v2275, %v2273
      %2279 = vrot.lane.b32.xlu0 %v871, 111
      %v2280 = vpop.permute.xlu0 %2279
      %2281 = vrot.lane.b32.xlu0 %v873, 111
      %v2282 = vpop.permute.xlu0 %2281
      %v2283 = vsel %vm2276, %v2280, %v2282
      %v2284 = vsel %vm2276, %v2282, %v2280
      %2286 = vrot.lane.b32.xlu0 %v227, 120
      %v2287 = vpop.permute.xlu0 %2286
      %v2288 = vsel %vm540, %v2287, 0
      %2290 = vmatprep.subr.mxu0 %v2284
      %2291 = vmatpush1.msra.mxu0 %v2283
      %2292 = vmatprep.subr.mxu0 0.0
      %2293 = vmatpush1.msra.mxu0 0.0
      %2294 = vmatprep.subr.mxu0 0.0
      %2295 = vmatpush1.msra.mxu0 0.0
      %2296 = vmatprep.subr.mxu0 0.0
      %2297 = vmatpush1.msra.mxu0 0.0
      %2298 = vmatprep.subr.mxu0 0.0
      %2299 = vmatpush1.msra.mxu0 0.0
      %2300 = vmatprep.subr.mxu0 0.0
      %2301 = vmatpush1.msra.mxu0 0.0
      %2302 = vmatprep.subr.mxu0 0.0
      %2303 = vmatpush1.msra.mxu0 0.0
      %2304 = vmatprep.subr.mxu0 0.0
      %2305 = vmatpush1.msra.mxu0 0.0
      %2306 = vmatprep.subr.mxu0 0.0
      %2307 = vmatpush1.msra.mxu0 0.0
      %2308 = vmatprep.subr.mxu0 0.0
      %2309 = vmatpush1.msra.mxu0 0.0
      %2310 = vmatprep.subr.mxu0 0.0
      %2311 = vmatpush1.msra.mxu0 0.0
      %2312 = vmatprep.subr.mxu0 0.0
      %2313 = vmatpush1.msra.mxu0 0.0
      %2314 = vmatprep.subr.mxu0 0.0
      %2315 = vmatpush1.msra.mxu0 0.0
      %2316 = vmatprep.subr.mxu0 0.0
      %2317 = vmatpush1.msra.mxu0 0.0
      %2318 = vmatprep.subr.mxu0 0.0
      %2319 = vmatpush1.msra.mxu0 0.0
      %2320 = vmatprep.subr.mxu0 0.0
      %2321 = vmatpush1.msra.mxu0 0.0
      %2322 = vmatprep.subr.mxu0 0.0
      %2323 = vmatpush1.msra.mxu0 0.0
      %2324 = vmatprep.subr.mxu0 0.0
      %2325 = vmatpush1.msra.mxu0 0.0
      %2326 = vmatprep.subr.mxu0 0.0
      %2327 = vmatpush1.msra.mxu0 0.0
      %2328 = vmatprep.subr.mxu0 0.0
      %2329 = vmatpush1.msra.mxu0 0.0
      %2330 = vmatprep.subr.mxu0 0.0
      %2331 = vmatpush1.msra.mxu0 0.0
      %2332 = vmatprep.subr.mxu0 0.0
      %2333 = vmatpush1.msra.mxu0 0.0
      %2334 = vmatprep.subr.mxu0 0.0
      %2335 = vmatpush1.msra.mxu0 0.0
      %2336 = vmatprep.subr.mxu0 0.0
      %2337 = vmatpush1.msra.mxu0 0.0
      %2338 = vmatprep.subr.mxu0 0.0
      %2339 = vmatpush1.msra.mxu0 0.0
      %2340 = vmatprep.subr.mxu0 0.0
      %2341 = vmatpush1.msra.mxu0 0.0
      %2342 = vmatprep.subr.mxu0 0.0
      %2343 = vmatpush1.msra.mxu0 0.0
      %2344 = vmatprep.subr.mxu0 0.0
      %2345 = vmatpush1.msra.mxu0 0.0
      %2346 = vmatprep.subr.mxu0 0.0
      %2347 = vmatpush1.msra.mxu0 0.0
      %2348 = vmatprep.subr.mxu0 0.0
      %2349 = vmatpush1.msra.mxu0 0.0
      %2350 = vmatprep.subr.mxu0 0.0
      %2351 = vmatpush1.msra.mxu0 0.0
      %2352 = vmatprep.subr.mxu0 0.0
      %2353 = vmatpush1.msra.mxu0 0.0
      %2354 = vmatprep.mubr.f32.mxu0 0.0
      %2355 = vmatmul.mubr.f32.gmra.mrb[0].mxu0 %v2288
      %v2356 = vpop.f32.mrb[0].mxu0
      %v2357 = vadd.f32 0.0, %v2356
      %v2358 = vpop.f32.mrb[0].mxu0
      %v2359 = vadd.f32 0.0, %v2358
      %2360 = vdwg.mxu0
      %v2361 = vsel %vm540, %v227, 0
      %2363 = vmatprep.subr.mxu0 %v2278
      %2364 = vmatpush1.msra.mxu0 %v2277
      %2365 = vmatprep.subr.mxu0 0.0
      %2366 = vmatpush1.msra.mxu0 0.0
      %2367 = vmatprep.subr.mxu0 0.0
      %2368 = vmatpush1.msra.mxu0 0.0
      %2369 = vmatprep.subr.mxu0 0.0
      %2370 = vmatpush1.msra.mxu0 0.0
      %2371 = vmatprep.subr.mxu0 0.0
      %2372 = vmatpush1.msra.mxu0 0.0
      %2373 = vmatprep.subr.mxu0 0.0
      %2374 = vmatpush1.msra.mxu0 0.0
      %2375 = vmatprep.subr.mxu0 0.0
      %2376 = vmatpush1.msra.mxu0 0.0
      %2377 = vmatprep.subr.mxu0 0.0
      %2378 = vmatpush1.msra.mxu0 0.0
      %2379 = vmatprep.subr.mxu0 0.0
      %2380 = vmatpush1.msra.mxu0 0.0
      %2381 = vmatprep.subr.mxu0 0.0
      %2382 = vmatpush1.msra.mxu0 0.0
      %2383 = vmatprep.subr.mxu0 0.0
      %2384 = vmatpush1.msra.mxu0 0.0
      %2385 = vmatprep.subr.mxu0 0.0
      %2386 = vmatpush1.msra.mxu0 0.0
      %2387 = vmatprep.subr.mxu0 0.0
      %2388 = vmatpush1.msra.mxu0 0.0
      %2389 = vmatprep.subr.mxu0 0.0
      %2390 = vmatpush1.msra.mxu0 0.0
      %2391 = vmatprep.subr.mxu0 0.0
      %2392 = vmatpush1.msra.mxu0 0.0
      %2393 = vmatprep.subr.mxu0 0.0
      %2394 = vmatpush1.msra.mxu0 0.0
      %2395 = vmatprep.subr.mxu0 0.0
      %2396 = vmatpush1.msra.mxu0 0.0
      %2397 = vmatprep.subr.mxu0 0.0
      %2398 = vmatpush1.msra.mxu0 0.0
      %2399 = vmatprep.subr.mxu0 0.0
      %2400 = vmatpush1.msra.mxu0 0.0
      %2401 = vmatprep.subr.mxu0 0.0
      %2402 = vmatpush1.msra.mxu0 0.0
      %2403 = vmatprep.subr.mxu0 0.0
      %2404 = vmatpush1.msra.mxu0 0.0
      %2405 = vmatprep.subr.mxu0 0.0
      %2406 = vmatpush1.msra.mxu0 0.0
      %2407 = vmatprep.subr.mxu0 0.0
      %2408 = vmatpush1.msra.mxu0 0.0
      %2409 = vmatprep.subr.mxu0 0.0
      %2410 = vmatpush1.msra.mxu0 0.0
      %2411 = vmatprep.subr.mxu0 0.0
      %2412 = vmatpush1.msra.mxu0 0.0
      %2413 = vmatprep.subr.mxu0 0.0
      %2414 = vmatpush1.msra.mxu0 0.0
      %2415 = vmatprep.subr.mxu0 0.0
      %2416 = vmatpush1.msra.mxu0 0.0
      %2417 = vmatprep.subr.mxu0 0.0
      %2418 = vmatpush1.msra.mxu0 0.0
      %2419 = vmatprep.subr.mxu0 0.0
      %2420 = vmatpush1.msra.mxu0 0.0
      %2421 = vmatprep.subr.mxu0 0.0
      %2422 = vmatpush1.msra.mxu0 0.0
      %2423 = vmatprep.subr.mxu0 0.0
      %2424 = vmatpush1.msra.mxu0 0.0
      %2425 = vmatprep.subr.mxu0 0.0
      %2426 = vmatpush1.msra.mxu0 0.0
      %2427 = vmatprep.mubr.f32.mxu0 0.0
      %2428 = vmatmul.mubr.f32.gmra.mrb[0].mxu0 %v2361
      %v2429 = vpop.f32.mrb[0].mxu0
      %v2430 = vadd.f32 %v2357, %v2429
      %v2431 = vpop.f32.mrb[0].mxu0
      %v2432 = vadd.f32 %v2359, %v2431
      %2433 = vdwg.mxu0
      %vm2434 = vmand %vm2074, %vm1398
      %vm2435 = vmand %vm2075, %vm1398
      %v2436 = vsel %vm2434, 1, 0
      %v2437 = vsel %vm2435, 1, 0
      %v2438 = vlaneseq
      %v2439 = vshrl.u32 %v2438, 7
      %v2440 = vsub.s32 0, %v2439
      %v2441 = vrot.slane %v2436, %v2440
      %v2442 = vlaneseq
      %v2443 = vshrl.u32 %v2442, 7
      %v2444 = vsub.s32 0, %v2443
      %v2445 = vrot.slane %v2437, %v2444
      %vm2446 = vcmp.eq.s32.totalorder %v2441, 1
      %vm2447 = vcmp.eq.s32.totalorder %v2445, 1
      %v2448 = vsel %vm2446, %v2430, 0.0
      %v2449 = vsel %vm2447, %v2432, 0.0
      %v2450 = vadd.f32 %v2270, %v2448
      %v2451 = vadd.f32 %v2271, %v2449
      %v2452 = vmul.f32 %v452, 2.0
      %v2453 = vmul.f32 %v2452, 0.06666667
      %v2454 = vsub.f32 %v2453, 1.0
      %v2455 = vmul.f32 %v450, 2.0
      %v2456 = vmul.f32 %v451, 2.0
      %v2457 = vmul.f32 %v2455, 0.06666667
      %v2458 = vmul.f32 %v2456, 0.06666667
      %v2459 = vsub.f32 %v2457, 1.0
      %v2460 = vsub.f32 %v2458, 1.0
      %v2461 = vmul.f32 %v2450, 0.0625
      %v2462 = vmul.f32 %v2451, 0.0625
      %v2463 = vadd.f32 %v2454, %v2461
      %v2464 = vadd.f32 %v2454, %v2462
      %v2467 = vrot.slane %v2461, 1
      %v2468 = vrot.slane %v2462, 1
      %v2471 = vadd.f32 %v2459, %v2467
      %v2472 = vadd.f32 %v2460, %v2468
      %v2473 = vadd.f32 %v2463, 1.0
      %v2474 = vadd.f32 %v2464, 1.0
      %v2475 = vmul.f32 %v2473, 8.0
      %v2476 = vmul.f32 %v2474, 8.0
      %v2477 = vsub.f32 %v2475, 1.0
      %v2478 = vsub.f32 %v2476, 1.0
      %v2479 = vmul.f32 %v2477, 0.5
      %v2480 = vmul.f32 %v2478, 0.5
      %v2481 = vadd.f32 %v2471, 1.0
      %v2482 = vadd.f32 %v2472, 1.0
      %v2483 = vmul.f32 %v2481, 8.0
      %v2484 = vmul.f32 %v2482, 8.0
      %v2485 = vsub.f32 %v2483, 1.0
      %v2486 = vsub.f32 %v2484, 1.0
      %v2487 = vmul.f32 %v2485, 0.5
      %v2488 = vmul.f32 %v2486, 0.5
      %v2489 = vfloor.f32 %v2479
      %v2490 = vfloor.f32 %v2480
      %v2491 = vfloor.f32 %v2487
      %v2492 = vfloor.f32 %v2488
      %v2493 = vcvt.f32.s32.to.zero.pseudo %v2489
      %v2494 = vcvt.f32.s32.to.zero.pseudo %v2490
      %v2495 = vcvt.f32.s32.to.zero.pseudo %v2491
      %v2496 = vcvt.f32.s32.to.zero.pseudo %v2492
      %v2497 = vsub.f32 %v2479, %v2489
      %v2498 = vsub.f32 %v2480, %v2490
      %v2499 = vsub.f32 %v2487, %v2491
      %v2500 = vsub.f32 %v2488, %v2492
      %v2501 = vadd.s32 %v2493, 1
      %v2502 = vadd.s32 %v2494, 1
      %v2503 = vsub.f32 1.0, %v2497
      %v2504 = vsub.f32 1.0, %v2498
      %v2505 = vlaneseq
      %v2506 = vshrl.u32 %v2505, 7
      %v2507 = vsub.s32 0, %v2506
      %v2508 = vrot.slane %v2493, %v2507
      %v2509 = vlaneseq
      %v2510 = vshrl.u32 %v2509, 7
      %v2511 = vsub.s32 0, %v2510
      %v2512 = vrot.slane %v2494, %v2511
      %vm2513 = vcmp.eq.s32.totalorder %v229, %v2508
      %vm2514 = vcmp.eq.s32.totalorder %v229, %v2512
      %v2515 = vlaneseq
      %v2516 = vshrl.u32 %v2515, 7
      %v2517 = vsub.s32 0, %v2516
      %v2518 = vrot.slane %v2503, %v2517
      %v2519 = vlaneseq
      %v2520 = vshrl.u32 %v2519, 7
      %v2521 = vsub.s32 0, %v2520
      %v2522 = vrot.slane %v2504, %v2521
      %v2523 = vsel %vm2513, %v2518, 0.0
      %v2524 = vsel %vm2514, %v2522, 0.0
      %v2525 = vlaneseq
      %v2526 = vshrl.u32 %v2525, 7
      %v2527 = vsub.s32 0, %v2526
      %v2528 = vrot.slane %v2501, %v2527
      %v2529 = vlaneseq
      %v2530 = vshrl.u32 %v2529, 7
      %v2531 = vsub.s32 0, %v2530
      %v2532 = vrot.slane %v2502, %v2531
      %vm2533 = vcmp.eq.s32.totalorder %v229, %v2528
      %vm2534 = vcmp.eq.s32.totalorder %v229, %v2532
      %v2535 = vlaneseq
      %v2536 = vshrl.u32 %v2535, 7
      %v2537 = vsub.s32 0, %v2536
      %v2538 = vrot.slane %v2497, %v2537
      %v2539 = vlaneseq
      %v2540 = vshrl.u32 %v2539, 7
      %v2541 = vsub.s32 0, %v2540
      %v2542 = vrot.slane %v2498, %v2541
      %v2543 = vsel %vm2533, %v2538, 0.0
      %v2544 = vsel %vm2534, %v2542, 0.0
      %v2545 = vadd.f32 %v2523, %v2543
      %v2546 = vadd.f32 %v2524, %v2544
      %v2547 = vadd.s32 %v2495, 1
      %v2548 = vadd.s32 %v2496, 1
      %v2549 = vsub.f32 1.0, %v2499
      %v2550 = vsub.f32 1.0, %v2500
      %v2551 = vlaneseq
      %v2552 = vshrl.u32 %v2551, 7
      %v2553 = vsub.s32 0, %v2552
      %v2554 = vrot.slane %v2495, %v2553
      %v2555 = vlaneseq
      %v2556 = vshrl.u32 %v2555, 7
      %v2557 = vsub.s32 0, %v2556
      %v2558 = vrot.slane %v2496, %v2557
      %vm2559 = vcmp.eq.s32.totalorder %v229, %v2554
      %vm2560 = vcmp.eq.s32.totalorder %v229, %v2558
      %v2561 = vlaneseq
      %v2562 = vshrl.u32 %v2561, 7
      %v2563 = vsub.s32 0, %v2562
      %v2564 = vrot.slane %v2549, %v2563
      %v2565 = vlaneseq
      %v2566 = vshrl.u32 %v2565, 7
      %v2567 = vsub.s32 0, %v2566
      %v2568 = vrot.slane %v2550, %v2567
      %v2569 = vsel %vm2559, %v2564, 0.0
      %v2570 = vsel %vm2560, %v2568, 0.0
      %v2571 = vlaneseq
      %v2572 = vshrl.u32 %v2571, 7
      %v2573 = vsub.s32 0, %v2572
      %v2574 = vrot.slane %v2547, %v2573
      %v2575 = vlaneseq
      %v2576 = vshrl.u32 %v2575, 7
      %v2577 = vsub.s32 0, %v2576
      %v2578 = vrot.slane %v2548, %v2577
      %vm2579 = vcmp.eq.s32.totalorder %v229, %v2574
      %vm2580 = vcmp.eq.s32.totalorder %v229, %v2578
      %v2581 = vlaneseq
      %v2582 = vshrl.u32 %v2581, 7
      %v2583 = vsub.s32 0, %v2582
      %v2584 = vrot.slane %v2499, %v2583
      %v2585 = vlaneseq
      %v2586 = vshrl.u32 %v2585, 7
      %v2587 = vsub.s32 0, %v2586
      %v2588 = vrot.slane %v2500, %v2587
      %v2589 = vsel %vm2579, %v2584, 0.0
      %v2590 = vsel %vm2580, %v2588, 0.0
      %v2591 = vadd.f32 %v2569, %v2589
      %v2592 = vadd.f32 %v2570, %v2590
      %2593 = vmatprep.subr.mxu0 %v2546
      %2594 = vmatpush1.msra.mxu0 %v2545
      %2595 = vmatprep.subr.mxu0 0.0
      %2596 = vmatpush1.msra.mxu0 0.0
      %2597 = vmatprep.subr.mxu0 0.0
      %2598 = vmatpush1.msra.mxu0 0.0
      %2599 = vmatprep.subr.mxu0 0.0
      %2600 = vmatpush1.msra.mxu0 0.0
      %2601 = vmatprep.subr.mxu0 0.0
      %2602 = vmatpush1.msra.mxu0 0.0
      %2603 = vmatprep.subr.mxu0 0.0
      %2604 = vmatpush1.msra.mxu0 0.0
      %2605 = vmatprep.subr.mxu0 0.0
      %2606 = vmatpush1.msra.mxu0 0.0
      %2607 = vmatprep.subr.mxu0 0.0
      %2608 = vmatpush1.msra.mxu0 0.0
      %2609 = vmatprep.subr.mxu0 0.0
      %2610 = vmatpush1.msra.mxu0 0.0
      %2611 = vmatprep.subr.mxu0 0.0
      %2612 = vmatpush1.msra.mxu0 0.0
      %2613 = vmatprep.subr.mxu0 0.0
      %2614 = vmatpush1.msra.mxu0 0.0
      %2615 = vmatprep.subr.mxu0 0.0
      %2616 = vmatpush1.msra.mxu0 0.0
      %2617 = vmatprep.subr.mxu0 0.0
      %2618 = vmatpush1.msra.mxu0 0.0
      %2619 = vmatprep.subr.mxu0 0.0
      %2620 = vmatpush1.msra.mxu0 0.0
      %2621 = vmatprep.subr.mxu0 0.0
      %2622 = vmatpush1.msra.mxu0 0.0
      %2623 = vmatprep.subr.mxu0 0.0
      %2624 = vmatpush1.msra.mxu0 0.0
      %2625 = vmatprep.subr.mxu0 0.0
      %2626 = vmatpush1.msra.mxu0 0.0
      %2627 = vmatprep.subr.mxu0 0.0
      %2628 = vmatpush1.msra.mxu0 0.0
      %2629 = vmatprep.subr.mxu0 0.0
      %2630 = vmatpush1.msra.mxu0 0.0
      %2631 = vmatprep.subr.mxu0 0.0
      %2632 = vmatpush1.msra.mxu0 0.0
      %2633 = vmatprep.subr.mxu0 0.0
      %2634 = vmatpush1.msra.mxu0 0.0
      %2635 = vmatprep.subr.mxu0 0.0
      %2636 = vmatpush1.msra.mxu0 0.0
      %2637 = vmatprep.subr.mxu0 0.0
      %2638 = vmatpush1.msra.mxu0 0.0
      %2639 = vmatprep.subr.mxu0 0.0
      %2640 = vmatpush1.msra.mxu0 0.0
      %2641 = vmatprep.subr.mxu0 0.0
      %2642 = vmatpush1.msra.mxu0 0.0
      %2643 = vmatprep.subr.mxu0 0.0
      %2644 = vmatpush1.msra.mxu0 0.0
      %2645 = vmatprep.subr.mxu0 0.0
      %2646 = vmatpush1.msra.mxu0 0.0
      %2647 = vmatprep.subr.mxu0 0.0
      %2648 = vmatpush1.msra.mxu0 0.0
      %2649 = vmatprep.subr.mxu0 0.0
      %2650 = vmatpush1.msra.mxu0 0.0
      %2651 = vmatprep.subr.mxu0 0.0
      %2652 = vmatpush1.msra.mxu0 0.0
      %2653 = vmatprep.subr.mxu0 0.0
      %2654 = vmatpush1.msra.mxu0 0.0
      %2655 = vmatprep.subr.mxu0 0.0
      %2656 = vmatpush1.msra.mxu0 0.0
      %2657 = vmatprep.mubr.f32.mxu0 0.0
      %2658 = vmatmul.mubr.f32.gmra.mrb[0].mxu0 %v542
      %v2659 = vpop.f32.mrb[0].mxu0
      %v2660 = vadd.f32 0.0, %v2659
      %v2661 = vpop.f32.mrb[0].mxu0
      %v2662 = vadd.f32 0.0, %v2661
      %2663 = vmatprep.mubr.f32.mxu0 0.0
      %2664 = vmatmul.mubr.f32.gmra.mrb[0].mxu0 %v545
      %v2665 = vpop.f32.mrb[0].mxu0
      %v2666 = vadd.f32 0.0, %v2665
      %v2667 = vpop.f32.mrb[0].mxu0
      %v2668 = vadd.f32 0.0, %v2667
      %2669 = vmatprep.mubr.f32.mxu0 0.0
      %2670 = vmatmul.mubr.f32.gmra.mrb[0].mxu0 %v548
      %v2671 = vpop.f32.mrb[0].mxu0
      %v2672 = vadd.f32 0.0, %v2671
      %v2673 = vpop.f32.mrb[0].mxu0
      %v2674 = vadd.f32 0.0, %v2673
      %2675 = vmatprep.mubr.f32.mxu0 0.0
      %2676 = vmatmul.mubr.f32.gmra.mrb[0].mxu0 %v551
      %v2677 = vpop.f32.mrb[0].mxu0
      %v2678 = vadd.f32 0.0, %v2677
      %v2679 = vpop.f32.mrb[0].mxu0
      %v2680 = vadd.f32 0.0, %v2679
      %2681 = vdwg.mxu0
      %v2682 = vmul.f32 %v2660, %v2591
      %v2683 = vmul.f32 %v2662, %v2592
      %v2684 = vmul.f32 %v2666, %v2591
      %v2685 = vmul.f32 %v2668, %v2592
      %v2686 = vmul.f32 %v2672, %v2591
      %v2687 = vmul.f32 %v2674, %v2592
      %v2688 = vmul.f32 %v2678, %v2591
      %v2689 = vmul.f32 %v2680, %v2592
      %v2690 = vrot.slane %v2682, 4
      %v2691 = vadd.f32 %v2682, %v2690
      %v2692 = vrot.slane %v2691, 2
      %v2693 = vadd.f32 %v2691, %v2692
      %v2694 = vrot.slane %v2693, 1
      %v2695 = vadd.f32 %v2693, %v2694
      %v2696 = vrot.slane %v2683, 4
      %v2697 = vadd.f32 %v2683, %v2696
      %v2698 = vrot.slane %v2697, 2
      %v2699 = vadd.f32 %v2697, %v2698
      %v2700 = vrot.slane %v2699, 1
      %v2701 = vadd.f32 %v2699, %v2700
      %v2702 = vrot.slane %v2684, 4
      %v2703 = vadd.f32 %v2684, %v2702
      %v2704 = vrot.slane %v2703, 2
      %v2705 = vadd.f32 %v2703, %v2704
      %v2706 = vrot.slane %v2705, 1
      %v2707 = vadd.f32 %v2705, %v2706
      %v2708 = vrot.slane %v2685, 4
      %v2709 = vadd.f32 %v2685, %v2708
      %v2710 = vrot.slane %v2709, 2
      %v2711 = vadd.f32 %v2709, %v2710
      %v2712 = vrot.slane %v2711, 1
      %v2713 = vadd.f32 %v2711, %v2712
      %v2714 = vrot.slane %v2686, 4
      %v2715 = vadd.f32 %v2686, %v2714
      %v2716 = vrot.slane %v2715, 2
      %v2717 = vadd.f32 %v2715, %v2716
      %v2718 = vrot.slane %v2717, 1
      %v2719 = vadd.f32 %v2717, %v2718
      %v2720 = vrot.slane %v2687, 4
      %v2721 = vadd.f32 %v2687, %v2720
      %v2722 = vrot.slane %v2721, 2
      %v2723 = vadd.f32 %v2721, %v2722
      %v2724 = vrot.slane %v2723, 1
      %v2725 = vadd.f32 %v2723, %v2724
      %v2726 = vrot.slane %v2688, 4
      %v2727 = vadd.f32 %v2688, %v2726
      %v2728 = vrot.slane %v2727, 2
      %v2729 = vadd.f32 %v2727, %v2728
      %v2730 = vrot.slane %v2729, 1
      %v2731 = vadd.f32 %v2729, %v2730
      %v2732 = vrot.slane %v2689, 4
      %v2733 = vadd.f32 %v2689, %v2732
      %v2734 = vrot.slane %v2733, 2
      %v2735 = vadd.f32 %v2733, %v2734
      %v2736 = vrot.slane %v2735, 1
      %v2737 = vadd.f32 %v2735, %v2736
      %v2746 = vcombine.low %v2695, %v2701
      %v2747 = vcombine.low %v2707, %v2713
      %v2748 = vcombine.low %v2719, %v2725
      %v2749 = vcombine.low %v2731, %v2737
      %v2750 = vrot.slane %v2747, 7
      %v2751 = vsel %vm706, %v2750, %v2746
      %vm2752 = vcmask 1045509
      %v2753 = vsel %vm2752, %v2750, %v2751
      %v2754 = vrot.slane %v2748, 6
      %v2755 = vsel %vm708, %v2754, %v2753
      %vm2756 = vcmask 1046534
      %v2757 = vsel %vm2756, %v2754, %v2755
      %v2758 = vrot.slane %v2749, 5
      %v2759 = vsel %vm710, %v2758, %v2757
      %vm2760 = vcmask 1047559
      %v2761 = vsel %vm2760, %v2758, %v2759
      %2763 = vst [vmem:[%s217] sm:$0xff] %v2761
      %p2764 = scmp.lt.s32.totalorder %s15, 1
      %s2765 = scalar_select %p2764, %s15, 1
      %s2766 = smul.addr %s2765, 2
      %s2767 = smul.addr %s2766, 4
      %s2768 = scalar_lea.vmem %s4, %s2767
      // Predicated region
      $region37: #{aligned_module.1} parent=35 // pred_check
        %p2769 = pneg %p127
      $region38: #{aligned_module.1} parent=35 // pred_check_branch
        %2771 = sbr.rel (%p2769) target = $region40
      $region39: #{aligned_module.1} parent=35 // pred_region
        _
      $region40: #{aligned_module.1} parent=35 // pred_fallthru
        _
    $region36: #{aligned_module.1} parent=5 // pred_fallthru
      _
    %p2772 = scmp.le.s32.totalorder 2, %s10
    // Predicated region
    $region41: #{aligned_module.1} parent=5 // pred_check
      %p2773 = pneg %p2772
    $region42: #{aligned_module.1} parent=5 // pred_check_branch
      %2775 = sbr.rel (%p2773) target = $region44
    $region43: #{aligned_module.1} parent=5 // pred_region
      %s2776 = ssub.s32 %s10, 2
      // Predicated region
      $region45: #{aligned_module.1} parent=43 // pred_check
        %p2777 = pneg %p133
      $region46: #{aligned_module.1} parent=43 // pred_check_branch
        %2779 = sbr.rel (%p2777) target = $region48
      $region47: #{aligned_module.1} parent=43 // pred_region
        %p2780 = scmp.lt.s32.totalorder %s16, 1
        %s2781 = scalar_select %p2780, %s16, 1
        %s2782 = smul.addr %s2781, 2
        %s2783 = smul.addr %s2782, 4
        %s2784 = scalar_lea.vmem %s4, %s2783
      $region48: #{aligned_module.1} parent=43 // pred_fallthru
        _
    $region44: #{aligned_module.1} parent=5 // pred_fallthru
      _
  $region6: #{aligned_module.1} parent=0 // loop_footer
    %s14 = sadd.s32 1, %s10
  $region7: #{aligned_module.1} parent=0 // loop_footer_branch
    %9 = sbr.rel target = $region3
  $region8: #{aligned_module.1} parent=0 // loop_exit
    _

</llo_original>
